<compile_context>
chip_gen: v7x
topology: tpu7x:2x2x1
jax: 0.10.0
libtpu: 0.0.40
codegen_flags: <defaults>
</compile_context>

<pallas_src>
import jax
import jax.numpy as jnp
from jax.experimental import pallas as pl
from jax.experimental.pallas import tpu as pltpu

EPS = 1e-6
NEG_SLOPE = 0.01  # default negative_slope of LeakyReLU / VNLeakyReLU

# Kernel weight argument order (prepared by prepare_kernel_params).
PARAM_ORDER = [
    # node_gblinear (GDBLinear, scalar path pre-composed)
    "n_wv1", "n_wsc", "n_wg", "n_bg", "n_wv2",
    # edge_gbp.gb_linear (GDBLinear)
    "e_wv1", "e_wsc", "e_wg", "e_bg", "e_wv2",
    # edge_gbp.act_vec (VNLeakyReLU.map_to_dir)
    "e_wdir",
    # sca_linear|e2n_linear merged, n2e_linear, edge_vnlinear
    "w_mix", "b_mix", "w_n2e", "b_n2e", "w_evn", "b_evn",
    # out_gblienar (GDBLinear)
    "o_wv1", "o_wsc", "o_wg", "o_bg", "o_wv2",
]


def message_kernel(nsca_ref, nvec_ref, esca_ref, evec_ref, *rest):
    nw = len(PARAM_ORDER)
    # Load each (tiny) weight/bias exactly once per grid step.
    W = {name: ref[...] for name, ref in zip(PARAM_ORDER, rest[:nw])}
    out_sca_ref, out_vec_ref = rest[nw], rest[nw + 1]

    f32, bf16 = jnp.float32, jnp.bfloat16

    def mm(name, x):
        # Weights are (out, in) bf16; x is (in, TE) f32 -> bf16 MXU operands,
        # f32 accumulation.  Result (out, TE): edges stay on the lane dim.
        return jnp.dot(W[name], x.astype(bf16), preferred_element_type=f32)

    def bias(name):
        return W[name]  # (out, 1) f32, broadcasts across lanes

    def gdb_linear(sca, vec3, p):
        """GDBLinear (bottleneck=1).  sca: (Sin, TE); vec3: list of 3 x (Vin, TE)."""
        vi = [mm(p + "wv1", v) for v in vec3]                          # 3 x (H, TE)
        norm = jnp.sqrt(vi[0] * vi[0] + vi[1] * vi[1] + vi[2] * vi[2])  # (H, TE)
        # lin_scalar_2 with lin_scalar_1 pre-composed into its z-half: one matmul.
        out_sca = mm(p + "wsc", jnp.concatenate([norm, sca], axis=0))   # (Sout, TE)
        gate = jax.nn.sigmoid(mm(p + "wg", out_sca) + bias(p + "bg"))   # (Vout, TE)
        out_vec = [gate * mm(p + "wv2", v) for v in vi]                 # 3 x (Vout, TE)
        return out_sca, out_vec

    def vn_leaky_relu(vec3):
        d = [mm("e_wdir", v) for v in vec3]                             # 3 x (C, TE)
        dot = vec3[0] * d[0] + vec3[1] * d[1] + vec3[2] * d[2]          # (C, TE)
        dns = d[0] * d[0] + d[1] * d[1] + d[2] * d[2]                   # (C, TE)
        # Exactly the mask formulation of the PyTorch module (exact division):
        #   out = where(dot >= 0, x, x - (1 - slope) * (dot / (dns + eps)) * d)
        adj = (1.0 - NEG_SLOPE) * dot / (dns + EPS)
        keep = dot >= 0.0
        return [jnp.where(keep, v, v - adj * dk) for v, dk in zip(vec3, d)]

    nsca = nsca_ref[...].astype(f32)                       # (S_n, TE)
    nvec = [nvec_ref[k].astype(f32) for k in range(3)]     # 3 x (V_n, TE)
    esca = esca_ref[...].astype(f32)                       # (S_e, TE)
    evec = [evec_ref[k].astype(f32) for k in range(3)]     # 3 x (V_e, TE)

    # node_gblinear (computed per edge: row-wise linear commutes with the gather)
    ns, nv = gdb_linear(nsca, nvec, "n_")

    # edge_gbp: GDBLinear -> VNLeakyReLU (vector) / LeakyReLU (scalar)
    es, ev = gdb_linear(esca, evec, "e_")
    ev = vn_leaky_relu(ev)
    es = jnp.maximum(es, NEG_SLOPE * es)

    # message mixing;  sca_linear and e2n_linear share LHS `es` -> single merged matmul
    OS = ns.shape[0]
    mix = mm("w_mix", es) + bias("b_mix")                  # (out_sca + out_vec, TE)
    y_sca = ns * mix[:OS]                                  # (out_sca, TE)
    g_e2n = mix[OS:]                                       # (out_vec, TE)
    g_n2e = mm("w_n2e", ns) + bias("b_n2e")                # (out_vec, TE)
    y_vec = [g_e2n * nvk + g_n2e * (mm("w_evn", evk) + bias("b_evn"))
             for nvk, evk in zip(nv, ev)]                  # 3 x (out_vec, TE)

    # out_gblienar
    o_sca, o_vec = gdb_linear(y_sca, y_vec, "o_")

    out_sca_ref[...] = o_sca.astype(out_sca_ref.dtype)
    for k in range(3):
        out_vec_ref[k, :, :] = o_vec[k].astype(out_vec_ref.dtype)


def _round_up(x, m):
    return ((x + m - 1) // m) * m


def _cdiv(a, b):
    return -(-a // b)


def message_module(node_sca, node_vec, edge_sca, edge_vec, edge_index, kparams,
                   out_sca_dim, out_vec_dim, *, tile_e=None):
    """MessageModule.forward (annealing=False).

    Layout: scalars (C, N), vectors (3, C, N) -- node/edge axis on lanes.
    `kparams` must come from prepare_kernel_params (bf16 weights, fused matrices).
    Returns out_sca (out_sca_dim, E) and out_vec (3, out_vec_dim, E).
    """
    E = edge_index.shape[0]
    S_n, V_n = node_sca.shape[0], node_vec.shape[1]
    S_e, V_e = edge_sca.shape[0], edge_vec.shape[1]

    # Lane-dense tiles: multiples of 128; default aims for >=4 grid steps so the
    # "parallel" grid axis keeps both v7x TensorCores busy.  Per-step working set at
    # tile_e=1024 is a few MiB of VMEM (I/O blocks ~1.2 MiB double-buffered + small
    # f32 intermediates), comfortably inside every generation's scoped budget.
    if tile_e is None:
        tile_e = min(1024, _round_up(_cdiv(E, 4), 128))
    tile_e = max(128, _round_up(tile_e, 128))
    E_pad = _round_up(E, tile_e)
    pad = E_pad - E

    # Single-pass gather with an already-padded index (pad rows read node 0: finite
    # values, discarded by the final slice) -> no extra pad pass over gathered arrays.
    idx = jnp.pad(edge_index, (0, pad)) if pad else edge_index
    nsca_e = jnp.take(node_sca, idx, axis=1)               # (S_n, E_pad)
    nvec_e = jnp.take(node_vec, idx, axis=2)               # (3, V_n, E_pad)
    esca_e = jnp.pad(edge_sca, ((0, 0), (0, pad))) if pad else edge_sca
    evec_e = jnp.pad(edge_vec, ((0, 0), (0, 0), (0, pad))) if pad else edge_vec

    def w_spec(arr):
        nd = arr.ndim
        return pl.BlockSpec(arr.shape, lambda i, nd=nd: (0,) * nd)

    in_specs = [
        pl.BlockSpec((S_n, tile_e), lambda i: (0, i)),
        pl.BlockSpec((3, V_n, tile_e), lambda i: (0, 0, i)),
        pl.BlockSpec((S_e, tile_e), lambda i: (0, i)),
        pl.BlockSpec((3, V_e, tile_e), lambda i: (0, 0, i)),
    ] + [w_spec(kparams[k]) for k in PARAM_ORDER]

    out_specs = [
        pl.BlockSpec((out_sca_dim, tile_e), lambda i: (0, i)),
        pl.BlockSpec((3, out_vec_dim, tile_e), lambda i: (0, 0, i)),
    ]

    grid_spec = pltpu.PrefetchScalarGridSpec(
        num_scalar_prefetch=0,
        grid=(E_pad // tile_e,),
        in_specs=in_specs,
        out_specs=out_specs,
    )

    out_sca, out_vec = pl.pallas_call(
        message_kernel,
        out_shape=(jax.ShapeDtypeStruct((out_sca_dim, E_pad), node_sca.dtype),
                   jax.ShapeDtypeStruct((3, out_vec_dim, E_pad), node_sca.dtype)),
        grid_spec=grid_spec,
        compiler_params=pltpu.CompilerParams(
            dimension_semantics=("parallel",),
            vmem_limit_bytes=32 * 1024 * 1024),   # explicit, with large headroom
    )(nsca_e, nvec_e, esca_e, evec_e, *[kparams[k] for k in PARAM_ORDER])

    return out_sca[:, :E], out_vec[:, :, :E]


def prepare_kernel_params(p, mxu_dtype=jnp.bfloat16):
    """Host-side (one-time) weight preparation for the kernel.

    Raw params `p` use the PyTorch Linear layout: weight (out, in), bias (out,).
      * lin_scalar_1 is composed into the z-half of lin_scalar_2 (no nonlinearity
        between them): out_sca = [ws2n | ws2z@ws1] @ concat([norm, sca]).
      * sca_linear and e2n_linear (same LHS) are stacked into one matmul.
      * matmul weights -> bf16 (MXU operands); biases stay f32 as (out, 1) columns.
    """
    def cvt(x):
        return x.astype(mxu_dtype)

    def col(b):
        return b.astype(jnp.float32)[:, None]

    out = {}

    def gdb(prefix):
        h = p[prefix + "wv1"].shape[0]
        ws2n = p[prefix + "ws2"][:, :h]                      # (Sout, H)
        ws2z = p[prefix + "ws2"][:, h:]                      # (Sout, SH)
        wsc = jnp.concatenate([ws2n, ws2z @ p[prefix + "ws1"]], axis=1)  # (Sout, H+Sin)
        out[prefix + "wv1"] = cvt(p[prefix + "wv1"])
        out[prefix + "wsc"] = cvt(wsc)
        out[prefix + "wg"] = cvt(p[prefix + "wg"])
        out[prefix + "bg"] = col(p[prefix + "bg"])
        out[prefix + "wv2"] = cvt(p[prefix + "wv2"])

    gdb("n_"); gdb("e_"); gdb("o_")
    out["e_wdir"] = cvt(p["e_wdir"])
    out["w_mix"] = cvt(jnp.concatenate([p["w_sca"], p["w_e2n"]], axis=0))
    out["b_mix"] = col(jnp.concatenate([p["b_sca"], p["b_e2n"]], axis=0))
    out["w_n2e"] = cvt(p["w_n2e"]); out["b_n2e"] = col(p["b_n2e"])
    out["w_evn"] = cvt(p["w_evn"]); out["b_evn"] = col(p["b_evn"])
    return out


def init_params(key, node_sca, node_vec, edge_sca, edge_vec, out_sca, out_vec):
    """Deterministic synthetic weights with the same shapes/layout as the PyTorch
    module (Linear weight (out, in), bias (out,))."""
    keys = iter(jax.random.split(key, 64))

    def w(shape, scale=0.2):
        return scale * jax.random.normal(next(keys), shape, jnp.float32)

    def gdb(prefix, s_in, v_in, s_out, v_out):
        h = max(v_in, v_out)    # hidden_dim      (bottleneck = 1)
        sh = max(v_in, v_out)   # sca_hidden_dim  (bottleneck = 1)
        return {
            prefix + "wv1": w((h, v_in)),        # lin_vector   (VNLinear, no bias)
            prefix + "ws1": w((sh, s_in)),       # lin_scalar_1 (no bias)
            prefix + "ws2": w((s_out, h + sh)),  # lin_scalar_2 (no bias)
            prefix + "wg": w((v_out, s_out)),    # scalar_to_vector_gates.weight
            prefix + "bg": w((v_out,)),          # scalar_to_vector_gates.bias
            prefix + "wv2": w((v_out, h)),       # lin_vector2  (VNLinear, no bias)
        }

    p = {}
    p.update(gdb("n_", node_sca, node_vec, out_sca, out_vec))    # node_gblinear
    p.update(gdb("e_", edge_sca, edge_vec, edge_sca, edge_vec))  # edge_gbp.gb_linear
    p["e_wdir"] = w((edge_vec, edge_vec))                        # act_vec.map_to_dir
    p["w_sca"] = w((out_sca, edge_sca)); p["b_sca"] = w((out_sca,))
    p["w_e2n"] = w((out_vec, edge_sca)); p["b_e2n"] = w((out_vec,))
    p["w_n2e"] = w((out_vec, out_sca)); p["b_n2e"] = w((out_vec,))
    p["w_evn"] = w((out_vec, edge_vec)); p["b_evn"] = w((out_vec,))
    p.update(gdb("o_", out_sca, out_vec, out_sca, out_vec))      # out_gblienar
    return p


def ref_forward(node_sca_cn, node_vec_3cn, edge_sca_ce, edge_vec_3ce, edge_index, p):
    """Pure-JAX f32 reference mirroring the PyTorch module exactly (internal layout
    (N, C) / (N, C, 3), exact mask-form VNLeakyReLU, exact division, f32 matmuls)."""
    node_sca = node_sca_cn.T                                 # (N, C)
    node_vec = jnp.transpose(node_vec_3cn, (2, 1, 0))        # (N, C, 3)
    edge_sca = edge_sca_ce.T
    edge_vec = jnp.transpose(edge_vec_3ce, (2, 1, 0))

    def linear(x, w, b=None):
        y = x @ w.T
        return y if b is None else y + b

    def vnlin(x, w, b=None):                                 # x: (N, C, 3)
        y = jnp.einsum('nck,oc->nok', x, w)
        if b is not None:
            y = y + b[None, :, None]
        return y

    def gdb(sca, vec, prefix):
        vi = vnlin(vec, p[prefix + 'wv1'])
        norm = jnp.linalg.norm(vi, axis=-1)
        z = linear(sca, p[prefix + 'ws1'])
        out_sca = linear(jnp.concatenate([norm, z], axis=-1), p[prefix + 'ws2'])
        gate = jax.nn.sigmoid(linear(out_sca, p[prefix + 'wg'], p[prefix + 'bg']))[..., None]
        return out_sca, gate * vnlin(vi, p[prefix + 'wv2'])

    def vn_leaky(x):
        d = vnlin(x, p['e_wdir'])
        dot = jnp.sum(x * d, axis=-1, keepdims=True)
        mask = (dot >= 0).astype(x.dtype)
        dns = jnp.sum(d * d, axis=-1, keepdims=True)
        return (NEG_SLOPE * x
                + (1 - NEG_SLOPE) * (mask * x + (1 - mask) * (x - dot / (dns + EPS) * d)))

    ns, nv = gdb(node_sca, node_vec, 'n_')
    ns, nv = ns[edge_index], nv[edge_index]
    es, ev = gdb(edge_sca, edge_vec, 'e_')
    ev = vn_leaky(ev)
    es = jnp.where(es >= 0, es, NEG_SLOPE * es)

    y_sca = ns * linear(es, p['w_sca'], p['b_sca'])
    y_vec = (linear(es, p['w_e2n'], p['b_e2n'])[..., None] * nv
             + linear(ns, p['w_n2e'], p['b_n2e'])[..., None] * vnlin(ev, p['w_evn'], p['b_evn']))

    o_sca, o_vec = gdb(y_sca, y_vec, 'o_')
    # back to the kernel's lane-dense layout: (out_sca, E), (3, out_vec, E)
    return o_sca.T, jnp.transpose(o_vec, (2, 1, 0))


if __name__ == "__main__":
    NODE_SCA, NODE_VEC = 32, 8
    EDGE_SCA, EDGE_VEC = 16, 8
    OUT_SCA, OUT_VEC = 32, 8
    N_NODES, N_EDGES = 100, 300

    key = jax.random.PRNGKey(0)
    kp, k1, k2, k3, k4, k5 = jax.random.split(key, 6)
    params = init_params(kp, NODE_SCA, NODE_VEC, EDGE_SCA, EDGE_VEC, OUT_SCA, OUT_VEC)
    kparams = prepare_kernel_params(params)          # one-time host-side weight prep

    node_sca = jax.random.normal(k1, (NODE_SCA, N_NODES), jnp.float32)       # (C, N)
    node_vec = jax.random.normal(k2, (3, NODE_VEC, N_NODES), jnp.float32)    # (3, C, N)
    edge_sca = jax.random.normal(k3, (EDGE_SCA, N_EDGES), jnp.float32)       # (C, E)
    edge_vec = jax.random.normal(k4, (3, EDGE_VEC, N_EDGES), jnp.float32)    # (3, C, E)
    edge_index = jax.random.randint(k5, (N_EDGES,), 0, N_NODES)

    # tile_e=128 exercises a multi-step grid + ragged padding (E=300 -> 384, grid=3).
    out_sca, out_vec = message_module(node_sca, node_vec, edge_sca, edge_vec,
                                      edge_index, kparams, OUT_SCA, OUT_VEC, tile_e=128)
    jax.block_until_ready((out_sca, out_vec))

    ref_sca, ref_vec = ref_forward(node_sca, node_vec, edge_sca, edge_vec,
                                   edge_index, params)
    assert out_sca.shape == ref_sca.shape and out_vec.shape == ref_vec.shape
    # Tolerance covers bf16 MXU operands (f32 accumulation) vs the f32 reference.
    assert jnp.allclose(out_sca, ref_sca, atol=3e-2, rtol=3e-2), "scalar output mismatch"
    assert jnp.allclose(out_vec, ref_vec, atol=3e-2, rtol=3e-2), "vector output mismatch"

    print("KERNEL_OK")
</pallas_src>

<mosaic_0001>
module attributes {stable_mosaic.version = 11 : i64} {
  func.func @message_kernel(%arg0: i32, %arg1: memref<32x128xf32, #tpu.memory_space<vmem>>, %arg2: memref<3x8x128xf32, #tpu.memory_space<vmem>>, %arg3: memref<16x128xf32, #tpu.memory_space<vmem>>, %arg4: memref<3x8x128xf32, #tpu.memory_space<vmem>>, %arg5: memref<8x8xbf16, #tpu.memory_space<vmem>>, %arg6: memref<32x40xbf16, #tpu.memory_space<vmem>>, %arg7: memref<8x32xbf16, #tpu.memory_space<vmem>>, %arg8: memref<8x1xf32, #tpu.memory_space<vmem>>, %arg9: memref<8x8xbf16, #tpu.memory_space<vmem>>, %arg10: memref<8x8xbf16, #tpu.memory_space<vmem>>, %arg11: memref<16x24xbf16, #tpu.memory_space<vmem>>, %arg12: memref<8x16xbf16, #tpu.memory_space<vmem>>, %arg13: memref<8x1xf32, #tpu.memory_space<vmem>>, %arg14: memref<8x8xbf16, #tpu.memory_space<vmem>>, %arg15: memref<8x8xbf16, #tpu.memory_space<vmem>>, %arg16: memref<40x16xbf16, #tpu.memory_space<vmem>>, %arg17: memref<40x1xf32, #tpu.memory_space<vmem>>, %arg18: memref<8x32xbf16, #tpu.memory_space<vmem>>, %arg19: memref<8x1xf32, #tpu.memory_space<vmem>>, %arg20: memref<8x8xbf16, #tpu.memory_space<vmem>>, %arg21: memref<8x1xf32, #tpu.memory_space<vmem>>, %arg22: memref<8x8xbf16, #tpu.memory_space<vmem>>, %arg23: memref<32x40xbf16, #tpu.memory_space<vmem>>, %arg24: memref<8x32xbf16, #tpu.memory_space<vmem>>, %arg25: memref<8x1xf32, #tpu.memory_space<vmem>>, %arg26: memref<8x8xbf16, #tpu.memory_space<vmem>>, %arg27: memref<32x128xf32, #tpu.memory_space<vmem>>, %arg28: memref<3x8x128xf32, #tpu.memory_space<vmem>>) attributes {dimension_semantics = [#tpu.dimension_semantics<parallel>], iteration_bounds = array<i64: 3>, scalar_prefetch = 0 : i64, scratch_operands = 0 : i64, tpu.core_type = #tpu.core_type<tc>, window_params = [{transform_indices = @transform_0, window_bounds = array<i64: 32, 128>}, {transform_indices = @transform_1, window_bounds = array<i64: 3, 8, 128>}, {transform_indices = @transform_2, window_bounds = array<i64: 16, 128>}, {transform_indices = @transform_3, window_bounds = array<i64: 3, 8, 128>}, {pipeline_mode = #tpu.pipeline_mode<synchronous>, transform_indices = @transform_4, window_bounds = array<i64: 8, 8>}, {pipeline_mode = #tpu.pipeline_mode<synchronous>, transform_indices = @transform_5, window_bounds = array<i64: 32, 40>}, {pipeline_mode = #tpu.pipeline_mode<synchronous>, transform_indices = @transform_6, window_bounds = array<i64: 8, 32>}, {pipeline_mode = #tpu.pipeline_mode<synchronous>, transform_indices = @transform_7, window_bounds = array<i64: 8, 1>}, {pipeline_mode = #tpu.pipeline_mode<synchronous>, transform_indices = @transform_8, window_bounds = array<i64: 8, 8>}, {pipeline_mode = #tpu.pipeline_mode<synchronous>, transform_indices = @transform_9, window_bounds = array<i64: 8, 8>}, {pipeline_mode = #tpu.pipeline_mode<synchronous>, transform_indices = @transform_10, window_bounds = array<i64: 16, 24>}, {pipeline_mode = #tpu.pipeline_mode<synchronous>, transform_indices = @transform_11, window_bounds = array<i64: 8, 16>}, {pipeline_mode = #tpu.pipeline_mode<synchronous>, transform_indices = @transform_12, window_bounds = array<i64: 8, 1>}, {pipeline_mode = #tpu.pipeline_mode<synchronous>, transform_indices = @transform_13, window_bounds = array<i64: 8, 8>}, {pipeline_mode = #tpu.pipeline_mode<synchronous>, transform_indices = @transform_14, window_bounds = array<i64: 8, 8>}, {pipeline_mode = #tpu.pipeline_mode<synchronous>, transform_indices = @transform_15, window_bounds = array<i64: 40, 16>}, {pipeline_mode = #tpu.pipeline_mode<synchronous>, transform_indices = @transform_16, window_bounds = array<i64: 40, 1>}, {pipeline_mode = #tpu.pipeline_mode<synchronous>, transform_indices = @transform_17, window_bounds = array<i64: 8, 32>}, {pipeline_mode = #tpu.pipeline_mode<synchronous>, transform_indices = @transform_18, window_bounds = array<i64: 8, 1>}, {pipeline_mode = #tpu.pipeline_mode<synchronous>, transform_indices = @transform_19, window_bounds = array<i64: 8, 8>}, {pipeline_mode = #tpu.pipeline_mode<synchronous>, transform_indices = @transform_20, window_bounds = array<i64: 8, 1>}, {pipeline_mode = #tpu.pipeline_mode<synchronous>, transform_indices = @transform_21, window_bounds = array<i64: 8, 8>}, {pipeline_mode = #tpu.pipeline_mode<synchronous>, transform_indices = @transform_22, window_bounds = array<i64: 32, 40>}, {pipeline_mode = #tpu.pipeline_mode<synchronous>, transform_indices = @transform_23, window_bounds = array<i64: 8, 32>}, {pipeline_mode = #tpu.pipeline_mode<synchronous>, transform_indices = @transform_24, window_bounds = array<i64: 8, 1>}, {pipeline_mode = #tpu.pipeline_mode<synchronous>, transform_indices = @transform_25, window_bounds = array<i64: 8, 8>}, {transform_indices = @transform_26, window_bounds = array<i64: 32, 128>}, {transform_indices = @transform_27, window_bounds = array<i64: 3, 8, 128>}]} {
    %c0 = arith.constant 0 : index
    %c0_0 = arith.constant 0 : index
    %0 = vector.load %arg5[%c0, %c0_0] : memref<8x8xbf16, #tpu.memory_space<vmem>>, vector<8x8xbf16>
    %c0_1 = arith.constant 0 : index
    %c0_2 = arith.constant 0 : index
    %1 = vector.load %arg6[%c0_1, %c0_2] : memref<32x40xbf16, #tpu.memory_space<vmem>>, vector<32x40xbf16>
    %c0_3 = arith.constant 0 : index
    %c0_4 = arith.constant 0 : index
    %2 = vector.load %arg7[%c0_3, %c0_4] : memref<8x32xbf16, #tpu.memory_space<vmem>>, vector<8x32xbf16>
    %c0_5 = arith.constant 0 : index
    %c0_6 = arith.constant 0 : index
    %3 = vector.load %arg8[%c0_5, %c0_6] : memref<8x1xf32, #tpu.memory_space<vmem>>, vector<8x1xf32>
    %c0_7 = arith.constant 0 : index
    %c0_8 = arith.constant 0 : index
    %4 = vector.load %arg9[%c0_7, %c0_8] : memref<8x8xbf16, #tpu.memory_space<vmem>>, vector<8x8xbf16>
    %c0_9 = arith.constant 0 : index
    %c0_10 = arith.constant 0 : index
    %5 = vector.load %arg10[%c0_9, %c0_10] : memref<8x8xbf16, #tpu.memory_space<vmem>>, vector<8x8xbf16>
    %c0_11 = arith.constant 0 : index
    %c0_12 = arith.constant 0 : index
    %6 = vector.load %arg11[%c0_11, %c0_12] : memref<16x24xbf16, #tpu.memory_space<vmem>>, vector<16x24xbf16>
    %c0_13 = arith.constant 0 : index
    %c0_14 = arith.constant 0 : index
    %7 = vector.load %arg12[%c0_13, %c0_14] : memref<8x16xbf16, #tpu.memory_space<vmem>>, vector<8x16xbf16>
    %c0_15 = arith.constant 0 : index
    %c0_16 = arith.constant 0 : index
    %8 = vector.load %arg13[%c0_15, %c0_16] : memref<8x1xf32, #tpu.memory_space<vmem>>, vector<8x1xf32>
    %c0_17 = arith.constant 0 : index
    %c0_18 = arith.constant 0 : index
    %9 = vector.load %arg14[%c0_17, %c0_18] : memref<8x8xbf16, #tpu.memory_space<vmem>>, vector<8x8xbf16>
    %c0_19 = arith.constant 0 : index
    %c0_20 = arith.constant 0 : index
    %10 = vector.load %arg15[%c0_19, %c0_20] : memref<8x8xbf16, #tpu.memory_space<vmem>>, vector<8x8xbf16>
    %c0_21 = arith.constant 0 : index
    %c0_22 = arith.constant 0 : index
    %11 = vector.load %arg16[%c0_21, %c0_22] : memref<40x16xbf16, #tpu.memory_space<vmem>>, vector<40x16xbf16>
    %c0_23 = arith.constant 0 : index
    %c0_24 = arith.constant 0 : index
    %12 = vector.load %arg17[%c0_23, %c0_24] : memref<40x1xf32, #tpu.memory_space<vmem>>, vector<40x1xf32>
    %c0_25 = arith.constant 0 : index
    %c0_26 = arith.constant 0 : index
    %13 = vector.load %arg18[%c0_25, %c0_26] : memref<8x32xbf16, #tpu.memory_space<vmem>>, vector<8x32xbf16>
    %c0_27 = arith.constant 0 : index
    %c0_28 = arith.constant 0 : index
    %14 = vector.load %arg19[%c0_27, %c0_28] : memref<8x1xf32, #tpu.memory_space<vmem>>, vector<8x1xf32>
    %c0_29 = arith.constant 0 : index
    %c0_30 = arith.constant 0 : index
    %15 = vector.load %arg20[%c0_29, %c0_30] : memref<8x8xbf16, #tpu.memory_space<vmem>>, vector<8x8xbf16>
    %c0_31 = arith.constant 0 : index
    %c0_32 = arith.constant 0 : index
    %16 = vector.load %arg21[%c0_31, %c0_32] : memref<8x1xf32, #tpu.memory_space<vmem>>, vector<8x1xf32>
    %c0_33 = arith.constant 0 : index
    %c0_34 = arith.constant 0 : index
    %17 = vector.load %arg22[%c0_33, %c0_34] : memref<8x8xbf16, #tpu.memory_space<vmem>>, vector<8x8xbf16>
    %c0_35 = arith.constant 0 : index
    %c0_36 = arith.constant 0 : index
    %18 = vector.load %arg23[%c0_35, %c0_36] : memref<32x40xbf16, #tpu.memory_space<vmem>>, vector<32x40xbf16>
    %c0_37 = arith.constant 0 : index
    %c0_38 = arith.constant 0 : index
    %19 = vector.load %arg24[%c0_37, %c0_38] : memref<8x32xbf16, #tpu.memory_space<vmem>>, vector<8x32xbf16>
    %c0_39 = arith.constant 0 : index
    %c0_40 = arith.constant 0 : index
    %20 = vector.load %arg25[%c0_39, %c0_40] : memref<8x1xf32, #tpu.memory_space<vmem>>, vector<8x1xf32>
    %c0_41 = arith.constant 0 : index
    %c0_42 = arith.constant 0 : index
    %21 = vector.load %arg26[%c0_41, %c0_42] : memref<8x8xbf16, #tpu.memory_space<vmem>>, vector<8x8xbf16>
    %c0_43 = arith.constant 0 : index
    %c0_44 = arith.constant 0 : index
    %22 = vector.load %arg1[%c0_43, %c0_44] : memref<32x128xf32, #tpu.memory_space<vmem>>, vector<32x128xf32>
    %c0_45 = arith.constant 0 : index
    %c0_46 = arith.constant 0 : index
    %c0_47 = arith.constant 0 : index
    %23 = vector.load %arg2[%c0_45, %c0_46, %c0_47] : memref<3x8x128xf32, #tpu.memory_space<vmem>>, vector<1x8x128xf32>
    %24 = vector.shape_cast %23 : vector<1x8x128xf32> to vector<8x128xf32>
    %c1 = arith.constant 1 : index
    %c0_48 = arith.constant 0 : index
    %c0_49 = arith.constant 0 : index
    %25 = vector.load %arg2[%c1, %c0_48, %c0_49] : memref<3x8x128xf32, #tpu.memory_space<vmem>>, vector<1x8x128xf32>
    %26 = vector.shape_cast %25 : vector<1x8x128xf32> to vector<8x128xf32>
    %c2 = arith.constant 2 : index
    %c0_50 = arith.constant 0 : index
    %c0_51 = arith.constant 0 : index
    %27 = vector.load %arg2[%c2, %c0_50, %c0_51] : memref<3x8x128xf32, #tpu.memory_space<vmem>>, vector<1x8x128xf32>
    %28 = vector.shape_cast %27 : vector<1x8x128xf32> to vector<8x128xf32>
    %c0_52 = arith.constant 0 : index
    %c0_53 = arith.constant 0 : index
    %29 = vector.load %arg3[%c0_52, %c0_53] : memref<16x128xf32, #tpu.memory_space<vmem>>, vector<16x128xf32>
    %c0_54 = arith.constant 0 : index
    %c0_55 = arith.constant 0 : index
    %c0_56 = arith.constant 0 : index
    %30 = vector.load %arg4[%c0_54, %c0_55, %c0_56] : memref<3x8x128xf32, #tpu.memory_space<vmem>>, vector<1x8x128xf32>
    %31 = vector.shape_cast %30 : vector<1x8x128xf32> to vector<8x128xf32>
    %c1_57 = arith.constant 1 : index
    %c0_58 = arith.constant 0 : index
    %c0_59 = arith.constant 0 : index
    %32 = vector.load %arg4[%c1_57, %c0_58, %c0_59] : memref<3x8x128xf32, #tpu.memory_space<vmem>>, vector<1x8x128xf32>
    %33 = vector.shape_cast %32 : vector<1x8x128xf32> to vector<8x128xf32>
    %c2_60 = arith.constant 2 : index
    %c0_61 = arith.constant 0 : index
    %c0_62 = arith.constant 0 : index
    %34 = vector.load %arg4[%c2_60, %c0_61, %c0_62] : memref<3x8x128xf32, #tpu.memory_space<vmem>>, vector<1x8x128xf32>
    %35 = vector.shape_cast %34 : vector<1x8x128xf32> to vector<8x128xf32>
    %36 = arith.truncf %24 : vector<8x128xf32> to vector<8x128xbf16>
    %cst = arith.constant dense<0.000000e+00> : vector<8x128xf32>
    %37 = tpu.matmul %0, %36, %cst {dimension_numbers = #tpu.dot_dimension_numbers<[1], [0], [0], [1], [0, 0, 1, 1], [], []>} : vector<8x8xbf16>, vector<8x128xbf16>, vector<8x128xf32> -> vector<8x128xf32>
    %38 = arith.truncf %26 : vector<8x128xf32> to vector<8x128xbf16>
    %cst_63 = arith.constant dense<0.000000e+00> : vector<8x128xf32>
    %39 = tpu.matmul %0, %38, %cst_63 {dimension_numbers = #tpu.dot_dimension_numbers<[1], [0], [0], [1], [0, 0, 1, 1], [], []>} : vector<8x8xbf16>, vector<8x128xbf16>, vector<8x128xf32> -> vector<8x128xf32>
    %40 = arith.truncf %28 : vector<8x128xf32> to vector<8x128xbf16>
    %cst_64 = arith.constant dense<0.000000e+00> : vector<8x128xf32>
    %41 = tpu.matmul %0, %40, %cst_64 {dimension_numbers = #tpu.dot_dimension_numbers<[1], [0], [0], [1], [0, 0, 1, 1], [], []>} : vector<8x8xbf16>, vector<8x128xbf16>, vector<8x128xf32> -> vector<8x128xf32>
    %42 = arith.mulf %37, %37 : vector<8x128xf32>
    %43 = arith.mulf %39, %39 : vector<8x128xf32>
    %44 = arith.addf %42, %43 : vector<8x128xf32>
    %45 = arith.mulf %41, %41 : vector<8x128xf32>
    %46 = arith.addf %44, %45 : vector<8x128xf32>
    %47 = math.sqrt %46 : vector<8x128xf32>
    %48 = tpu.concatenate %47, %22 in 0 : vector<8x128xf32>, vector<32x128xf32> -> vector<40x128xf32>
    %49 = arith.truncf %48 : vector<40x128xf32> to vector<40x128xbf16>
    %cst_65 = arith.constant dense<0.000000e+00> : vector<32x128xf32>
    %50 = tpu.matmul %1, %49, %cst_65 {dimension_numbers = #tpu.dot_dimension_numbers<[1], [0], [0], [1], [0, 0, 1, 1], [], []>} : vector<32x40xbf16>, vector<40x128xbf16>, vector<32x128xf32> -> vector<32x128xf32>
    %51 = arith.truncf %50 : vector<32x128xf32> to vector<32x128xbf16>
    %cst_66 = arith.constant dense<0.000000e+00> : vector<8x128xf32>
    %52 = tpu.matmul %2, %51, %cst_66 {dimension_numbers = #tpu.dot_dimension_numbers<[1], [0], [0], [1], [0, 0, 1, 1], [], []>} : vector<8x32xbf16>, vector<32x128xbf16>, vector<8x128xf32> -> vector<8x128xf32>
    %53 = vector.broadcast %3 : vector<8x1xf32> to vector<8x128xf32>
    %54 = arith.addf %52, %53 : vector<8x128xf32>
    %55 = arith.negf %54 : vector<8x128xf32>
    %56 = math.exp %55 : vector<8x128xf32>
    %cst_67 = arith.constant 1.000000e+00 : f32
    %57 = vector.broadcast %cst_67 : f32 to vector<8x128xf32>
    %58 = arith.addf %57, %56 : vector<8x128xf32>
    %59 = arith.divf %57, %58 : vector<8x128xf32>
    %60 = arith.truncf %37 : vector<8x128xf32> to vector<8x128xbf16>
    %cst_68 = arith.constant dense<0.000000e+00> : vector<8x128xf32>
    %61 = tpu.matmul %4, %60, %cst_68 {dimension_numbers = #tpu.dot_dimension_numbers<[1], [0], [0], [1], [0, 0, 1, 1], [], []>} : vector<8x8xbf16>, vector<8x128xbf16>, vector<8x128xf32> -> vector<8x128xf32>
    %62 = arith.mulf %59, %61 : vector<8x128xf32>
    %63 = arith.truncf %39 : vector<8x128xf32> to vector<8x128xbf16>
    %cst_69 = arith.constant dense<0.000000e+00> : vector<8x128xf32>
    %64 = tpu.matmul %4, %63, %cst_69 {dimension_numbers = #tpu.dot_dimension_numbers<[1], [0], [0], [1], [0, 0, 1, 1], [], []>} : vector<8x8xbf16>, vector<8x128xbf16>, vector<8x128xf32> -> vector<8x128xf32>
    %65 = arith.mulf %59, %64 : vector<8x128xf32>
    %66 = arith.truncf %41 : vector<8x128xf32> to vector<8x128xbf16>
    %cst_70 = arith.constant dense<0.000000e+00> : vector<8x128xf32>
    %67 = tpu.matmul %4, %66, %cst_70 {dimension_numbers = #tpu.dot_dimension_numbers<[1], [0], [0], [1], [0, 0, 1, 1], [], []>} : vector<8x8xbf16>, vector<8x128xbf16>, vector<8x128xf32> -> vector<8x128xf32>
    %68 = arith.mulf %59, %67 : vector<8x128xf32>
    %69 = arith.truncf %31 : vector<8x128xf32> to vector<8x128xbf16>
    %cst_71 = arith.constant dense<0.000000e+00> : vector<8x128xf32>
    %70 = tpu.matmul %5, %69, %cst_71 {dimension_numbers = #tpu.dot_dimension_numbers<[1], [0], [0], [1], [0, 0, 1, 1], [], []>} : vector<8x8xbf16>, vector<8x128xbf16>, vector<8x128xf32> -> vector<8x128xf32>
    %71 = arith.truncf %33 : vector<8x128xf32> to vector<8x128xbf16>
    %cst_72 = arith.constant dense<0.000000e+00> : vector<8x128xf32>
    %72 = tpu.matmul %5, %71, %cst_72 {dimension_numbers = #tpu.dot_dimension_numbers<[1], [0], [0], [1], [0, 0, 1, 1], [], []>} : vector<8x8xbf16>, vector<8x128xbf16>, vector<8x128xf32> -> vector<8x128xf32>
    %73 = arith.truncf %35 : vector<8x128xf32> to vector<8x128xbf16>
    %cst_73 = arith.constant dense<0.000000e+00> : vector<8x128xf32>
    %74 = tpu.matmul %5, %73, %cst_73 {dimension_numbers = #tpu.dot_dimension_numbers<[1], [0], [0], [1], [0, 0, 1, 1], [], []>} : vector<8x8xbf16>, vector<8x128xbf16>, vector<8x128xf32> -> vector<8x128xf32>
    %75 = arith.mulf %70, %70 : vector<8x128xf32>
    %76 = arith.mulf %72, %72 : vector<8x128xf32>
    %77 = arith.addf %75, %76 : vector<8x128xf32>
    %78 = arith.mulf %74, %74 : vector<8x128xf32>
    %79 = arith.addf %77, %78 : vector<8x128xf32>
    %80 = math.sqrt %79 : vector<8x128xf32>
    %81 = tpu.concatenate %80, %29 in 0 : vector<8x128xf32>, vector<16x128xf32> -> vector<24x128xf32>
    %82 = arith.truncf %81 : vector<24x128xf32> to vector<24x128xbf16>
    %cst_74 = arith.constant dense<0.000000e+00> : vector<16x128xf32>
    %83 = tpu.matmul %6, %82, %cst_74 {dimension_numbers = #tpu.dot_dimension_numbers<[1], [0], [0], [1], [0, 0, 1, 1], [], []>} : vector<16x24xbf16>, vector<24x128xbf16>, vector<16x128xf32> -> vector<16x128xf32>
    %84 = arith.truncf %83 : vector<16x128xf32> to vector<16x128xbf16>
    %cst_75 = arith.constant dense<0.000000e+00> : vector<8x128xf32>
    %85 = tpu.matmul %7, %84, %cst_75 {dimension_numbers = #tpu.dot_dimension_numbers<[1], [0], [0], [1], [0, 0, 1, 1], [], []>} : vector<8x16xbf16>, vector<16x128xbf16>, vector<8x128xf32> -> vector<8x128xf32>
    %86 = vector.broadcast %8 : vector<8x1xf32> to vector<8x128xf32>
    %87 = arith.addf %85, %86 : vector<8x128xf32>
    %88 = arith.negf %87 : vector<8x128xf32>
    %89 = math.exp %88 : vector<8x128xf32>
    %cst_76 = arith.constant 1.000000e+00 : f32
    %90 = vector.broadcast %cst_76 : f32 to vector<8x128xf32>
    %91 = arith.addf %90, %89 : vector<8x128xf32>
    %92 = arith.divf %90, %91 : vector<8x128xf32>
    %93 = arith.truncf %70 : vector<8x128xf32> to vector<8x128xbf16>
    %cst_77 = arith.constant dense<0.000000e+00> : vector<8x128xf32>
    %94 = tpu.matmul %9, %93, %cst_77 {dimension_numbers = #tpu.dot_dimension_numbers<[1], [0], [0], [1], [0, 0, 1, 1], [], []>} : vector<8x8xbf16>, vector<8x128xbf16>, vector<8x128xf32> -> vector<8x128xf32>
    %95 = arith.mulf %92, %94 : vector<8x128xf32>
    %96 = arith.truncf %72 : vector<8x128xf32> to vector<8x128xbf16>
    %cst_78 = arith.constant dense<0.000000e+00> : vector<8x128xf32>
    %97 = tpu.matmul %9, %96, %cst_78 {dimension_numbers = #tpu.dot_dimension_numbers<[1], [0], [0], [1], [0, 0, 1, 1], [], []>} : vector<8x8xbf16>, vector<8x128xbf16>, vector<8x128xf32> -> vector<8x128xf32>
    %98 = arith.mulf %92, %97 : vector<8x128xf32>
    %99 = arith.truncf %74 : vector<8x128xf32> to vector<8x128xbf16>
    %cst_79 = arith.constant dense<0.000000e+00> : vector<8x128xf32>
    %100 = tpu.matmul %9, %99, %cst_79 {dimension_numbers = #tpu.dot_dimension_numbers<[1], [0], [0], [1], [0, 0, 1, 1], [], []>} : vector<8x8xbf16>, vector<8x128xbf16>, vector<8x128xf32> -> vector<8x128xf32>
    %101 = arith.mulf %92, %100 : vector<8x128xf32>
    %102 = arith.truncf %95 : vector<8x128xf32> to vector<8x128xbf16>
    %cst_80 = arith.constant dense<0.000000e+00> : vector<8x128xf32>
    %103 = tpu.matmul %10, %102, %cst_80 {dimension_numbers = #tpu.dot_dimension_numbers<[1], [0], [0], [1], [0, 0, 1, 1], [], []>} : vector<8x8xbf16>, vector<8x128xbf16>, vector<8x128xf32> -> vector<8x128xf32>
    %104 = arith.truncf %98 : vector<8x128xf32> to vector<8x128xbf16>
    %cst_81 = arith.constant dense<0.000000e+00> : vector<8x128xf32>
    %105 = tpu.matmul %10, %104, %cst_81 {dimension_numbers = #tpu.dot_dimension_numbers<[1], [0], [0], [1], [0, 0, 1, 1], [], []>} : vector<8x8xbf16>, vector<8x128xbf16>, vector<8x128xf32> -> vector<8x128xf32>
    %106 = arith.truncf %101 : vector<8x128xf32> to vector<8x128xbf16>
    %cst_82 = arith.constant dense<0.000000e+00> : vector<8x128xf32>
    %107 = tpu.matmul %10, %106, %cst_82 {dimension_numbers = #tpu.dot_dimension_numbers<[1], [0], [0], [1], [0, 0, 1, 1], [], []>} : vector<8x8xbf16>, vector<8x128xbf16>, vector<8x128xf32> -> vector<8x128xf32>
    %108 = arith.mulf %95, %103 : vector<8x128xf32>
    %109 = arith.mulf %98, %105 : vector<8x128xf32>
    %110 = arith.addf %108, %109 : vector<8x128xf32>
    %111 = arith.mulf %101, %107 : vector<8x128xf32>
    %112 = arith.addf %110, %111 : vector<8x128xf32>
    %113 = arith.mulf %103, %103 : vector<8x128xf32>
    %114 = arith.mulf %105, %105 : vector<8x128xf32>
    %115 = arith.addf %113, %114 : vector<8x128xf32>
    %116 = arith.mulf %107, %107 : vector<8x128xf32>
    %117 = arith.addf %115, %116 : vector<8x128xf32>
    %cst_83 = arith.constant 9.900000e-01 : f32
    %118 = vector.broadcast %cst_83 : f32 to vector<8x128xf32>
    %119 = arith.mulf %118, %112 : vector<8x128xf32>
    %cst_84 = arith.constant 9.99999997E-7 : f32
    %120 = vector.broadcast %cst_84 : f32 to vector<8x128xf32>
    %121 = arith.addf %117, %120 : vector<8x128xf32>
    %122 = arith.divf %119, %121 : vector<8x128xf32>
    %cst_85 = arith.constant 0.000000e+00 : f32
    %123 = vector.broadcast %cst_85 : f32 to vector<8x128xf32>
    %124 = arith.cmpf oge, %112, %123 : vector<8x128xf32>
    %125 = arith.mulf %122, %103 : vector<8x128xf32>
    %126 = arith.subf %95, %125 : vector<8x128xf32>
    %127 = arith.select %124, %95, %126 : vector<8x128xi1>, vector<8x128xf32>
    %128 = arith.mulf %122, %105 : vector<8x128xf32>
    %129 = arith.subf %98, %128 : vector<8x128xf32>
    %130 = arith.select %124, %98, %129 : vector<8x128xi1>, vector<8x128xf32>
    %131 = arith.mulf %122, %107 : vector<8x128xf32>
    %132 = arith.subf %101, %131 : vector<8x128xf32>
    %133 = arith.select %124, %101, %132 : vector<8x128xi1>, vector<8x128xf32>
    %cst_86 = arith.constant 0.00999999977 : f32
    %134 = vector.broadcast %cst_86 : f32 to vector<16x128xf32>
    %135 = arith.mulf %134, %83 : vector<16x128xf32>
    %136 = arith.maximumf %83, %135 : vector<16x128xf32>
    %137 = arith.truncf %136 : vector<16x128xf32> to vector<16x128xbf16>
    %cst_87 = arith.constant dense<0.000000e+00> : vector<40x128xf32>
    %138 = tpu.matmul %11, %137, %cst_87 {dimension_numbers = #tpu.dot_dimension_numbers<[1], [0], [0], [1], [0, 0, 1, 1], [], []>} : vector<40x16xbf16>, vector<16x128xbf16>, vector<40x128xf32> -> vector<40x128xf32>
    %139 = vector.broadcast %12 : vector<40x1xf32> to vector<40x128xf32>
    %140 = arith.addf %138, %139 : vector<40x128xf32>
    %141 = vector.extract_strided_slice %140 {offsets = [0, 0], sizes = [32, 128], strides = [1, 1]} : vector<40x128xf32> to vector<32x128xf32>
    %142 = arith.mulf %50, %141 : vector<32x128xf32>
    %143 = vector.extract_strided_slice %140 {offsets = [32, 0], sizes = [8, 128], strides = [1, 1]} : vector<40x128xf32> to vector<8x128xf32>
    %144 = arith.truncf %50 : vector<32x128xf32> to vector<32x128xbf16>
    %cst_88 = arith.constant dense<0.000000e+00> : vector<8x128xf32>
    %145 = tpu.matmul %13, %144, %cst_88 {dimension_numbers = #tpu.dot_dimension_numbers<[1], [0], [0], [1], [0, 0, 1, 1], [], []>} : vector<8x32xbf16>, vector<32x128xbf16>, vector<8x128xf32> -> vector<8x128xf32>
    %146 = vector.broadcast %14 : vector<8x1xf32> to vector<8x128xf32>
    %147 = arith.addf %145, %146 : vector<8x128xf32>
    %148 = arith.mulf %143, %62 : vector<8x128xf32>
    %149 = arith.truncf %127 : vector<8x128xf32> to vector<8x128xbf16>
    %cst_89 = arith.constant dense<0.000000e+00> : vector<8x128xf32>
    %150 = tpu.matmul %15, %149, %cst_89 {dimension_numbers = #tpu.dot_dimension_numbers<[1], [0], [0], [1], [0, 0, 1, 1], [], []>} : vector<8x8xbf16>, vector<8x128xbf16>, vector<8x128xf32> -> vector<8x128xf32>
    %151 = vector.broadcast %16 : vector<8x1xf32> to vector<8x128xf32>
    %152 = arith.addf %150, %151 : vector<8x128xf32>
    %153 = arith.mulf %147, %152 : vector<8x128xf32>
    %154 = arith.addf %148, %153 : vector<8x128xf32>
    %155 = arith.mulf %143, %65 : vector<8x128xf32>
    %156 = arith.truncf %130 : vector<8x128xf32> to vector<8x128xbf16>
    %cst_90 = arith.constant dense<0.000000e+00> : vector<8x128xf32>
    %157 = tpu.matmul %15, %156, %cst_90 {dimension_numbers = #tpu.dot_dimension_numbers<[1], [0], [0], [1], [0, 0, 1, 1], [], []>} : vector<8x8xbf16>, vector<8x128xbf16>, vector<8x128xf32> -> vector<8x128xf32>
    %158 = vector.broadcast %16 : vector<8x1xf32> to vector<8x128xf32>
    %159 = arith.addf %157, %158 : vector<8x128xf32>
    %160 = arith.mulf %147, %159 : vector<8x128xf32>
    %161 = arith.addf %155, %160 : vector<8x128xf32>
    %162 = arith.mulf %143, %68 : vector<8x128xf32>
    %163 = arith.truncf %133 : vector<8x128xf32> to vector<8x128xbf16>
    %cst_91 = arith.constant dense<0.000000e+00> : vector<8x128xf32>
    %164 = tpu.matmul %15, %163, %cst_91 {dimension_numbers = #tpu.dot_dimension_numbers<[1], [0], [0], [1], [0, 0, 1, 1], [], []>} : vector<8x8xbf16>, vector<8x128xbf16>, vector<8x128xf32> -> vector<8x128xf32>
    %165 = vector.broadcast %16 : vector<8x1xf32> to vector<8x128xf32>
    %166 = arith.addf %164, %165 : vector<8x128xf32>
    %167 = arith.mulf %147, %166 : vector<8x128xf32>
    %168 = arith.addf %162, %167 : vector<8x128xf32>
    %169 = arith.truncf %154 : vector<8x128xf32> to vector<8x128xbf16>
    %cst_92 = arith.constant dense<0.000000e+00> : vector<8x128xf32>
    %170 = tpu.matmul %17, %169, %cst_92 {dimension_numbers = #tpu.dot_dimension_numbers<[1], [0], [0], [1], [0, 0, 1, 1], [], []>} : vector<8x8xbf16>, vector<8x128xbf16>, vector<8x128xf32> -> vector<8x128xf32>
    %171 = arith.truncf %161 : vector<8x128xf32> to vector<8x128xbf16>
    %cst_93 = arith.constant dense<0.000000e+00> : vector<8x128xf32>
    %172 = tpu.matmul %17, %171, %cst_93 {dimension_numbers = #tpu.dot_dimension_numbers<[1], [0], [0], [1], [0, 0, 1, 1], [], []>} : vector<8x8xbf16>, vector<8x128xbf16>, vector<8x128xf32> -> vector<8x128xf32>
    %173 = arith.truncf %168 : vector<8x128xf32> to vector<8x128xbf16>
    %cst_94 = arith.constant dense<0.000000e+00> : vector<8x128xf32>
    %174 = tpu.matmul %17, %173, %cst_94 {dimension_numbers = #tpu.dot_dimension_numbers<[1], [0], [0], [1], [0, 0, 1, 1], [], []>} : vector<8x8xbf16>, vector<8x128xbf16>, vector<8x128xf32> -> vector<8x128xf32>
    %175 = arith.mulf %170, %170 : vector<8x128xf32>
    %176 = arith.mulf %172, %172 : vector<8x128xf32>
    %177 = arith.addf %175, %176 : vector<8x128xf32>
    %178 = arith.mulf %174, %174 : vector<8x128xf32>
    %179 = arith.addf %177, %178 : vector<8x128xf32>
    %180 = math.sqrt %179 : vector<8x128xf32>
    %181 = tpu.concatenate %180, %142 in 0 : vector<8x128xf32>, vector<32x128xf32> -> vector<40x128xf32>
    %182 = arith.truncf %181 : vector<40x128xf32> to vector<40x128xbf16>
    %cst_95 = arith.constant dense<0.000000e+00> : vector<32x128xf32>
    %183 = tpu.matmul %18, %182, %cst_95 {dimension_numbers = #tpu.dot_dimension_numbers<[1], [0], [0], [1], [0, 0, 1, 1], [], []>} : vector<32x40xbf16>, vector<40x128xbf16>, vector<32x128xf32> -> vector<32x128xf32>
    %184 = arith.truncf %183 : vector<32x128xf32> to vector<32x128xbf16>
    %cst_96 = arith.constant dense<0.000000e+00> : vector<8x128xf32>
    %185 = tpu.matmul %19, %184, %cst_96 {dimension_numbers = #tpu.dot_dimension_numbers<[1], [0], [0], [1], [0, 0, 1, 1], [], []>} : vector<8x32xbf16>, vector<32x128xbf16>, vector<8x128xf32> -> vector<8x128xf32>
    %186 = vector.broadcast %20 : vector<8x1xf32> to vector<8x128xf32>
    %187 = arith.addf %185, %186 : vector<8x128xf32>
    %188 = arith.negf %187 : vector<8x128xf32>
    %189 = math.exp %188 : vector<8x128xf32>
    %cst_97 = arith.constant 1.000000e+00 : f32
    %190 = vector.broadcast %cst_97 : f32 to vector<8x128xf32>
    %191 = arith.addf %190, %189 : vector<8x128xf32>
    %192 = arith.divf %190, %191 : vector<8x128xf32>
    %193 = arith.truncf %170 : vector<8x128xf32> to vector<8x128xbf16>
    %cst_98 = arith.constant dense<0.000000e+00> : vector<8x128xf32>
    %194 = tpu.matmul %21, %193, %cst_98 {dimension_numbers = #tpu.dot_dimension_numbers<[1], [0], [0], [1], [0, 0, 1, 1], [], []>} : vector<8x8xbf16>, vector<8x128xbf16>, vector<8x128xf32> -> vector<8x128xf32>
    %195 = arith.mulf %192, %194 : vector<8x128xf32>
    %196 = arith.truncf %172 : vector<8x128xf32> to vector<8x128xbf16>
    %cst_99 = arith.constant dense<0.000000e+00> : vector<8x128xf32>
    %197 = tpu.matmul %21, %196, %cst_99 {dimension_numbers = #tpu.dot_dimension_numbers<[1], [0], [0], [1], [0, 0, 1, 1], [], []>} : vector<8x8xbf16>, vector<8x128xbf16>, vector<8x128xf32> -> vector<8x128xf32>
    %198 = arith.mulf %192, %197 : vector<8x128xf32>
    %199 = arith.truncf %174 : vector<8x128xf32> to vector<8x128xbf16>
    %cst_100 = arith.constant dense<0.000000e+00> : vector<8x128xf32>
    %200 = tpu.matmul %21, %199, %cst_100 {dimension_numbers = #tpu.dot_dimension_numbers<[1], [0], [0], [1], [0, 0, 1, 1], [], []>} : vector<8x8xbf16>, vector<8x128xbf16>, vector<8x128xf32> -> vector<8x128xf32>
    %201 = arith.mulf %192, %200 : vector<8x128xf32>
    %c0_101 = arith.constant 0 : index
    %c0_102 = arith.constant 0 : index
    %202 = vector.load %arg27[%c0_101, %c0_102] : memref<32x128xf32, #tpu.memory_space<vmem>>, vector<32x128xf32>
    tpu.vector_store %arg27[%c0_101, %c0_102], %183 {strides = array<i32>} : memref<32x128xf32, #tpu.memory_space<vmem>>, vector<32x128xf32>,
    %c0_103 = arith.constant 0 : index
    %c0_104 = arith.constant 0 : index
    %c0_105 = arith.constant 0 : index
    %203 = vector.load %arg28[%c0_103, %c0_104, %c0_105] : memref<3x8x128xf32, #tpu.memory_space<vmem>>, vector<1x8x128xf32>
    %204 = vector.shape_cast %203 : vector<1x8x128xf32> to vector<8x128xf32>
    %205 = vector.shape_cast %195 : vector<8x128xf32> to vector<1x8x128xf32>
    tpu.vector_store %arg28[%c0_103, %c0_104, %c0_105], %205 {strides = array<i32>} : memref<3x8x128xf32, #tpu.memory_space<vmem>>, vector<1x8x128xf32>,
    %c1_106 = arith.constant 1 : index
    %c0_107 = arith.constant 0 : index
    %c0_108 = arith.constant 0 : index
    %206 = vector.load %arg28[%c1_106, %c0_107, %c0_108] : memref<3x8x128xf32, #tpu.memory_space<vmem>>, vector<1x8x128xf32>
    %207 = vector.shape_cast %206 : vector<1x8x128xf32> to vector<8x128xf32>
    %208 = vector.shape_cast %198 : vector<8x128xf32> to vector<1x8x128xf32>
    tpu.vector_store %arg28[%c1_106, %c0_107, %c0_108], %208 {strides = array<i32>} : memref<3x8x128xf32, #tpu.memory_space<vmem>>, vector<1x8x128xf32>,
    %c2_109 = arith.constant 2 : index
    %c0_110 = arith.constant 0 : index
    %c0_111 = arith.constant 0 : index
    %209 = vector.load %arg28[%c2_109, %c0_110, %c0_111] : memref<3x8x128xf32, #tpu.memory_space<vmem>>, vector<1x8x128xf32>
    %210 = vector.shape_cast %209 : vector<1x8x128xf32> to vector<8x128xf32>
    %211 = vector.shape_cast %201 : vector<8x128xf32> to vector<1x8x128xf32>
    tpu.vector_store %arg28[%c2_109, %c0_110, %c0_111], %211 {strides = array<i32>} : memref<3x8x128xf32, #tpu.memory_space<vmem>>, vector<1x8x128xf32>,
    return
  }
  func.func @transform_0(%arg0: i32) -> (i32, i32) {
    %c0_i32 = arith.constant 0 : i32
    %c0_i32_0 = arith.constant 0 : i32
    return %c0_i32, %arg0 : i32, i32
  }
  func.func @transform_1(%arg0: i32) -> (i32, i32, i32) {
    %c0_i32 = arith.constant 0 : i32
    %c0_i32_0 = arith.constant 0 : i32
    %c0_i32_1 = arith.constant 0 : i32
    return %c0_i32, %c0_i32_0, %arg0 : i32, i32, i32
  }
  func.func @transform_2(%arg0: i32) -> (i32, i32) {
    %c0_i32 = arith.constant 0 : i32
    %c0_i32_0 = arith.constant 0 : i32
    return %c0_i32, %arg0 : i32, i32
  }
  func.func @transform_3(%arg0: i32) -> (i32, i32, i32) {
    %c0_i32 = arith.constant 0 : i32
    %c0_i32_0 = arith.constant 0 : i32
    %c0_i32_1 = arith.constant 0 : i32
    return %c0_i32, %c0_i32_0, %arg0 : i32, i32, i32
  }
  func.func @transform_4(%arg0: i32) -> (i32, i32) {
    %c0_i32 = arith.constant 0 : i32
    %c0_i32_0 = arith.constant 0 : i32
    %c0_i32_1 = arith.constant 0 : i32
    return %c0_i32, %c0_i32_0 : i32, i32
  }
  func.func @transform_5(%arg0: i32) -> (i32, i32) {
    %c0_i32 = arith.constant 0 : i32
    %c0_i32_0 = arith.constant 0 : i32
    %c0_i32_1 = arith.constant 0 : i32
    return %c0_i32, %c0_i32_0 : i32, i32
  }
  func.func @transform_6(%arg0: i32) -> (i32, i32) {
    %c0_i32 = arith.constant 0 : i32
    %c0_i32_0 = arith.constant 0 : i32
    %c0_i32_1 = arith.constant 0 : i32
    return %c0_i32, %c0_i32_0 : i32, i32
  }
  func.func @transform_7(%arg0: i32) -> (i32, i32) {
    %c0_i32 = arith.constant 0 : i32
    %c0_i32_0 = arith.constant 0 : i32
    %c0_i32_1 = arith.constant 0 : i32
    return %c0_i32, %c0_i32_0 : i32, i32
  }
  func.func @transform_8(%arg0: i32) -> (i32, i32) {
    %c0_i32 = arith.constant 0 : i32
    %c0_i32_0 = arith.constant 0 : i32
    %c0_i32_1 = arith.constant 0 : i32
    return %c0_i32, %c0_i32_0 : i32, i32
  }
  func.func @transform_9(%arg0: i32) -> (i32, i32) {
    %c0_i32 = arith.constant 0 : i32
    %c0_i32_0 = arith.constant 0 : i32
    %c0_i32_1 = arith.constant 0 : i32
    return %c0_i32, %c0_i32_0 : i32, i32
  }
  func.func @transform_10(%arg0: i32) -> (i32, i32) {
    %c0_i32 = arith.constant 0 : i32
    %c0_i32_0 = arith.constant 0 : i32
    %c0_i32_1 = arith.constant 0 : i32
    return %c0_i32, %c0_i32_0 : i32, i32
  }
  func.func @transform_11(%arg0: i32) -> (i32, i32) {
    %c0_i32 = arith.constant 0 : i32
    %c0_i32_0 = arith.constant 0 : i32
    %c0_i32_1 = arith.constant 0 : i32
    return %c0_i32, %c0_i32_0 : i32, i32
  }
  func.func @transform_12(%arg0: i32) -> (i32, i32) {
    %c0_i32 = arith.constant 0 : i32
    %c0_i32_0 = arith.constant 0 : i32
    %c0_i32_1 = arith.constant 0 : i32
    return %c0_i32, %c0_i32_0 : i32, i32
  }
  func.func @transform_13(%arg0: i32) -> (i32, i32) {
    %c0_i32 = arith.constant 0 : i32
    %c0_i32_0 = arith.constant 0 : i32
    %c0_i32_1 = arith.constant 0 : i32
    return %c0_i32, %c0_i32_0 : i32, i32
  }
  func.func @transform_14(%arg0: i32) -> (i32, i32) {
    %c0_i32 = arith.constant 0 : i32
    %c0_i32_0 = arith.constant 0 : i32
    %c0_i32_1 = arith.constant 0 : i32
    return %c0_i32, %c0_i32_0 : i32, i32
  }
  func.func @transform_15(%arg0: i32) -> (i32, i32) {
    %c0_i32 = arith.constant 0 : i32
    %c0_i32_0 = arith.constant 0 : i32
    %c0_i32_1 = arith.constant 0 : i32
    return %c0_i32, %c0_i32_0 : i32, i32
  }
  func.func @transform_16(%arg0: i32) -> (i32, i32) {
    %c0_i32 = arith.constant 0 : i32
    %c0_i32_0 = arith.constant 0 : i32
    %c0_i32_1 = arith.constant 0 : i32
    return %c0_i32, %c0_i32_0 : i32, i32
  }
  func.func @transform_17(%arg0: i32) -> (i32, i32) {
    %c0_i32 = arith.constant 0 : i32
    %c0_i32_0 = arith.constant 0 : i32
    %c0_i32_1 = arith.constant 0 : i32
    return %c0_i32, %c0_i32_0 : i32, i32
  }
  func.func @transform_18(%arg0: i32) -> (i32, i32) {
    %c0_i32 = arith.constant 0 : i32
    %c0_i32_0 = arith.constant 0 : i32
    %c0_i32_1 = arith.constant 0 : i32
    return %c0_i32, %c0_i32_0 : i32, i32
  }
  func.func @transform_19(%arg0: i32) -> (i32, i32) {
    %c0_i32 = arith.constant 0 : i32
    %c0_i32_0 = arith.constant 0 : i32
    %c0_i32_1 = arith.constant 0 : i32
    return %c0_i32, %c0_i32_0 : i32, i32
  }
  func.func @transform_20(%arg0: i32) -> (i32, i32) {
    %c0_i32 = arith.constant 0 : i32
    %c0_i32_0 = arith.constant 0 : i32
    %c0_i32_1 = arith.constant 0 : i32
    return %c0_i32, %c0_i32_0 : i32, i32
  }
  func.func @transform_21(%arg0: i32) -> (i32, i32) {
    %c0_i32 = arith.constant 0 : i32
    %c0_i32_0 = arith.constant 0 : i32
    %c0_i32_1 = arith.constant 0 : i32
    return %c0_i32, %c0_i32_0 : i32, i32
  }
  func.func @transform_22(%arg0: i32) -> (i32, i32) {
    %c0_i32 = arith.constant 0 : i32
    %c0_i32_0 = arith.constant 0 : i32
    %c0_i32_1 = arith.constant 0 : i32
    return %c0_i32, %c0_i32_0 : i32, i32
  }
  func.func @transform_23(%arg0: i32) -> (i32, i32) {
    %c0_i32 = arith.constant 0 : i32
    %c0_i32_0 = arith.constant 0 : i32
    %c0_i32_1 = arith.constant 0 : i32
    return %c0_i32, %c0_i32_0 : i32, i32
  }
  func.func @transform_24(%arg0: i32) -> (i32, i32) {
    %c0_i32 = arith.constant 0 : i32
    %c0_i32_0 = arith.constant 0 : i32
    %c0_i32_1 = arith.constant 0 : i32
    return %c0_i32, %c0_i32_0 : i32, i32
  }
  func.func @transform_25(%arg0: i32) -> (i32, i32) {
    %c0_i32 = arith.constant 0 : i32
    %c0_i32_0 = arith.constant 0 : i32
    %c0_i32_1 = arith.constant 0 : i32
    return %c0_i32, %c0_i32_0 : i32, i32
  }
  func.func @transform_26(%arg0: i32) -> (i32, i32) {
    %c0_i32 = arith.constant 0 : i32
    %c0_i32_0 = arith.constant 0 : i32
    return %c0_i32, %arg0 : i32, i32
  }
  func.func @transform_27(%arg0: i32) -> (i32, i32, i32) {
    %c0_i32 = arith.constant 0 : i32
    %c0_i32_0 = arith.constant 0 : i32
    %c0_i32_1 = arith.constant 0 : i32
    return %c0_i32, %c0_i32_0, %arg0 : i32, i32, i32
  }
}

</mosaic_0001>

<llo_original>
// kernel: tpu_custom_call.1
$region0: #{tpu_custom_call.1}
  #allocation0 [shape = 'u32[]', space=smem, size = 0x4, offset = 0x4, fixed_abs, tag = 'smem constant byte address 0x4 - core index']
  #allocation1 [shape = 'u32[144,128]{1,0:T(1,128)}', space=vmem, size = 0x12000, scoped, tag = 'internal scratch']
  %s0 = inlined_call_operand.vmem [shape: f32[32,384], index: 0, kind: input, shape index: {}]
  %s1 = inlined_call_operand.hbm [shape: f32[3,8,384], index: 1, kind: input, shape index: {}]
  %s2 = inlined_call_operand.hbm [shape: f32[16,384], index: 2, kind: input, shape index: {}]
  %s3 = inlined_call_operand.hbm [shape: f32[3,8,384], index: 3, kind: input, shape index: {}]
  %s4 = inlined_call_operand.hbm [shape: bf16[8,8], index: 4, kind: input, shape index: {}]
  %s5 = inlined_call_operand.vmem [shape: bf16[32,40], index: 5, kind: input, shape index: {}]
  %s6 = inlined_call_operand.hbm [shape: bf16[8,32], index: 6, kind: input, shape index: {}]
  %s7 = inlined_call_operand.vmem [shape: f32[8,1], index: 7, kind: input, shape index: {}]
  %s8 = inlined_call_operand.hbm [shape: bf16[8,8], index: 8, kind: input, shape index: {}]
  %s9 = inlined_call_operand.vmem [shape: bf16[8,8], index: 9, kind: input, shape index: {}]
  %s10 = inlined_call_operand.vmem [shape: bf16[16,24], index: 10, kind: input, shape index: {}]
  %s11 = inlined_call_operand.vmem [shape: bf16[8,16], index: 11, kind: input, shape index: {}]
  %s12 = inlined_call_operand.vmem [shape: f32[8,1], index: 12, kind: input, shape index: {}]
  %s13 = inlined_call_operand.vmem [shape: bf16[8,8], index: 13, kind: input, shape index: {}]
  %s14 = inlined_call_operand.vmem [shape: bf16[8,8], index: 14, kind: input, shape index: {}]
  %s15 = inlined_call_operand.vmem [shape: bf16[40,16], index: 15, kind: input, shape index: {}]
  %s16 = inlined_call_operand.vmem [shape: f32[40,1], index: 16, kind: input, shape index: {}]
  %s17 = inlined_call_operand.vmem [shape: bf16[8,32], index: 17, kind: input, shape index: {}]
  %s18 = inlined_call_operand.vmem [shape: f32[8,1], index: 18, kind: input, shape index: {}]
  %s19 = inlined_call_operand.vmem [shape: bf16[8,8], index: 19, kind: input, shape index: {}]
  %s20 = inlined_call_operand.vmem [shape: f32[8,1], index: 20, kind: input, shape index: {}]
  %s21 = inlined_call_operand.vmem [shape: bf16[8,8], index: 21, kind: input, shape index: {}]
  %s22 = inlined_call_operand.vmem [shape: bf16[32,40], index: 22, kind: input, shape index: {}]
  %s23 = inlined_call_operand.vmem [shape: bf16[8,32], index: 23, kind: input, shape index: {}]
  %s24 = inlined_call_operand.vmem [shape: f32[8,1], index: 24, kind: input, shape index: {}]
  %s25 = inlined_call_operand.vmem [shape: bf16[8,8], index: 25, kind: input, shape index: {}]
  %s26 = inlined_call_operand.hbm [shape: f32[32,384], index: 26, kind: output, shape index: {0}]
  %s27 = inlined_call_operand.hbm [shape: f32[3,8,384], index: 27, kind: output, shape index: {1}]
  %28 = xla_tuple %s26, %s27
  %s29 = sld [smem:[#allocation0]]
  $region207: #{tpu_custom_call.1} parent=0
    _
  %s31 = ssub.s32 1, %s29
  %s32 = scalar_select 0, %s31, %s29
  $region1: #{tpu_custom_call.1} parent=0
    #allocation2 [shape = 'u8[32768]{0}', space=vmem, size = 0x8000, scoped, tag = 'input window, operand 0']
    #allocation3 [shape = 'u8[24576]{0}', space=vmem, size = 0x6000, scoped, tag = 'input window, operand 1']
    #allocation4 [shape = 's32[2]{0}', space=sflag, size = 0x8, scoped, tag = 'scoped memory for tpu_custom_call.1']
    #allocation5 [shape = 's32[2]{0}', space=sflag, size = 0x8, scoped, tag = 'scoped memory for tpu_custom_call.1']
    #allocation6 [shape = 'u8[16384]{0}', space=vmem, size = 0x4000, scoped, tag = 'input window, operand 2']
    #allocation7 [shape = 's32[2]{0}', space=sflag, size = 0x8, scoped, tag = 'scoped memory for tpu_custom_call.1']
    #allocation8 [shape = 'u8[24576]{0}', space=vmem, size = 0x6000, scoped, tag = 'input window, operand 3']
    #allocation9 [shape = 'u8[2048]{0}', space=vmem, size = 0x800, scoped, tag = 'input window, operand 4, single buffered']
    #allocation10 [shape = 's32[1]{0}', space=sflag, size = 0x4, scoped, tag = 'scoped memory for tpu_custom_call.1']
    #allocation11 [shape = 'u8[2048]{0}', space=vmem, size = 0x800, scoped, tag = 'input window, operand 6, single buffered']
    #allocation12 [shape = 'u8[2048]{0}', space=vmem, size = 0x800, scoped, tag = 'input window, operand 8, single buffered']
    #allocation13 [shape = 's32[1]{0}', space=sflag, size = 0x4, scoped, tag = 'scoped memory for tpu_custom_call.1']
    #allocation14 [shape = 'u8[32768]{0}', space=vmem, size = 0x8000, scoped, tag = 'output window, operand 0']
    #allocation15 [shape = 'u8[24576]{0}', space=vmem, size = 0x6000, scoped, tag = 'output window, operand 1']
    #allocation16 [shape = 's32[2]{0}', space=sflag, size = 0x8, scoped, tag = 'scoped memory for tpu_custom_call.1']
    %33 = vsyncpa [#allocation4], 0
    %s34 = scalar_lea.sflag [#allocation4], 1
    %35 = vsyncpa %s34, 0
    %36 = vsyncpa [#allocation7], 0
    %s37 = scalar_lea.sflag [#allocation7], 1
    %38 = vsyncpa %s37, 0
    %39 = vsyncpa [#allocation10], 0
    %40 = vsyncpa [#allocation13], 0
    %41 = vsyncpa [#allocation5], 0
    %s42 = scalar_lea.sflag [#allocation5], 1
    %43 = vsyncpa %s42, 0
    %44 = vsyncpa [#allocation16], 0
    %s45 = scalar_lea.sflag [#allocation16], 1
    %46 = vsyncpa %s45, 0
    loop: start=0, step=1, limit=5
    $region2: #{tpu_custom_call.1} parent=1 // loop_pre_header
      _
    $region3: #{tpu_custom_call.1} parent=1 // loop_header
      %s48 = sphi 0, %s52
      %p49 = scmp.ge.s32.totalorder %s48, 5
      %s58 = sphi 0, %s60
      %s61 = sphi 0, %s58
      %s62 = sphi 0, %s61
      %s78 = sphi 0, %s62
      %s84 = sphi 0, %s86
      %s87 = sphi 0, %s84
      %s88 = sphi 0, %s87
      %s104 = sphi 0, %s88
      %s110 = sphi 0, %s112
      %s113 = sphi 0, %s110
      %s114 = sphi 0, %s113
      %s130 = sphi 0, %s114
      %s136 = sphi 0, %s138
      %s139 = sphi 0, %s136
      %s140 = sphi 0, %s139
      %s156 = sphi 0, %s140
      %s160 = sphi 0, %s160
      %s162 = sphi 0, %s160
      %s163 = sphi 0, %s162
      %s177 = sphi 0, %s163
      %s181 = sphi 0, %s181
      %s183 = sphi 0, %s181
      %s184 = sphi 0, %s183
      %s198 = sphi 0, %s184
      %s202 = sphi 0, %s202
      %s204 = sphi 0, %s202
      %s205 = sphi 0, %s204
      %s219 = sphi 0, %s205
      %s223 = sphi 0, %s223
      %s225 = sphi 0, %s223
      %s226 = sphi 0, %s225
      %s240 = sphi 0, %s226
      %s244 = sphi 0, %s244
      %s246 = sphi 0, %s244
      %s247 = sphi 0, %s246
      %s261 = sphi 0, %s247
      %s265 = sphi 0, %s265
      %s267 = sphi 0, %s265
      %s268 = sphi 0, %s267
      %s282 = sphi 0, %s268
      %s286 = sphi 0, %s286
      %s288 = sphi 0, %s286
      %s289 = sphi 0, %s288
      %s303 = sphi 0, %s289
      %s307 = sphi 0, %s307
      %s309 = sphi 0, %s307
      %s310 = sphi 0, %s309
      %s324 = sphi 0, %s310
      %s328 = sphi 0, %s328
      %s330 = sphi 0, %s328
      %s331 = sphi 0, %s330
      %s345 = sphi 0, %s331
      %s349 = sphi 0, %s349
      %s351 = sphi 0, %s349
      %s352 = sphi 0, %s351
      %s366 = sphi 0, %s352
      %s370 = sphi 0, %s370
      %s372 = sphi 0, %s370
      %s373 = sphi 0, %s372
      %s387 = sphi 0, %s373
      %s391 = sphi 0, %s391
      %s393 = sphi 0, %s391
      %s394 = sphi 0, %s393
      %s408 = sphi 0, %s394
      %s412 = sphi 0, %s412
      %s414 = sphi 0, %s412
      %s415 = sphi 0, %s414
      %s429 = sphi 0, %s415
      %s433 = sphi 0, %s433
      %s435 = sphi 0, %s433
      %s436 = sphi 0, %s435
      %s450 = sphi 0, %s436
      %s454 = sphi 0, %s454
      %s456 = sphi 0, %s454
      %s457 = sphi 0, %s456
      %s471 = sphi 0, %s457
      %s475 = sphi 0, %s475
      %s477 = sphi 0, %s475
      %s478 = sphi 0, %s477
      %s492 = sphi 0, %s478
      %s496 = sphi 0, %s496
      %s498 = sphi 0, %s496
      %s499 = sphi 0, %s498
      %s513 = sphi 0, %s499
      %s517 = sphi 0, %s517
      %s519 = sphi 0, %s517
      %s520 = sphi 0, %s519
      %s534 = sphi 0, %s520
      %s538 = sphi 0, %s538
      %s540 = sphi 0, %s538
      %s541 = sphi 0, %s540
      %s555 = sphi 0, %s541
      %s559 = sphi 0, %s559
      %s561 = sphi 0, %s559
      %s562 = sphi 0, %s561
      %s576 = sphi 0, %s562
      %s580 = sphi 0, %s580
      %s582 = sphi 0, %s580
      %s583 = sphi 0, %s582
      %s597 = sphi 0, %s583
      %s601 = sphi 0, %s601
      %s603 = sphi 0, %s601
      %s604 = sphi 0, %s603
      %s618 = sphi 0, %s604
      %s624 = sphi 0, %s626
      %s627 = sphi 0, %s624
      %s628 = sphi 0, %s627
      %s644 = sphi 0, %s628
      %s650 = sphi 0, %s652
      %s653 = sphi 0, %s650
      %s654 = sphi 0, %s653
      %s670 = sphi 0, %s654
    $region4: #{tpu_custom_call.1} parent=1 // loop_header_branch
      %51 = sbr.rel (%p49) target = $region8
    $region5: #{tpu_custom_call.1} parent=1 // loop_body
      %s53 = ssub.s32 %s48, 1
      %s54 = ssub.s32 %s48, 2
      %s55 = sadd.s32 %s48, 1
      %s56 = ssub.s32 %s48, %s55
      %p57 = scmp.eq.s32.totalorder %s56, 0
      %s59 = sadd.s32 %s58, 1
      %s60 = scalar_select %p57, %s58, %s59
      %p63 = pneg %p57
      %p64 = scmp.eq.s32.totalorder %s48, 2
      %p65 = por %p63, %p64
      %p66 = scmp.ne.s32.totalorder %s58, %s61
      %p67 = scmp.eq.s32.totalorder %s48, 0
      %p68 = por %p66, %p67
      %p69 = scmp.ne.s32.totalorder %s58, %s61
      %p70 = scmp.eq.s32.totalorder %s53, 2
      %p71 = por %p69, %p70
      %p72 = scmp.ne.s32.totalorder %s61, %s62
      %p73 = scmp.eq.s32.totalorder %s53, 0
      %p74 = por %p72, %p73
      %p75 = scmp.ne.s32.totalorder %s61, %s62
      %p76 = scmp.eq.s32.totalorder %s54, 2
      %p77 = por %p75, %p76
      %p79 = scmp.ne.s32.totalorder %s62, %s78
      %p80 = scmp.eq.s32.totalorder %s54, 0
      %p81 = por %p79, %p80
      %s82 = ssub.s32 %s48, %s55
      %p83 = scmp.eq.s32.totalorder %s82, 0
      %s85 = sadd.s32 %s84, 1
      %s86 = scalar_select %p83, %s84, %s85
      %p89 = pneg %p83
      %p90 = scmp.eq.s32.totalorder %s48, 2
      %p91 = por %p89, %p90
      %p92 = scmp.ne.s32.totalorder %s84, %s87
      %p93 = scmp.eq.s32.totalorder %s48, 0
      %p94 = por %p92, %p93
      %p95 = scmp.ne.s32.totalorder %s84, %s87
      %p96 = scmp.eq.s32.totalorder %s53, 2
      %p97 = por %p95, %p96
      %p98 = scmp.ne.s32.totalorder %s87, %s88
      %p99 = scmp.eq.s32.totalorder %s53, 0
      %p100 = por %p98, %p99
      %p101 = scmp.ne.s32.totalorder %s87, %s88
      %p102 = scmp.eq.s32.totalorder %s54, 2
      %p103 = por %p101, %p102
      %p105 = scmp.ne.s32.totalorder %s88, %s104
      %p106 = scmp.eq.s32.totalorder %s54, 0
      %p107 = por %p105, %p106
      %s108 = ssub.s32 %s48, %s55
      %p109 = scmp.eq.s32.totalorder %s108, 0
      %s111 = sadd.s32 %s110, 1
      %s112 = scalar_select %p109, %s110, %s111
      %p115 = pneg %p109
      %p116 = scmp.eq.s32.totalorder %s48, 2
      %p117 = por %p115, %p116
      %p118 = scmp.ne.s32.totalorder %s110, %s113
      %p119 = scmp.eq.s32.totalorder %s48, 0
      %p120 = por %p118, %p119
      %p121 = scmp.ne.s32.totalorder %s110, %s113
      %p122 = scmp.eq.s32.totalorder %s53, 2
      %p123 = por %p121, %p122
      %p124 = scmp.ne.s32.totalorder %s113, %s114
      %p125 = scmp.eq.s32.totalorder %s53, 0
      %p126 = por %p124, %p125
      %p127 = scmp.ne.s32.totalorder %s113, %s114
      %p128 = scmp.eq.s32.totalorder %s54, 2
      %p129 = por %p127, %p128
      %p131 = scmp.ne.s32.totalorder %s114, %s130
      %p132 = scmp.eq.s32.totalorder %s54, 0
      %p133 = por %p131, %p132
      %s134 = ssub.s32 %s48, %s55
      %p135 = scmp.eq.s32.totalorder %s134, 0
      %s137 = sadd.s32 %s136, 1
      %s138 = scalar_select %p135, %s136, %s137
      %p141 = pneg %p135
      %p142 = scmp.eq.s32.totalorder %s48, 2
      %p143 = por %p141, %p142
      %p144 = scmp.ne.s32.totalorder %s136, %s139
      %p145 = scmp.eq.s32.totalorder %s48, 0
      %p146 = por %p144, %p145
      %p147 = scmp.ne.s32.totalorder %s136, %s139
      %p148 = scmp.eq.s32.totalorder %s53, 2
      %p149 = por %p147, %p148
      %p150 = scmp.ne.s32.totalorder %s139, %s140
      %p151 = scmp.eq.s32.totalorder %s53, 0
      %p152 = por %p150, %p151
      %p153 = scmp.ne.s32.totalorder %s139, %s140
      %p154 = scmp.eq.s32.totalorder %s54, 2
      %p155 = por %p153, %p154
      %p157 = scmp.ne.s32.totalorder %s140, %s156
      %p158 = scmp.eq.s32.totalorder %s54, 0
      %p159 = por %p157, %p158
      %s161 = sadd.s32 %s160, 1
      %p164 = scmp.eq.s32.totalorder %s48, 2
      %p165 = scmp.ne.s32.totalorder %s160, %s162
      %p166 = scmp.eq.s32.totalorder %s48, 0
      %p167 = por %p165, %p166
      %p168 = scmp.ne.s32.totalorder %s160, %s162
      %p169 = scmp.eq.s32.totalorder %s53, 2
      %p170 = por %p168, %p169
      %p171 = scmp.ne.s32.totalorder %s162, %s163
      %p172 = scmp.eq.s32.totalorder %s53, 0
      %p173 = por %p171, %p172
      %p174 = scmp.ne.s32.totalorder %s162, %s163
      %p175 = scmp.eq.s32.totalorder %s54, 2
      %p176 = por %p174, %p175
      %p178 = scmp.ne.s32.totalorder %s163, %s177
      %p179 = scmp.eq.s32.totalorder %s54, 0
      %p180 = por %p178, %p179
      %s182 = sadd.s32 %s181, 1
      %p185 = scmp.eq.s32.totalorder %s48, 2
      %p186 = scmp.ne.s32.totalorder %s181, %s183
      %p187 = scmp.eq.s32.totalorder %s48, 0
      %p188 = por %p186, %p187
      %p189 = scmp.ne.s32.totalorder %s181, %s183
      %p190 = scmp.eq.s32.totalorder %s53, 2
      %p191 = por %p189, %p190
      %p192 = scmp.ne.s32.totalorder %s183, %s184
      %p193 = scmp.eq.s32.totalorder %s53, 0
      %p194 = por %p192, %p193
      %p195 = scmp.ne.s32.totalorder %s183, %s184
      %p196 = scmp.eq.s32.totalorder %s54, 2
      %p197 = por %p195, %p196
      %p199 = scmp.ne.s32.totalorder %s184, %s198
      %p200 = scmp.eq.s32.totalorder %s54, 0
      %p201 = por %p199, %p200
      %s203 = sadd.s32 %s202, 1
      %p206 = scmp.eq.s32.totalorder %s48, 2
      %p207 = scmp.ne.s32.totalorder %s202, %s204
      %p208 = scmp.eq.s32.totalorder %s48, 0
      %p209 = por %p207, %p208
      %p210 = scmp.ne.s32.totalorder %s202, %s204
      %p211 = scmp.eq.s32.totalorder %s53, 2
      %p212 = por %p210, %p211
      %p213 = scmp.ne.s32.totalorder %s204, %s205
      %p214 = scmp.eq.s32.totalorder %s53, 0
      %p215 = por %p213, %p214
      %p216 = scmp.ne.s32.totalorder %s204, %s205
      %p217 = scmp.eq.s32.totalorder %s54, 2
      %p218 = por %p216, %p217
      %p220 = scmp.ne.s32.totalorder %s205, %s219
      %p221 = scmp.eq.s32.totalorder %s54, 0
      %p222 = por %p220, %p221
      %s224 = sadd.s32 %s223, 1
      %p227 = scmp.eq.s32.totalorder %s48, 2
      %p228 = scmp.ne.s32.totalorder %s223, %s225
      %p229 = scmp.eq.s32.totalorder %s48, 0
      %p230 = por %p228, %p229
      %p231 = scmp.ne.s32.totalorder %s223, %s225
      %p232 = scmp.eq.s32.totalorder %s53, 2
      %p233 = por %p231, %p232
      %p234 = scmp.ne.s32.totalorder %s225, %s226
      %p235 = scmp.eq.s32.totalorder %s53, 0
      %p236 = por %p234, %p235
      %p237 = scmp.ne.s32.totalorder %s225, %s226
      %p238 = scmp.eq.s32.totalorder %s54, 2
      %p239 = por %p237, %p238
      %p241 = scmp.ne.s32.totalorder %s226, %s240
      %p242 = scmp.eq.s32.totalorder %s54, 0
      %p243 = por %p241, %p242
      %s245 = sadd.s32 %s244, 1
      %p248 = scmp.eq.s32.totalorder %s48, 2
      %p249 = scmp.ne.s32.totalorder %s244, %s246
      %p250 = scmp.eq.s32.totalorder %s48, 0
      %p251 = por %p249, %p250
      %p252 = scmp.ne.s32.totalorder %s244, %s246
      %p253 = scmp.eq.s32.totalorder %s53, 2
      %p254 = por %p252, %p253
      %p255 = scmp.ne.s32.totalorder %s246, %s247
      %p256 = scmp.eq.s32.totalorder %s53, 0
      %p257 = por %p255, %p256
      %p258 = scmp.ne.s32.totalorder %s246, %s247
      %p259 = scmp.eq.s32.totalorder %s54, 2
      %p260 = por %p258, %p259
      %p262 = scmp.ne.s32.totalorder %s247, %s261
      %p263 = scmp.eq.s32.totalorder %s54, 0
      %p264 = por %p262, %p263
      %s266 = sadd.s32 %s265, 1
      %p269 = scmp.eq.s32.totalorder %s48, 2
      %p270 = scmp.ne.s32.totalorder %s265, %s267
      %p271 = scmp.eq.s32.totalorder %s48, 0
      %p272 = por %p270, %p271
      %p273 = scmp.ne.s32.totalorder %s265, %s267
      %p274 = scmp.eq.s32.totalorder %s53, 2
      %p275 = por %p273, %p274
      %p276 = scmp.ne.s32.totalorder %s267, %s268
      %p277 = scmp.eq.s32.totalorder %s53, 0
      %p278 = por %p276, %p277
      %p279 = scmp.ne.s32.totalorder %s267, %s268
      %p280 = scmp.eq.s32.totalorder %s54, 2
      %p281 = por %p279, %p280
      %p283 = scmp.ne.s32.totalorder %s268, %s282
      %p284 = scmp.eq.s32.totalorder %s54, 0
      %p285 = por %p283, %p284
      %s287 = sadd.s32 %s286, 1
      %p290 = scmp.eq.s32.totalorder %s48, 2
      %p291 = scmp.ne.s32.totalorder %s286, %s288
      %p292 = scmp.eq.s32.totalorder %s48, 0
      %p293 = por %p291, %p292
      %p294 = scmp.ne.s32.totalorder %s286, %s288
      %p295 = scmp.eq.s32.totalorder %s53, 2
      %p296 = por %p294, %p295
      %p297 = scmp.ne.s32.totalorder %s288, %s289
      %p298 = scmp.eq.s32.totalorder %s53, 0
      %p299 = por %p297, %p298
      %p300 = scmp.ne.s32.totalorder %s288, %s289
      %p301 = scmp.eq.s32.totalorder %s54, 2
      %p302 = por %p300, %p301
      %p304 = scmp.ne.s32.totalorder %s289, %s303
      %p305 = scmp.eq.s32.totalorder %s54, 0
      %p306 = por %p304, %p305
      %s308 = sadd.s32 %s307, 1
      %p311 = scmp.eq.s32.totalorder %s48, 2
      %p312 = scmp.ne.s32.totalorder %s307, %s309
      %p313 = scmp.eq.s32.totalorder %s48, 0
      %p314 = por %p312, %p313
      %p315 = scmp.ne.s32.totalorder %s307, %s309
      %p316 = scmp.eq.s32.totalorder %s53, 2
      %p317 = por %p315, %p316
      %p318 = scmp.ne.s32.totalorder %s309, %s310
      %p319 = scmp.eq.s32.totalorder %s53, 0
      %p320 = por %p318, %p319
      %p321 = scmp.ne.s32.totalorder %s309, %s310
      %p322 = scmp.eq.s32.totalorder %s54, 2
      %p323 = por %p321, %p322
      %p325 = scmp.ne.s32.totalorder %s310, %s324
      %p326 = scmp.eq.s32.totalorder %s54, 0
      %p327 = por %p325, %p326
      %s329 = sadd.s32 %s328, 1
      %p332 = scmp.eq.s32.totalorder %s48, 2
      %p333 = scmp.ne.s32.totalorder %s328, %s330
      %p334 = scmp.eq.s32.totalorder %s48, 0
      %p335 = por %p333, %p334
      %p336 = scmp.ne.s32.totalorder %s328, %s330
      %p337 = scmp.eq.s32.totalorder %s53, 2
      %p338 = por %p336, %p337
      %p339 = scmp.ne.s32.totalorder %s330, %s331
      %p340 = scmp.eq.s32.totalorder %s53, 0
      %p341 = por %p339, %p340
      %p342 = scmp.ne.s32.totalorder %s330, %s331
      %p343 = scmp.eq.s32.totalorder %s54, 2
      %p344 = por %p342, %p343
      %p346 = scmp.ne.s32.totalorder %s331, %s345
      %p347 = scmp.eq.s32.totalorder %s54, 0
      %p348 = por %p346, %p347
      %s350 = sadd.s32 %s349, 1
      %p353 = scmp.eq.s32.totalorder %s48, 2
      %p354 = scmp.ne.s32.totalorder %s349, %s351
      %p355 = scmp.eq.s32.totalorder %s48, 0
      %p356 = por %p354, %p355
      %p357 = scmp.ne.s32.totalorder %s349, %s351
      %p358 = scmp.eq.s32.totalorder %s53, 2
      %p359 = por %p357, %p358
      %p360 = scmp.ne.s32.totalorder %s351, %s352
      %p361 = scmp.eq.s32.totalorder %s53, 0
      %p362 = por %p360, %p361
      %p363 = scmp.ne.s32.totalorder %s351, %s352
      %p364 = scmp.eq.s32.totalorder %s54, 2
      %p365 = por %p363, %p364
      %p367 = scmp.ne.s32.totalorder %s352, %s366
      %p368 = scmp.eq.s32.totalorder %s54, 0
      %p369 = por %p367, %p368
      %s371 = sadd.s32 %s370, 1
      %p374 = scmp.eq.s32.totalorder %s48, 2
      %p375 = scmp.ne.s32.totalorder %s370, %s372
      %p376 = scmp.eq.s32.totalorder %s48, 0
      %p377 = por %p375, %p376
      %p378 = scmp.ne.s32.totalorder %s370, %s372
      %p379 = scmp.eq.s32.totalorder %s53, 2
      %p380 = por %p378, %p379
      %p381 = scmp.ne.s32.totalorder %s372, %s373
      %p382 = scmp.eq.s32.totalorder %s53, 0
      %p383 = por %p381, %p382
      %p384 = scmp.ne.s32.totalorder %s372, %s373
      %p385 = scmp.eq.s32.totalorder %s54, 2
      %p386 = por %p384, %p385
      %p388 = scmp.ne.s32.totalorder %s373, %s387
      %p389 = scmp.eq.s32.totalorder %s54, 0
      %p390 = por %p388, %p389
      %s392 = sadd.s32 %s391, 1
      %p395 = scmp.eq.s32.totalorder %s48, 2
      %p396 = scmp.ne.s32.totalorder %s391, %s393
      %p397 = scmp.eq.s32.totalorder %s48, 0
      %p398 = por %p396, %p397
      %p399 = scmp.ne.s32.totalorder %s391, %s393
      %p400 = scmp.eq.s32.totalorder %s53, 2
      %p401 = por %p399, %p400
      %p402 = scmp.ne.s32.totalorder %s393, %s394
      %p403 = scmp.eq.s32.totalorder %s53, 0
      %p404 = por %p402, %p403
      %p405 = scmp.ne.s32.totalorder %s393, %s394
      %p406 = scmp.eq.s32.totalorder %s54, 2
      %p407 = por %p405, %p406
      %p409 = scmp.ne.s32.totalorder %s394, %s408
      %p410 = scmp.eq.s32.totalorder %s54, 0
      %p411 = por %p409, %p410
      %s413 = sadd.s32 %s412, 1
      %p416 = scmp.eq.s32.totalorder %s48, 2
      %p417 = scmp.ne.s32.totalorder %s412, %s414
      %p418 = scmp.eq.s32.totalorder %s48, 0
      %p419 = por %p417, %p418
      %p420 = scmp.ne.s32.totalorder %s412, %s414
      %p421 = scmp.eq.s32.totalorder %s53, 2
      %p422 = por %p420, %p421
      %p423 = scmp.ne.s32.totalorder %s414, %s415
      %p424 = scmp.eq.s32.totalorder %s53, 0
      %p425 = por %p423, %p424
      %p426 = scmp.ne.s32.totalorder %s414, %s415
      %p427 = scmp.eq.s32.totalorder %s54, 2
      %p428 = por %p426, %p427
      %p430 = scmp.ne.s32.totalorder %s415, %s429
      %p431 = scmp.eq.s32.totalorder %s54, 0
      %p432 = por %p430, %p431
      %s434 = sadd.s32 %s433, 1
      %p437 = scmp.eq.s32.totalorder %s48, 2
      %p438 = scmp.ne.s32.totalorder %s433, %s435
      %p439 = scmp.eq.s32.totalorder %s48, 0
      %p440 = por %p438, %p439
      %p441 = scmp.ne.s32.totalorder %s433, %s435
      %p442 = scmp.eq.s32.totalorder %s53, 2
      %p443 = por %p441, %p442
      %p444 = scmp.ne.s32.totalorder %s435, %s436
      %p445 = scmp.eq.s32.totalorder %s53, 0
      %p446 = por %p444, %p445
      %p447 = scmp.ne.s32.totalorder %s435, %s436
      %p448 = scmp.eq.s32.totalorder %s54, 2
      %p449 = por %p447, %p448
      %p451 = scmp.ne.s32.totalorder %s436, %s450
      %p452 = scmp.eq.s32.totalorder %s54, 0
      %p453 = por %p451, %p452
      %s455 = sadd.s32 %s454, 1
      %p458 = scmp.eq.s32.totalorder %s48, 2
      %p459 = scmp.ne.s32.totalorder %s454, %s456
      %p460 = scmp.eq.s32.totalorder %s48, 0
      %p461 = por %p459, %p460
      %p462 = scmp.ne.s32.totalorder %s454, %s456
      %p463 = scmp.eq.s32.totalorder %s53, 2
      %p464 = por %p462, %p463
      %p465 = scmp.ne.s32.totalorder %s456, %s457
      %p466 = scmp.eq.s32.totalorder %s53, 0
      %p467 = por %p465, %p466
      %p468 = scmp.ne.s32.totalorder %s456, %s457
      %p469 = scmp.eq.s32.totalorder %s54, 2
      %p470 = por %p468, %p469
      %p472 = scmp.ne.s32.totalorder %s457, %s471
      %p473 = scmp.eq.s32.totalorder %s54, 0
      %p474 = por %p472, %p473
      %s476 = sadd.s32 %s475, 1
      %p479 = scmp.eq.s32.totalorder %s48, 2
      %p480 = scmp.ne.s32.totalorder %s475, %s477
      %p481 = scmp.eq.s32.totalorder %s48, 0
      %p482 = por %p480, %p481
      %p483 = scmp.ne.s32.totalorder %s475, %s477
      %p484 = scmp.eq.s32.totalorder %s53, 2
      %p485 = por %p483, %p484
      %p486 = scmp.ne.s32.totalorder %s477, %s478
      %p487 = scmp.eq.s32.totalorder %s53, 0
      %p488 = por %p486, %p487
      %p489 = scmp.ne.s32.totalorder %s477, %s478
      %p490 = scmp.eq.s32.totalorder %s54, 2
      %p491 = por %p489, %p490
      %p493 = scmp.ne.s32.totalorder %s478, %s492
      %p494 = scmp.eq.s32.totalorder %s54, 0
      %p495 = por %p493, %p494
      %s497 = sadd.s32 %s496, 1
      %p500 = scmp.eq.s32.totalorder %s48, 2
      %p501 = scmp.ne.s32.totalorder %s496, %s498
      %p502 = scmp.eq.s32.totalorder %s48, 0
      %p503 = por %p501, %p502
      %p504 = scmp.ne.s32.totalorder %s496, %s498
      %p505 = scmp.eq.s32.totalorder %s53, 2
      %p506 = por %p504, %p505
      %p507 = scmp.ne.s32.totalorder %s498, %s499
      %p508 = scmp.eq.s32.totalorder %s53, 0
      %p509 = por %p507, %p508
      %p510 = scmp.ne.s32.totalorder %s498, %s499
      %p511 = scmp.eq.s32.totalorder %s54, 2
      %p512 = por %p510, %p511
      %p514 = scmp.ne.s32.totalorder %s499, %s513
      %p515 = scmp.eq.s32.totalorder %s54, 0
      %p516 = por %p514, %p515
      %s518 = sadd.s32 %s517, 1
      %p521 = scmp.eq.s32.totalorder %s48, 2
      %p522 = scmp.ne.s32.totalorder %s517, %s519
      %p523 = scmp.eq.s32.totalorder %s48, 0
      %p524 = por %p522, %p523
      %p525 = scmp.ne.s32.totalorder %s517, %s519
      %p526 = scmp.eq.s32.totalorder %s53, 2
      %p527 = por %p525, %p526
      %p528 = scmp.ne.s32.totalorder %s519, %s520
      %p529 = scmp.eq.s32.totalorder %s53, 0
      %p530 = por %p528, %p529
      %p531 = scmp.ne.s32.totalorder %s519, %s520
      %p532 = scmp.eq.s32.totalorder %s54, 2
      %p533 = por %p531, %p532
      %p535 = scmp.ne.s32.totalorder %s520, %s534
      %p536 = scmp.eq.s32.totalorder %s54, 0
      %p537 = por %p535, %p536
      %s539 = sadd.s32 %s538, 1
      %p542 = scmp.eq.s32.totalorder %s48, 2
      %p543 = scmp.ne.s32.totalorder %s538, %s540
      %p544 = scmp.eq.s32.totalorder %s48, 0
      %p545 = por %p543, %p544
      %p546 = scmp.ne.s32.totalorder %s538, %s540
      %p547 = scmp.eq.s32.totalorder %s53, 2
      %p548 = por %p546, %p547
      %p549 = scmp.ne.s32.totalorder %s540, %s541
      %p550 = scmp.eq.s32.totalorder %s53, 0
      %p551 = por %p549, %p550
      %p552 = scmp.ne.s32.totalorder %s540, %s541
      %p553 = scmp.eq.s32.totalorder %s54, 2
      %p554 = por %p552, %p553
      %p556 = scmp.ne.s32.totalorder %s541, %s555
      %p557 = scmp.eq.s32.totalorder %s54, 0
      %p558 = por %p556, %p557
      %s560 = sadd.s32 %s559, 1
      %p563 = scmp.eq.s32.totalorder %s48, 2
      %p564 = scmp.ne.s32.totalorder %s559, %s561
      %p565 = scmp.eq.s32.totalorder %s48, 0
      %p566 = por %p564, %p565
      %p567 = scmp.ne.s32.totalorder %s559, %s561
      %p568 = scmp.eq.s32.totalorder %s53, 2
      %p569 = por %p567, %p568
      %p570 = scmp.ne.s32.totalorder %s561, %s562
      %p571 = scmp.eq.s32.totalorder %s53, 0
      %p572 = por %p570, %p571
      %p573 = scmp.ne.s32.totalorder %s561, %s562
      %p574 = scmp.eq.s32.totalorder %s54, 2
      %p575 = por %p573, %p574
      %p577 = scmp.ne.s32.totalorder %s562, %s576
      %p578 = scmp.eq.s32.totalorder %s54, 0
      %p579 = por %p577, %p578
      %s581 = sadd.s32 %s580, 1
      %p584 = scmp.eq.s32.totalorder %s48, 2
      %p585 = scmp.ne.s32.totalorder %s580, %s582
      %p586 = scmp.eq.s32.totalorder %s48, 0
      %p587 = por %p585, %p586
      %p588 = scmp.ne.s32.totalorder %s580, %s582
      %p589 = scmp.eq.s32.totalorder %s53, 2
      %p590 = por %p588, %p589
      %p591 = scmp.ne.s32.totalorder %s582, %s583
      %p592 = scmp.eq.s32.totalorder %s53, 0
      %p593 = por %p591, %p592
      %p594 = scmp.ne.s32.totalorder %s582, %s583
      %p595 = scmp.eq.s32.totalorder %s54, 2
      %p596 = por %p594, %p595
      %p598 = scmp.ne.s32.totalorder %s583, %s597
      %p599 = scmp.eq.s32.totalorder %s54, 0
      %p600 = por %p598, %p599
      %s602 = sadd.s32 %s601, 1
      %p605 = scmp.eq.s32.totalorder %s48, 2
      %p606 = scmp.ne.s32.totalorder %s601, %s603
      %p607 = scmp.eq.s32.totalorder %s48, 0
      %p608 = por %p606, %p607
      %p609 = scmp.ne.s32.totalorder %s601, %s603
      %p610 = scmp.eq.s32.totalorder %s53, 2
      %p611 = por %p609, %p610
      %p612 = scmp.ne.s32.totalorder %s603, %s604
      %p613 = scmp.eq.s32.totalorder %s53, 0
      %p614 = por %p612, %p613
      %p615 = scmp.ne.s32.totalorder %s603, %s604
      %p616 = scmp.eq.s32.totalorder %s54, 2
      %p617 = por %p615, %p616
      %p619 = scmp.ne.s32.totalorder %s604, %s618
      %p620 = scmp.eq.s32.totalorder %s54, 0
      %p621 = por %p619, %p620
      %s622 = ssub.s32 %s48, %s55
      %p623 = scmp.eq.s32.totalorder %s622, 0
      %s625 = sadd.s32 %s624, 1
      %s626 = scalar_select %p623, %s624, %s625
      %p629 = pneg %p623
      %p630 = scmp.eq.s32.totalorder %s48, 2
      %p631 = por %p629, %p630
      %p632 = scmp.ne.s32.totalorder %s624, %s627
      %p633 = scmp.eq.s32.totalorder %s48, 0
      %p634 = por %p632, %p633
      %p635 = scmp.ne.s32.totalorder %s624, %s627
      %p636 = scmp.eq.s32.totalorder %s53, 2
      %p637 = por %p635, %p636
      %p638 = scmp.ne.s32.totalorder %s627, %s628
      %p639 = scmp.eq.s32.totalorder %s53, 0
      %p640 = por %p638, %p639
      %p641 = scmp.ne.s32.totalorder %s627, %s628
      %p642 = scmp.eq.s32.totalorder %s54, 2
      %p643 = por %p641, %p642
      %p645 = scmp.ne.s32.totalorder %s628, %s644
      %p646 = scmp.eq.s32.totalorder %s54, 0
      %p647 = por %p645, %p646
      %s648 = ssub.s32 %s48, %s55
      %p649 = scmp.eq.s32.totalorder %s648, 0
      %s651 = sadd.s32 %s650, 1
      %s652 = scalar_select %p649, %s650, %s651
      %p655 = pneg %p649
      %p656 = scmp.eq.s32.totalorder %s48, 2
      %p657 = por %p655, %p656
      %p658 = scmp.ne.s32.totalorder %s650, %s653
      %p659 = scmp.eq.s32.totalorder %s48, 0
      %p660 = por %p658, %p659
      %p661 = scmp.ne.s32.totalorder %s650, %s653
      %p662 = scmp.eq.s32.totalorder %s53, 2
      %p663 = por %p661, %p662
      %p664 = scmp.ne.s32.totalorder %s653, %s654
      %p665 = scmp.eq.s32.totalorder %s53, 0
      %p666 = por %p664, %p665
      %p667 = scmp.ne.s32.totalorder %s653, %s654
      %p668 = scmp.eq.s32.totalorder %s54, 2
      %p669 = por %p667, %p668
      %p671 = scmp.ne.s32.totalorder %s654, %s670
      %p672 = scmp.eq.s32.totalorder %s54, 0
      %p673 = por %p671, %p672
      %p674 = scmp.le.s32.totalorder 1, %s48
      %p675 = scmp.lt.s32.totalorder %s48, 4
      %p676 = pnand %p674, %p675
      %p677 = pneg %p676
      // Predicated region
      $region9: #{tpu_custom_call.1} parent=5 // pred_check
        _
      $region10: #{tpu_custom_call.1} parent=5 // pred_check_branch
        %679 = sbr.rel (%p676) target = $region12
      $region11: #{tpu_custom_call.1} parent=5 // pred_region
        %s680 = ssub.s32 %s48, 1
        // Predicated region
        $region13: #{tpu_custom_call.1} parent=11 // pred_check
          %p681 = pneg %p173
        $region14: #{tpu_custom_call.1} parent=11 // pred_check_branch
          %683 = sbr.rel (%p681) target = $region16
        $region15: #{tpu_custom_call.1} parent=11 // pred_region
          %s685 = ssub.s32 64, 64
          %686 = vsyncadd [#allocation10], %s685
          %s688 = sshll.u32 [#allocation9], 4
          %s689 = int_to_ptr.vmem [resolvable:$true] %s688
          %691 = dma.hbm_to_vmem [thread:$0]  %s4, 64, %s689, [#allocation10]
        $region16: #{tpu_custom_call.1} parent=11 // pred_fallthru
          _
        // Predicated region
        $region17: #{tpu_custom_call.1} parent=11 // pred_check
          %p692 = pneg %p194
        $region18: #{tpu_custom_call.1} parent=11 // pred_check_branch
          %694 = sbr.rel (%p692) target = $region20
        $region19: #{tpu_custom_call.1} parent=11 // pred_region
          _
        $region20: #{tpu_custom_call.1} parent=11 // pred_fallthru
          _
        // Predicated region
        $region21: #{tpu_custom_call.1} parent=11 // pred_check
          %p695 = pneg %p215
        $region22: #{tpu_custom_call.1} parent=11 // pred_check_branch
          %697 = sbr.rel (%p695) target = $region24
        $region23: #{tpu_custom_call.1} parent=11 // pred_region
          %s699 = ssub.s32 64, 64
          %700 = vsyncadd [#allocation10], %s699
          %s702 = sshll.u32 [#allocation11], 4
          %s703 = int_to_ptr.vmem [resolvable:$true] %s702
          %705 = dma.hbm_to_vmem [thread:$0]  %s6, 64, %s703, [#allocation10]
        $region24: #{tpu_custom_call.1} parent=11 // pred_fallthru
          _
        // Predicated region
        $region25: #{tpu_custom_call.1} parent=11 // pred_check
          %p706 = pneg %p236
        $region26: #{tpu_custom_call.1} parent=11 // pred_check_branch
          %708 = sbr.rel (%p706) target = $region28
        $region27: #{tpu_custom_call.1} parent=11 // pred_region
          _
        $region28: #{tpu_custom_call.1} parent=11 // pred_fallthru
          _
        // Predicated region
        $region29: #{tpu_custom_call.1} parent=11 // pred_check
          %p709 = pneg %p257
        $region30: #{tpu_custom_call.1} parent=11 // pred_check_branch
          %711 = sbr.rel (%p709) target = $region32
        $region31: #{tpu_custom_call.1} parent=11 // pred_region
          %s713 = ssub.s32 64, 64
          %714 = vsyncadd [#allocation13], %s713
          %s716 = sshll.u32 [#allocation12], 4
          %s717 = int_to_ptr.vmem [resolvable:$true] %s716
          %719 = dma.hbm_to_vmem [thread:$0]  %s8, 64, %s717, [#allocation13]
        $region32: #{tpu_custom_call.1} parent=11 // pred_fallthru
          _
        // Predicated region
        $region33: #{tpu_custom_call.1} parent=11 // pred_check
          %p720 = pneg %p278
        $region34: #{tpu_custom_call.1} parent=11 // pred_check_branch
          %722 = sbr.rel (%p720) target = $region36
        $region35: #{tpu_custom_call.1} parent=11 // pred_region
          _
        $region36: #{tpu_custom_call.1} parent=11 // pred_fallthru
          _
        // Predicated region
        $region37: #{tpu_custom_call.1} parent=11 // pred_check
          %p723 = pneg %p299
        $region38: #{tpu_custom_call.1} parent=11 // pred_check_branch
          %725 = sbr.rel (%p723) target = $region40
        $region39: #{tpu_custom_call.1} parent=11 // pred_region
          _
        $region40: #{tpu_custom_call.1} parent=11 // pred_fallthru
          _
        // Predicated region
        $region41: #{tpu_custom_call.1} parent=11 // pred_check
          %p726 = pneg %p320
        $region42: #{tpu_custom_call.1} parent=11 // pred_check_branch
          %728 = sbr.rel (%p726) target = $region44
        $region43: #{tpu_custom_call.1} parent=11 // pred_region
          _
        $region44: #{tpu_custom_call.1} parent=11 // pred_fallthru
          _
        // Predicated region
        $region45: #{tpu_custom_call.1} parent=11 // pred_check
          %p729 = pneg %p341
        $region46: #{tpu_custom_call.1} parent=11 // pred_check_branch
          %731 = sbr.rel (%p729) target = $region48
        $region47: #{tpu_custom_call.1} parent=11 // pred_region
          _
        $region48: #{tpu_custom_call.1} parent=11 // pred_fallthru
          _
        // Predicated region
        $region49: #{tpu_custom_call.1} parent=11 // pred_check
          %p732 = pneg %p362
        $region50: #{tpu_custom_call.1} parent=11 // pred_check_branch
          %734 = sbr.rel (%p732) target = $region52
        $region51: #{tpu_custom_call.1} parent=11 // pred_region
          _
        $region52: #{tpu_custom_call.1} parent=11 // pred_fallthru
          _
        // Predicated region
        $region53: #{tpu_custom_call.1} parent=11 // pred_check
          %p735 = pneg %p383
        $region54: #{tpu_custom_call.1} parent=11 // pred_check_branch
          %737 = sbr.rel (%p735) target = $region56
        $region55: #{tpu_custom_call.1} parent=11 // pred_region
          _
        $region56: #{tpu_custom_call.1} parent=11 // pred_fallthru
          _
        // Predicated region
        $region57: #{tpu_custom_call.1} parent=11 // pred_check
          %p738 = pneg %p404
        $region58: #{tpu_custom_call.1} parent=11 // pred_check_branch
          %740 = sbr.rel (%p738) target = $region60
        $region59: #{tpu_custom_call.1} parent=11 // pred_region
          _
        $region60: #{tpu_custom_call.1} parent=11 // pred_fallthru
          _
        // Predicated region
        $region61: #{tpu_custom_call.1} parent=11 // pred_check
          %p741 = pneg %p425
        $region62: #{tpu_custom_call.1} parent=11 // pred_check_branch
          %743 = sbr.rel (%p741) target = $region64
        $region63: #{tpu_custom_call.1} parent=11 // pred_region
          _
        $region64: #{tpu_custom_call.1} parent=11 // pred_fallthru
          _
        // Predicated region
        $region65: #{tpu_custom_call.1} parent=11 // pred_check
          %p744 = pneg %p446
        $region66: #{tpu_custom_call.1} parent=11 // pred_check_branch
          %746 = sbr.rel (%p744) target = $region68
        $region67: #{tpu_custom_call.1} parent=11 // pred_region
          _
        $region68: #{tpu_custom_call.1} parent=11 // pred_fallthru
          _
        // Predicated region
        $region69: #{tpu_custom_call.1} parent=11 // pred_check
          %p747 = pneg %p467
        $region70: #{tpu_custom_call.1} parent=11 // pred_check_branch
          %749 = sbr.rel (%p747) target = $region72
        $region71: #{tpu_custom_call.1} parent=11 // pred_region
          _
        $region72: #{tpu_custom_call.1} parent=11 // pred_fallthru
          _
        // Predicated region
        $region73: #{tpu_custom_call.1} parent=11 // pred_check
          %p750 = pneg %p488
        $region74: #{tpu_custom_call.1} parent=11 // pred_check_branch
          %752 = sbr.rel (%p750) target = $region76
        $region75: #{tpu_custom_call.1} parent=11 // pred_region
          _
        $region76: #{tpu_custom_call.1} parent=11 // pred_fallthru
          _
        // Predicated region
        $region77: #{tpu_custom_call.1} parent=11 // pred_check
          %p753 = pneg %p509
        $region78: #{tpu_custom_call.1} parent=11 // pred_check_branch
          %755 = sbr.rel (%p753) target = $region80
        $region79: #{tpu_custom_call.1} parent=11 // pred_region
          _
        $region80: #{tpu_custom_call.1} parent=11 // pred_fallthru
          _
        // Predicated region
        $region81: #{tpu_custom_call.1} parent=11 // pred_check
          %p756 = pneg %p530
        $region82: #{tpu_custom_call.1} parent=11 // pred_check_branch
          %758 = sbr.rel (%p756) target = $region84
        $region83: #{tpu_custom_call.1} parent=11 // pred_region
          _
        $region84: #{tpu_custom_call.1} parent=11 // pred_fallthru
          _
        // Predicated region
        $region85: #{tpu_custom_call.1} parent=11 // pred_check
          %p759 = pneg %p551
        $region86: #{tpu_custom_call.1} parent=11 // pred_check_branch
          %761 = sbr.rel (%p759) target = $region88
        $region87: #{tpu_custom_call.1} parent=11 // pred_region
          _
        $region88: #{tpu_custom_call.1} parent=11 // pred_fallthru
          _
        // Predicated region
        $region89: #{tpu_custom_call.1} parent=11 // pred_check
          %p762 = pneg %p572
        $region90: #{tpu_custom_call.1} parent=11 // pred_check_branch
          %764 = sbr.rel (%p762) target = $region92
        $region91: #{tpu_custom_call.1} parent=11 // pred_region
          _
        $region92: #{tpu_custom_call.1} parent=11 // pred_fallthru
          _
        // Predicated region
        $region93: #{tpu_custom_call.1} parent=11 // pred_check
          %p765 = pneg %p593
        $region94: #{tpu_custom_call.1} parent=11 // pred_check_branch
          %767 = sbr.rel (%p765) target = $region96
        $region95: #{tpu_custom_call.1} parent=11 // pred_region
          _
        $region96: #{tpu_custom_call.1} parent=11 // pred_fallthru
          _
        // Predicated region
        $region97: #{tpu_custom_call.1} parent=11 // pred_check
          %p768 = pneg %p614
        $region98: #{tpu_custom_call.1} parent=11 // pred_check_branch
          %770 = sbr.rel (%p768) target = $region100
        $region99: #{tpu_custom_call.1} parent=11 // pred_region
          _
        $region100: #{tpu_custom_call.1} parent=11 // pred_fallthru
          _
      $region12: #{tpu_custom_call.1} parent=5 // pred_fallthru
        _
      %p771 = scmp.lt.s32.totalorder %s48, 3
      // Predicated region
      $region101: #{tpu_custom_call.1} parent=5 // pred_check
        %p772 = pneg %p771
      $region102: #{tpu_custom_call.1} parent=5 // pred_check_branch
        %774 = sbr.rel (%p772) target = $region104
      $region103: #{tpu_custom_call.1} parent=5 // pred_region
        // Predicated region
        $region105: #{tpu_custom_call.1} parent=103 // pred_check
          %p775 = pneg %p68
        $region106: #{tpu_custom_call.1} parent=103 // pred_check_branch
          %777 = sbr.rel (%p775) target = $region108
        $region107: #{tpu_custom_call.1} parent=103 // pred_region
          %s778 = sand.u32 %s58, 1
          %s779 = sand.u32 %s58, 1
          %s780 = smul.addr %s779, 32
          %s781 = scalar_lea.vmem [#allocation2], %s780
          %s782 = smul.addr %s48, 8
          %s783 = scalar_lea.vmem %s0, %s782
          // Predicated region
          $region109: #{tpu_custom_call.1} parent=107 // pred_check
            _
          $region110: #{tpu_custom_call.1} parent=107 // pred_check_branch
            %785 = sbr.rel (0) target = $region112
          $region111: #{tpu_custom_call.1} parent=107 // pred_region
            // Predicated region
            $region113: #{tpu_custom_call.1} parent=111 // pred_check
              _
            $region114: #{tpu_custom_call.1} parent=111 // pred_check_branch
              %787 = sbr.rel (0) target = $region116
            $region115: #{tpu_custom_call.1} parent=111 // pred_region
              // Predicated region
              $region128: #{tpu_custom_call.1} parent=115 // pred_check
                _
              $region129: #{tpu_custom_call.1} parent=115 // pred_check_branch
                %808 = sbr.rel (0) target = $region131
              $region130: #{tpu_custom_call.1} parent=115 // pred_region
                loop: start=0, step=1, limit=1
                $region132: #{tpu_custom_call.1} parent=130 // loop_pre_header
                  _
                $region133: #{tpu_custom_call.1} parent=130 // loop_header
                  %s810 = sphi 0, %s814
                  %p811 = scmp.ge.s32.totalorder %s810, 1
                  %s815 = sphi %s783, %s783
                  %s816 = sphi %s781, %s781
                $region134: #{tpu_custom_call.1} parent=130 // loop_header_branch
                  %813 = sbr.rel (%p811) target = $region138
                $region135: #{tpu_custom_call.1} parent=130 // loop_body
                  %v817 = vld [vmem:[%s815] sm:$0xff]
                  %818 = vst [vmem:[%s816] sm:$0xff] %v817
                  %v819 = vld [vmem:[%s815 + $0x18] sm:$0xff]
                  %820 = vst [vmem:[%s816 + $0x8] sm:$0xff] %v819
                  %v821 = vld [vmem:[%s815 + $0x30] sm:$0xff]
                  %822 = vst [vmem:[%s816 + $0x10] sm:$0xff] %v821
                  %v823 = vld [vmem:[%s815 + $0x48] sm:$0xff]
                  %824 = vst [vmem:[%s816 + $0x18] sm:$0xff] %v823
                $region136: #{tpu_custom_call.1} parent=130 // loop_footer
                  %s814 = sadd.s32 1, %s810
                $region137: #{tpu_custom_call.1} parent=130 // loop_footer_branch
                  %809 = sbr.rel target = $region133
                $region138: #{tpu_custom_call.1} parent=130 // loop_exit
                  _
              $region131: #{tpu_custom_call.1} parent=115 // pred_fallthru
                _
              // Predicated region
              $region139: #{tpu_custom_call.1} parent=115 // pred_check
                _
              $region140: #{tpu_custom_call.1} parent=115 // pred_check_branch
                %826 = sbr.rel target = $region142
              $region141: #{tpu_custom_call.1} parent=115 // pred_region
                _
              $region142: #{tpu_custom_call.1} parent=115 // pred_fallthru
                _
            $region116: #{tpu_custom_call.1} parent=111 // pred_fallthru
              _
            // Predicated region
            $region117: #{tpu_custom_call.1} parent=111 // pred_check
              _
            $region118: #{tpu_custom_call.1} parent=111 // pred_check_branch
              %789 = sbr.rel target = $region120
            $region119: #{tpu_custom_call.1} parent=111 // pred_region
              loop: start=0, step=1, limit=1
              $region121: #{tpu_custom_call.1} parent=119 // loop_pre_header
                _
              $region122: #{tpu_custom_call.1} parent=119 // loop_header
                %s792 = sphi 0, %s796
                %p793 = scmp.ge.s32.totalorder %s792, 1
                %s797 = sphi %s783, %s783
                %s798 = sphi %s781, %s781
              $region123: #{tpu_custom_call.1} parent=119 // loop_header_branch
                %795 = sbr.rel (%p793) target = $region127
              $region124: #{tpu_custom_call.1} parent=119 // loop_body
                %v799 = vld [vmem:[%s797] sm:$0xff]
                %800 = vst [vmem:[%s798] sm:$0xff] %v799
                %v801 = vld [vmem:[%s797 + $0x18] sm:$0xff]
                %802 = vst [vmem:[%s798 + $0x8] sm:$0xff] %v801
                %v803 = vld [vmem:[%s797 + $0x30] sm:$0xff]
                %804 = vst [vmem:[%s798 + $0x10] sm:$0xff] %v803
                %v805 = vld [vmem:[%s797 + $0x48] sm:$0xff]
                %806 = vst [vmem:[%s798 + $0x18] sm:$0xff] %v805
              $region125: #{tpu_custom_call.1} parent=119 // loop_footer
                %s796 = sadd.s32 1, %s792
              $region126: #{tpu_custom_call.1} parent=119 // loop_footer_branch
                %791 = sbr.rel target = $region122
              $region127: #{tpu_custom_call.1} parent=119 // loop_exit
                _
            $region120: #{tpu_custom_call.1} parent=111 // pred_fallthru
              _
          $region112: #{tpu_custom_call.1} parent=107 // pred_fallthru
            _
          %827 = vnop
        $region108: #{tpu_custom_call.1} parent=103 // pred_fallthru
          _
        // Predicated region
        $region143: #{tpu_custom_call.1} parent=103 // pred_check
          %p828 = pneg %p94
        $region144: #{tpu_custom_call.1} parent=103 // pred_check_branch
          %830 = sbr.rel (%p828) target = $region146
        $region145: #{tpu_custom_call.1} parent=103 // pred_region
          %s831 = sand.u32 %s84, 1
          %s832 = scalar_lea.sflag [#allocation4], %s831
          %s833 = sand.u32 %s84, 1
          %s834 = smul.addr %s833, 24
          %s835 = scalar_lea.vmem [#allocation3], %s834
          %s837 = ssub.s32 384, 384
          %838 = vsyncadd %s832, %s837
          %s839 = smul.addr %s48, 128
          %s840 = scalar_lea.hbm %s1, %s839
          %s841 = sshll.u32 %s835, 4
          %s842 = int_to_ptr.vmem [resolvable:$true] %s841
          %847 = dma.hbm_to_vmem [thread:$0]  %s840, 384, %s842, %s832, 384, 128, 8
        $region146: #{tpu_custom_call.1} parent=103 // pred_fallthru
          _
        // Predicated region
        $region147: #{tpu_custom_call.1} parent=103 // pred_check
          %p848 = pneg %p120
        $region148: #{tpu_custom_call.1} parent=103 // pred_check_branch
          %850 = sbr.rel (%p848) target = $region150
        $region149: #{tpu_custom_call.1} parent=103 // pred_region
          %s851 = sand.u32 %s48, 1
          %s852 = scalar_lea.sflag [#allocation7], %s851
          %s853 = sand.u32 %s110, 1
          %s854 = smul.addr %s853, 16
          %s855 = scalar_lea.vmem [#allocation6], %s854
          %s857 = ssub.s32 256, 256
          %858 = vsyncadd %s852, %s857
          %s859 = smul.addr %s48, 128
          %s860 = scalar_lea.hbm %s2, %s859
          %s861 = sshll.u32 %s855, 4
          %s862 = int_to_ptr.vmem [resolvable:$true] %s861
          %867 = dma.hbm_to_vmem [thread:$0]  %s860, 256, %s862, %s852, 384, 128, 8
        $region150: #{tpu_custom_call.1} parent=103 // pred_fallthru
          _
        // Predicated region
        $region151: #{tpu_custom_call.1} parent=103 // pred_check
          %p868 = pneg %p146
        $region152: #{tpu_custom_call.1} parent=103 // pred_check_branch
          %870 = sbr.rel (%p868) target = $region154
        $region153: #{tpu_custom_call.1} parent=103 // pred_region
          %s871 = sand.u32 %s48, 1
          %s872 = scalar_lea.sflag [#allocation7], %s871
          %s873 = sand.u32 %s136, 1
          %s874 = smul.addr %s873, 24
          %s875 = scalar_lea.vmem [#allocation8], %s874
          %s877 = ssub.s32 384, 384
          %878 = vsyncadd %s872, %s877
          %s879 = smul.addr %s48, 128
          %s880 = scalar_lea.hbm %s3, %s879
          %s881 = sshll.u32 %s875, 4
          %s882 = int_to_ptr.vmem [resolvable:$true] %s881
          %887 = dma.hbm_to_vmem [thread:$0]  %s880, 384, %s882, %s872, 384, 128, 8
        $region154: #{tpu_custom_call.1} parent=103 // pred_fallthru
          _
      $region104: #{tpu_custom_call.1} parent=5 // pred_fallthru
        _
      %p888 = scmp.le.s32.totalorder 1, %s48
      %p889 = scmp.lt.s32.totalorder %s48, 4
      %p890 = pnand %p888, %p889
      %p891 = pneg %p890
      // Predicated region
      $region155: #{tpu_custom_call.1} parent=5 // pred_check
        _
      $region156: #{tpu_custom_call.1} parent=5 // pred_check_branch
        %893 = sbr.rel (%p890) target = $region158
      $region157: #{tpu_custom_call.1} parent=5 // pred_region
        %s894 = ssub.s32 %s48, 1
        %s895 = sand.u32 %s61, 1
        %s896 = sand.u32 %s61, 1
        %s897 = smul.addr %s896, 32
        %s898 = scalar_lea.vmem [#allocation2], %s897
        // Predicated region
        $region159: #{tpu_custom_call.1} parent=157 // pred_check
          %p899 = pneg %p74
        $region160: #{tpu_custom_call.1} parent=157 // pred_check_branch
          %901 = sbr.rel (%p899) target = $region162
        $region161: #{tpu_custom_call.1} parent=157 // pred_region
          _
        $region162: #{tpu_custom_call.1} parent=157 // pred_fallthru
          _
        %s902 = sand.u32 %s87, 1
        %s903 = scalar_lea.sflag [#allocation4], %s902
        %s904 = sand.u32 %s87, 1
        %s905 = smul.addr %s904, 24
        %s906 = scalar_lea.vmem [#allocation3], %s905
        // Predicated region
        $region163: #{tpu_custom_call.1} parent=157 // pred_check
          %p907 = pneg %p100
        $region164: #{tpu_custom_call.1} parent=157 // pred_check_branch
          %909 = sbr.rel (%p907) target = $region166
        $region165: #{tpu_custom_call.1} parent=157 // pred_region
          %910 = dma.done %s903, 384
        $region166: #{tpu_custom_call.1} parent=157 // pred_fallthru
          _
        %s911 = sand.u32 %s53, 1
        %s912 = scalar_lea.sflag [#allocation7], %s911
        %s913 = sand.u32 %s113, 1
        %s914 = smul.addr %s913, 16
        %s915 = scalar_lea.vmem [#allocation6], %s914
        // Predicated region
        $region167: #{tpu_custom_call.1} parent=157 // pred_check
          %p916 = pneg %p126
        $region168: #{tpu_custom_call.1} parent=157 // pred_check_branch
          %918 = sbr.rel (%p916) target = $region170
        $region169: #{tpu_custom_call.1} parent=157 // pred_region
          %919 = dma.done %s912, 256
        $region170: #{tpu_custom_call.1} parent=157 // pred_fallthru
          _
        %s920 = sand.u32 %s53, 1
        %s921 = scalar_lea.sflag [#allocation7], %s920
        %s922 = sand.u32 %s139, 1
        %s923 = smul.addr %s922, 24
        %s924 = scalar_lea.vmem [#allocation8], %s923
        // Predicated region
        $region171: #{tpu_custom_call.1} parent=157 // pred_check
          %p925 = pneg %p152
        $region172: #{tpu_custom_call.1} parent=157 // pred_check_branch
          %927 = sbr.rel (%p925) target = $region174
        $region173: #{tpu_custom_call.1} parent=157 // pred_region
          %928 = dma.done %s921, 384
        $region174: #{tpu_custom_call.1} parent=157 // pred_fallthru
          _
        // Predicated region
        $region175: #{tpu_custom_call.1} parent=157 // pred_check
          %p929 = pneg %p173
        $region176: #{tpu_custom_call.1} parent=157 // pred_check_branch
          %931 = sbr.rel (%p929) target = $region178
        $region177: #{tpu_custom_call.1} parent=157 // pred_region
          %932 = dma.done [#allocation10], 64
        $region178: #{tpu_custom_call.1} parent=157 // pred_fallthru
          _
        // Predicated region
        $region179: #{tpu_custom_call.1} parent=157 // pred_check
          %p933 = pneg %p215
        $region180: #{tpu_custom_call.1} parent=157 // pred_check_branch
          %935 = sbr.rel (%p933) target = $region182
        $region181: #{tpu_custom_call.1} parent=157 // pred_region
          %936 = dma.done [#allocation10], 64
        $region182: #{tpu_custom_call.1} parent=157 // pred_fallthru
          _
        // Predicated region
        $region183: #{tpu_custom_call.1} parent=157 // pred_check
          %p937 = pneg %p257
        $region184: #{tpu_custom_call.1} parent=157 // pred_check_branch
          %939 = sbr.rel (%p937) target = $region186
        $region185: #{tpu_custom_call.1} parent=157 // pred_region
          %940 = dma.done [#allocation13], 64
        $region186: #{tpu_custom_call.1} parent=157 // pred_fallthru
          _
        %s941 = sand.u32 %s61, 1
        %s942 = sand.u32 %s61, 1
        %s943 = smul.addr %s942, 32
        %s944 = scalar_lea.vmem [#allocation2], %s943
        %p945 = pneg %p74
        %p946 = pneg %p71
        %s947 = sand.u32 %s87, 1
        %s948 = scalar_lea.sflag [#allocation4], %s947
        %s949 = sand.u32 %s87, 1
        %s950 = smul.addr %s949, 24
        %s951 = scalar_lea.vmem [#allocation3], %s950
        %p952 = pneg %p100
        %p953 = pneg %p97
        %s954 = sand.u32 %s53, 1
        %s955 = scalar_lea.sflag [#allocation7], %s954
        %s956 = sand.u32 %s113, 1
        %s957 = smul.addr %s956, 16
        %s958 = scalar_lea.vmem [#allocation6], %s957
        %p959 = pneg %p126
        %p960 = pneg %p123
        %s961 = sand.u32 %s53, 1
        %s962 = scalar_lea.sflag [#allocation7], %s961
        %s963 = sand.u32 %s139, 1
        %s964 = smul.addr %s963, 24
        %s965 = scalar_lea.vmem [#allocation8], %s964
        %p966 = pneg %p152
        %p967 = pneg %p149
        %p968 = pneg %p173
        %p969 = pneg %p170
        %p970 = pneg %p194
        %p971 = pneg %p191
        %p972 = pneg %p215
        %p973 = pneg %p212
        %p974 = pneg %p236
        %p975 = pneg %p233
        %p976 = pneg %p257
        %p977 = pneg %p254
        %p978 = pneg %p278
        %p979 = pneg %p275
        %p980 = pneg %p299
        %p981 = pneg %p296
        %p982 = pneg %p320
        %p983 = pneg %p317
        %p984 = pneg %p341
        %p985 = pneg %p338
        %p986 = pneg %p362
        %p987 = pneg %p359
        %p988 = pneg %p383
        %p989 = pneg %p380
        %p990 = pneg %p404
        %p991 = pneg %p401
        %p992 = pneg %p425
        %p993 = pneg %p422
        %p994 = pneg %p446
        %p995 = pneg %p443
        %p996 = pneg %p467
        %p997 = pneg %p464
        %p998 = pneg %p488
        %p999 = pneg %p485
        %p1000 = pneg %p509
        %p1001 = pneg %p506
        %p1002 = pneg %p530
        %p1003 = pneg %p527
        %p1004 = pneg %p551
        %p1005 = pneg %p548
        %p1006 = pneg %p572
        %p1007 = pneg %p569
        %p1008 = pneg %p593
        %p1009 = pneg %p590
        %p1010 = pneg %p614
        %p1011 = pneg %p611
        %p1012 = pneg %p640
        %p1013 = pneg %p637
        %s1014 = sand.u32 %s627, 1
        %s1015 = scalar_lea.sflag [#allocation5], %s1014
        %s1016 = sand.u32 %s627, 1
        %s1017 = smul.addr %s1016, 32
        %s1018 = scalar_lea.vmem [#allocation14], %s1017
        %p1019 = pneg %p666
        %p1020 = pneg %p663
        %s1021 = sand.u32 %s653, 1
        %s1022 = scalar_lea.sflag [#allocation16], %s1021
        %s1023 = sand.u32 %s653, 1
        %s1024 = smul.addr %s1023, 24
        %s1025 = scalar_lea.vmem [#allocation15], %s1024
        %v1027 = vld [vmem:[#allocation9] sm:$0xf]
        %v1028 = vld [vmem:[%s5] sm:$0xf]
        %v1029 = vld [vmem:[%s5 + $0x4] sm:$0xf]
        %v1030 = vld [vmem:[%s5 + $0x8] sm:$0xf]
        %v1031 = vld [vmem:[%s5 + $0xc] sm:$0xf]
        %v1032 = vld [vmem:[#allocation11] sm:$0xf]
        %v1033 = vld [vmem:[%s7] sm:$0xff]
        %v1034 = vld [vmem:[#allocation12] sm:$0xf]
        %v1035 = vld [vmem:[%s9] sm:$0xf]
        %v1036 = vld [vmem:[%s10] sm:$0xf]
        %v1037 = vld [vmem:[%s10 + $0x4] sm:$0xf]
        %v1038 = vld [vmem:[%s11] sm:$0xf]
        %v1039 = vld [vmem:[%s12] sm:$0xff]
        %v1040 = vld [vmem:[%s13] sm:$0xf]
        %v1041 = vld [vmem:[%s14] sm:$0xf]
        %v1042 = vld [vmem:[%s15] sm:$0xf]
        %v1043 = vld [vmem:[%s15 + $0x4] sm:$0xf]
        %v1044 = vld [vmem:[%s15 + $0x8] sm:$0xf]
        %v1045 = vld [vmem:[%s15 + $0xc] sm:$0xf]
        %v1046 = vld [vmem:[%s15 + $0x10] sm:$0xf]
        %v1047 = vld [vmem:[%s16] sm:$0xff]
        %v1048 = vld [vmem:[%s16 + $0x8] sm:$0xff]
        %v1049 = vld [vmem:[%s16 + $0x10] sm:$0xff]
        %v1050 = vld [vmem:[%s16 + $0x18] sm:$0xff]
        %v1051 = vld [vmem:[%s16 + $0x20] sm:$0xff]
        %v1052 = vld [vmem:[%s17] sm:$0xf]
        %v1053 = vld [vmem:[%s18] sm:$0xff]
        %v1054 = vld [vmem:[%s19] sm:$0xf]
        %v1055 = vld [vmem:[%s20] sm:$0xff]
        %v1056 = vld [vmem:[%s21] sm:$0xf]
        %v1057 = vld [vmem:[%s22] sm:$0xf]
        %v1058 = vld [vmem:[%s22 + $0x4] sm:$0xf]
        %v1059 = vld [vmem:[%s22 + $0x8] sm:$0xf]
        %v1060 = vld [vmem:[%s22 + $0xc] sm:$0xf]
        %v1061 = vld [vmem:[%s23] sm:$0xf]
        %v1062 = vld [vmem:[%s24] sm:$0xff]
        %v1063 = vld [vmem:[%s25] sm:$0xf]
        %v1064 = vld [vmem:[%s898] sm:$0xff]
        %v1065 = vld [vmem:[%s898 + $0x8] sm:$0xff]
        %v1066 = vld [vmem:[%s898 + $0x10] sm:$0xff]
        %v1067 = vld [vmem:[%s898 + $0x18] sm:$0xff]
        %v1068 = vld [vmem:[%s906] sm:$0xff]
        %s1069 = scalar_lea.vmem %s906, 8 [#allocation3]
        %v1070 = vld [vmem:[%s1069] sm:$0xff]
        %s1071 = scalar_lea.vmem %s906, 16 [#allocation3]
        %v1072 = vld [vmem:[%s1071] sm:$0xff]
        %v1073 = vld [vmem:[%s915] sm:$0xff]
        %v1074 = vld [vmem:[%s915 + $0x8] sm:$0xff]
        %v1075 = vld [vmem:[%s924] sm:$0xff]
        %s1076 = scalar_lea.vmem %s924, 8 [#allocation8]
        %v1077 = vld [vmem:[%s1076] sm:$0xff]
        %s1078 = scalar_lea.vmem %s924, 16 [#allocation8]
        %v1079 = vld [vmem:[%s1078] sm:$0xff]
        %v1080 = vpack.c.bf16 %v1068, %v1068
        %vm1081 = vcmask 64512
        %v1083 = vsel %vm1081, %v1027, 0
        %vm1085 = vcmask 1043456
        %v1087 = vsel %vm1085, %v1080, 0
        %1089 = vmatprep.subr.bf16.mxu0 0
        %1090 = vmatpush1.bf16.msra.mxu0 %v1087
        %1091 = vmatprep.subr.bf16.mxu0 0
        %1092 = vmatpush1.bf16.msra.mxu0 0
        %1093 = vmatprep.subr.bf16.mxu0 0
        %1094 = vmatpush1.bf16.msra.mxu0 0
        %1095 = vmatprep.subr.bf16.mxu0 0
        %1096 = vmatpush1.bf16.msra.mxu0 0
        %1097 = vmatprep.subr.bf16.mxu0 0
        %1098 = vmatpush1.bf16.msra.mxu0 0
        %1099 = vmatprep.subr.bf16.mxu0 0
        %1100 = vmatpush1.bf16.msra.mxu0 0
        %1101 = vmatprep.subr.bf16.mxu0 0
        %1102 = vmatpush1.bf16.msra.mxu0 0
        %1103 = vmatprep.subr.bf16.mxu0 0
        %1104 = vmatpush1.bf16.msra.mxu0 0
        %1105 = vmatprep.subr.bf16.mxu0 0
        %1106 = vmatpush1.bf16.msra.mxu0 0
        %1107 = vmatprep.subr.bf16.mxu0 0
        %1108 = vmatpush1.bf16.msra.mxu0 0
        %1109 = vmatprep.subr.bf16.mxu0 0
        %1110 = vmatpush1.bf16.msra.mxu0 0
        %1111 = vmatprep.subr.bf16.mxu0 0
        %1112 = vmatpush1.bf16.msra.mxu0 0
        %1113 = vmatprep.subr.bf16.mxu0 0
        %1114 = vmatpush1.bf16.msra.mxu0 0
        %1115 = vmatprep.subr.bf16.mxu0 0
        %1116 = vmatpush1.bf16.msra.mxu0 0
        %1117 = vmatprep.subr.bf16.mxu0 0
        %1118 = vmatpush1.bf16.msra.mxu0 0
        %1119 = vmatprep.subr.bf16.mxu0 0
        %1120 = vmatpush1.bf16.msra.mxu0 0
        %1121 = vmatprep.mubr.bf16.mxu0 0
        %1122 = vmatmul.mubr.bf16.gmra.mrb[0].mxu0 %v1083
        %v1123 = vpop.f32.mrb[0].mxu0
        %v1124 = vadd.f32 0.0, %v1123
        %v1125 = vpop.f32.mrb[0].mxu0
        %v1126 = vpop.f32.mrb[0].mxu0
        %v1127 = vpop.f32.mrb[0].mxu0
        %1128 = vdwg.mxu0
        %v1129 = vpack.c.bf16 %v1070, %v1070
        %v1131 = vsel %vm1085, %v1129, 0
        %1133 = vmatprep.subr.bf16.mxu0 0
        %1134 = vmatpush1.bf16.msra.mxu0 %v1131
        %1135 = vmatprep.subr.bf16.mxu0 0
        %1136 = vmatpush1.bf16.msra.mxu0 0
        %1137 = vmatprep.subr.bf16.mxu0 0
        %1138 = vmatpush1.bf16.msra.mxu0 0
        %1139 = vmatprep.subr.bf16.mxu0 0
        %1140 = vmatpush1.bf16.msra.mxu0 0
        %1141 = vmatprep.subr.bf16.mxu0 0
        %1142 = vmatpush1.bf16.msra.mxu0 0
        %1143 = vmatprep.subr.bf16.mxu0 0
        %1144 = vmatpush1.bf16.msra.mxu0 0
        %1145 = vmatprep.subr.bf16.mxu0 0
        %1146 = vmatpush1.bf16.msra.mxu0 0
        %1147 = vmatprep.subr.bf16.mxu0 0
        %1148 = vmatpush1.bf16.msra.mxu0 0
        %1149 = vmatprep.subr.bf16.mxu0 0
        %1150 = vmatpush1.bf16.msra.mxu0 0
        %1151 = vmatprep.subr.bf16.mxu0 0
        %1152 = vmatpush1.bf16.msra.mxu0 0
        %1153 = vmatprep.subr.bf16.mxu0 0
        %1154 = vmatpush1.bf16.msra.mxu0 0
        %1155 = vmatprep.subr.bf16.mxu0 0
        %1156 = vmatpush1.bf16.msra.mxu0 0
        %1157 = vmatprep.subr.bf16.mxu0 0
        %1158 = vmatpush1.bf16.msra.mxu0 0
        %1159 = vmatprep.subr.bf16.mxu0 0
        %1160 = vmatpush1.bf16.msra.mxu0 0
        %1161 = vmatprep.subr.bf16.mxu0 0
        %1162 = vmatpush1.bf16.msra.mxu0 0
        %1163 = vmatprep.subr.bf16.mxu0 0
        %1164 = vmatpush1.bf16.msra.mxu0 0
        %1165 = vmatprep.mubr.bf16.mxu0 0
        %1166 = vmatmul.mubr.bf16.gmra.mrb[0].mxu0 %v1083
        %v1167 = vpop.f32.mrb[0].mxu0
        %v1168 = vadd.f32 0.0, %v1167
        %v1169 = vpop.f32.mrb[0].mxu0
        %v1170 = vpop.f32.mrb[0].mxu0
        %v1171 = vpop.f32.mrb[0].mxu0
        %1172 = vdwg.mxu0
        %v1173 = vpack.c.bf16 %v1072, %v1072
        %v1175 = vsel %vm1085, %v1173, 0
        %1177 = vmatprep.subr.bf16.mxu0 0
        %1178 = vmatpush1.bf16.msra.mxu0 %v1175
        %1179 = vmatprep.subr.bf16.mxu0 0
        %1180 = vmatpush1.bf16.msra.mxu0 0
        %1181 = vmatprep.subr.bf16.mxu0 0
        %1182 = vmatpush1.bf16.msra.mxu0 0
        %1183 = vmatprep.subr.bf16.mxu0 0
        %1184 = vmatpush1.bf16.msra.mxu0 0
        %1185 = vmatprep.subr.bf16.mxu0 0
        %1186 = vmatpush1.bf16.msra.mxu0 0
        %1187 = vmatprep.subr.bf16.mxu0 0
        %1188 = vmatpush1.bf16.msra.mxu0 0
        %1189 = vmatprep.subr.bf16.mxu0 0
        %1190 = vmatpush1.bf16.msra.mxu0 0
        %1191 = vmatprep.subr.bf16.mxu0 0
        %1192 = vmatpush1.bf16.msra.mxu0 0
        %1193 = vmatprep.subr.bf16.mxu0 0
        %1194 = vmatpush1.bf16.msra.mxu0 0
        %1195 = vmatprep.subr.bf16.mxu0 0
        %1196 = vmatpush1.bf16.msra.mxu0 0
        %1197 = vmatprep.subr.bf16.mxu0 0
        %1198 = vmatpush1.bf16.msra.mxu0 0
        %1199 = vmatprep.subr.bf16.mxu0 0
        %1200 = vmatpush1.bf16.msra.mxu0 0
        %1201 = vmatprep.subr.bf16.mxu0 0
        %1202 = vmatpush1.bf16.msra.mxu0 0
        %1203 = vmatprep.subr.bf16.mxu0 0
        %1204 = vmatpush1.bf16.msra.mxu0 0
        %1205 = vmatprep.subr.bf16.mxu0 0
        %1206 = vmatpush1.bf16.msra.mxu0 0
        %1207 = vmatprep.subr.bf16.mxu0 0
        %1208 = vmatpush1.bf16.msra.mxu0 0
        %1209 = vmatprep.mubr.bf16.mxu0 0
        %1210 = vmatmul.mubr.bf16.gmra.mrb[0].mxu0 %v1083
        %v1211 = vpop.f32.mrb[0].mxu0
        %v1212 = vadd.f32 0.0, %v1211
        %v1213 = vpop.f32.mrb[0].mxu0
        %v1214 = vpop.f32.mrb[0].mxu0
        %v1215 = vpop.f32.mrb[0].mxu0
        %1216 = vdwg.mxu0
        %v1217 = vmul.f32 %v1124, %v1124
        %v1218 = vmul.f32 %v1168, %v1168
        %v1219 = vadd.f32 %v1217, %v1218
        %v1220 = vmul.f32 %v1212, %v1212
        %v1221 = vadd.f32 %v1219, %v1220
        %v1222 = vrsqrt.pop %v1221
        %v1223 = vmul.f32 %v1221, %v1222
        %vm1224 = vcmp.eq.f32.partialorder %v1221, inf
        %v1225 = vsel %vm1224, %v1221, %v1223
        %vm1226 = vcmp.eq.f32.partialorder %v1221, 0.0
        %v1227 = vand.u32 %v1221, 2147483648
        %v1228 = vsel %vm1226, %v1227, %v1225
        %v1229 = vpack.c.bf16 %v1064, %v1228
        %v1230 = vpack.c.bf16 %v1066, %v1065
        %v1231 = vpack.c.bf16 %v1067, %v1067
        %v1236 = vunpack.c.l.b16 %v1028
        %v1237 = vunpack.c.l.b16 %v1029
        %v1238 = vunpack.c.l.b16 %v1030
        %v1239 = vunpack.c.l.b16 %v1031
        %v1240 = vpack.c.b16 %v1237, %v1236
        %v1241 = vpack.c.b16 %v1239, %v1238
        %vm1242 = vcmask 326656
        %v1244 = vsel %vm1242, %v1240, 0
        %v1247 = vsel %vm1242, %v1241, 0
        %v1250 = vsel %vm1085, %v1231, 0
        %1252 = vmatprep.subr.bf16.mxu0 0
        %1253 = vmatpush1.bf16.msra.mxu0 %v1229
        %1254 = vmatprep.subr.bf16.mxu0 0
        %1255 = vmatpush1.bf16.msra.mxu0 %v1230
        %1256 = vmatprep.subr.bf16.mxu0 0
        %1257 = vmatpush1.bf16.msra.mxu0 %v1250
        %1258 = vmatprep.subr.bf16.mxu0 0
        %1259 = vmatpush1.bf16.msra.mxu0 0
        %1260 = vmatprep.subr.bf16.mxu0 0
        %1261 = vmatpush1.bf16.msra.mxu0 0
        %1262 = vmatprep.subr.bf16.mxu0 0
        %1263 = vmatpush1.bf16.msra.mxu0 0
        %1264 = vmatprep.subr.bf16.mxu0 0
        %1265 = vmatpush1.bf16.msra.mxu0 0
        %1266 = vmatprep.subr.bf16.mxu0 0
        %1267 = vmatpush1.bf16.msra.mxu0 0
        %1268 = vmatprep.subr.bf16.mxu0 0
        %1269 = vmatpush1.bf16.msra.mxu0 0
        %1270 = vmatprep.subr.bf16.mxu0 0
        %1271 = vmatpush1.bf16.msra.mxu0 0
        %1272 = vmatprep.subr.bf16.mxu0 0
        %1273 = vmatpush1.bf16.msra.mxu0 0
        %1274 = vmatprep.subr.bf16.mxu0 0
        %1275 = vmatpush1.bf16.msra.mxu0 0
        %1276 = vmatprep.subr.bf16.mxu0 0
        %1277 = vmatpush1.bf16.msra.mxu0 0
        %1278 = vmatprep.subr.bf16.mxu0 0
        %1279 = vmatpush1.bf16.msra.mxu0 0
        %1280 = vmatprep.subr.bf16.mxu0 0
        %1281 = vmatpush1.bf16.msra.mxu0 0
        %1282 = vmatprep.subr.bf16.mxu0 0
        %1283 = vmatpush1.bf16.msra.mxu0 0
        %1284 = vmatprep.mubr.bf16.mxu0 0
        %1285 = vmatmul.mubr.bf16.gmra.mrb[0].mxu0 %v1244
        %v1286 = vpop.f32.mrb[0].mxu0
        %v1287 = vadd.f32 0.0, %v1286
        %v1288 = vpop.f32.mrb[0].mxu0
        %v1289 = vpop.f32.mrb[0].mxu0
        %v1290 = vadd.f32 0.0, %v1289
        %v1291 = vpop.f32.mrb[0].mxu0
        %1292 = vmatprep.mubr.bf16.mxu0 0
        %1293 = vmatmul.mubr.bf16.gmra.mrb[0].mxu0 %v1247
        %v1294 = vpop.f32.mrb[0].mxu0
        %v1295 = vadd.f32 0.0, %v1294
        %v1296 = vpop.f32.mrb[0].mxu0
        %v1297 = vpop.f32.mrb[0].mxu0
        %v1298 = vadd.f32 0.0, %v1297
        %v1299 = vpop.f32.mrb[0].mxu0
        %1300 = vdwg.mxu0
        %v1301 = vpack.c.bf16 %v1290, %v1287
        %v1302 = vpack.c.bf16 %v1298, %v1295
        %1304 = vset.pattern.permute.xlu0 0
        %1305 = vperm.xlu0 %1304, %v1033
        %v1306 = vpop.permute.xlu0 %1305
        %vm1308 = vcmask 261120
        %v1310 = vsel %vm1308, %v1032, 0
        %1312 = vmatprep.subr.bf16.mxu0 0
        %1313 = vmatpush1.bf16.msra.mxu0 %v1301
        %1314 = vmatprep.subr.bf16.mxu0 0
        %1315 = vmatpush1.bf16.msra.mxu0 %v1302
        %1316 = vmatprep.subr.bf16.mxu0 0
        %1317 = vmatpush1.bf16.msra.mxu0 0
        %1318 = vmatprep.subr.bf16.mxu0 0
        %1319 = vmatpush1.bf16.msra.mxu0 0
        %1320 = vmatprep.subr.bf16.mxu0 0
        %1321 = vmatpush1.bf16.msra.mxu0 0
        %1322 = vmatprep.subr.bf16.mxu0 0
        %1323 = vmatpush1.bf16.msra.mxu0 0
        %1324 = vmatprep.subr.bf16.mxu0 0
        %1325 = vmatpush1.bf16.msra.mxu0 0
        %1326 = vmatprep.subr.bf16.mxu0 0
        %1327 = vmatpush1.bf16.msra.mxu0 0
        %1328 = vmatprep.subr.bf16.mxu0 0
        %1329 = vmatpush1.bf16.msra.mxu0 0
        %1330 = vmatprep.subr.bf16.mxu0 0
        %1331 = vmatpush1.bf16.msra.mxu0 0
        %1332 = vmatprep.subr.bf16.mxu0 0
        %1333 = vmatpush1.bf16.msra.mxu0 0
        %1334 = vmatprep.subr.bf16.mxu0 0
        %1335 = vmatpush1.bf16.msra.mxu0 0
        %1336 = vmatprep.subr.bf16.mxu0 0
        %1337 = vmatpush1.bf16.msra.mxu0 0
        %1338 = vmatprep.subr.bf16.mxu0 0
        %1339 = vmatpush1.bf16.msra.mxu0 0
        %1340 = vmatprep.subr.bf16.mxu0 0
        %1341 = vmatpush1.bf16.msra.mxu0 0
        %1342 = vmatprep.subr.bf16.mxu0 0
        %1343 = vmatpush1.bf16.msra.mxu0 0
        %1344 = vmatprep.mubr.bf16.mxu0 0
        %1345 = vmatmul.mubr.bf16.gmra.mrb[0].mxu0 %v1310
        %v1346 = vpop.f32.mrb[0].mxu0
        %v1347 = vadd.f32 %v1306, %v1346
        %v1348 = vpop.f32.mrb[0].mxu0
        %v1349 = vpop.f32.mrb[0].mxu0
        %v1350 = vpop.f32.mrb[0].mxu0
        %1351 = vdwg.mxu0
        %v1352 = vxor.u32 %v1347, 2147483648
        %v1353 = vmul.f32 %v1352, 1.442695
        %v1354 = vpow.pop %v1353
        %v1355 = vadd.f32 %v1354, 1.0
        %v1356 = vrcp.pop %v1355
        %v1357 = vmul.f32 1.0, %v1356
        %v1358 = vpack.c.bf16 %v1124, %v1124
        %v1360 = vsel %vm1081, %v1034, 0
        %v1363 = vsel %vm1085, %v1358, 0
        %1365 = vmatprep.subr.bf16.mxu0 0
        %1366 = vmatpush1.bf16.msra.mxu0 %v1363
        %1367 = vmatprep.subr.bf16.mxu0 0
        %1368 = vmatpush1.bf16.msra.mxu0 0
        %1369 = vmatprep.subr.bf16.mxu0 0
        %1370 = vmatpush1.bf16.msra.mxu0 0
        %1371 = vmatprep.subr.bf16.mxu0 0
        %1372 = vmatpush1.bf16.msra.mxu0 0
        %1373 = vmatprep.subr.bf16.mxu0 0
        %1374 = vmatpush1.bf16.msra.mxu0 0
        %1375 = vmatprep.subr.bf16.mxu0 0
        %1376 = vmatpush1.bf16.msra.mxu0 0
        %1377 = vmatprep.subr.bf16.mxu0 0
        %1378 = vmatpush1.bf16.msra.mxu0 0
        %1379 = vmatprep.subr.bf16.mxu0 0
        %1380 = vmatpush1.bf16.msra.mxu0 0
        %1381 = vmatprep.subr.bf16.mxu0 0
        %1382 = vmatpush1.bf16.msra.mxu0 0
        %1383 = vmatprep.subr.bf16.mxu0 0
        %1384 = vmatpush1.bf16.msra.mxu0 0
        %1385 = vmatprep.subr.bf16.mxu0 0
        %1386 = vmatpush1.bf16.msra.mxu0 0
        %1387 = vmatprep.subr.bf16.mxu0 0
        %1388 = vmatpush1.bf16.msra.mxu0 0
        %1389 = vmatprep.subr.bf16.mxu0 0
        %1390 = vmatpush1.bf16.msra.mxu0 0
        %1391 = vmatprep.subr.bf16.mxu0 0
        %1392 = vmatpush1.bf16.msra.mxu0 0
        %1393 = vmatprep.subr.bf16.mxu0 0
        %1394 = vmatpush1.bf16.msra.mxu0 0
        %1395 = vmatprep.subr.bf16.mxu0 0
        %1396 = vmatpush1.bf16.msra.mxu0 0
        %1397 = vmatprep.mubr.bf16.mxu0 0
        %1398 = vmatmul.mubr.bf16.gmra.mrb[0].mxu0 %v1360
        %v1399 = vpop.f32.mrb[0].mxu0
        %v1400 = vadd.f32 0.0, %v1399
        %v1401 = vpop.f32.mrb[0].mxu0
        %v1402 = vpop.f32.mrb[0].mxu0
        %v1403 = vpop.f32.mrb[0].mxu0
        %1404 = vdwg.mxu0
        %v1405 = vmul.f32 %v1357, %v1400
        %v1406 = vpack.c.bf16 %v1168, %v1168
        %v1408 = vsel %vm1085, %v1406, 0
        %1410 = vmatprep.subr.bf16.mxu0 0
        %1411 = vmatpush1.bf16.msra.mxu0 %v1408
        %1412 = vmatprep.subr.bf16.mxu0 0
        %1413 = vmatpush1.bf16.msra.mxu0 0
        %1414 = vmatprep.subr.bf16.mxu0 0
        %1415 = vmatpush1.bf16.msra.mxu0 0
        %1416 = vmatprep.subr.bf16.mxu0 0
        %1417 = vmatpush1.bf16.msra.mxu0 0
        %1418 = vmatprep.subr.bf16.mxu0 0
        %1419 = vmatpush1.bf16.msra.mxu0 0
        %1420 = vmatprep.subr.bf16.mxu0 0
        %1421 = vmatpush1.bf16.msra.mxu0 0
        %1422 = vmatprep.subr.bf16.mxu0 0
        %1423 = vmatpush1.bf16.msra.mxu0 0
        %1424 = vmatprep.subr.bf16.mxu0 0
        %1425 = vmatpush1.bf16.msra.mxu0 0
        %1426 = vmatprep.subr.bf16.mxu0 0
        %1427 = vmatpush1.bf16.msra.mxu0 0
        %1428 = vmatprep.subr.bf16.mxu0 0
        %1429 = vmatpush1.bf16.msra.mxu0 0
        %1430 = vmatprep.subr.bf16.mxu0 0
        %1431 = vmatpush1.bf16.msra.mxu0 0
        %1432 = vmatprep.subr.bf16.mxu0 0
        %1433 = vmatpush1.bf16.msra.mxu0 0
        %1434 = vmatprep.subr.bf16.mxu0 0
        %1435 = vmatpush1.bf16.msra.mxu0 0
        %1436 = vmatprep.subr.bf16.mxu0 0
        %1437 = vmatpush1.bf16.msra.mxu0 0
        %1438 = vmatprep.subr.bf16.mxu0 0
        %1439 = vmatpush1.bf16.msra.mxu0 0
        %1440 = vmatprep.subr.bf16.mxu0 0
        %1441 = vmatpush1.bf16.msra.mxu0 0
        %1442 = vmatprep.mubr.bf16.mxu0 0
        %1443 = vmatmul.mubr.bf16.gmra.mrb[0].mxu0 %v1360
        %v1444 = vpop.f32.mrb[0].mxu0
        %v1445 = vadd.f32 0.0, %v1444
        %v1446 = vpop.f32.mrb[0].mxu0
        %v1447 = vpop.f32.mrb[0].mxu0
        %v1448 = vpop.f32.mrb[0].mxu0
        %1449 = vdwg.mxu0
        %v1450 = vmul.f32 %v1357, %v1445
        %v1451 = vpack.c.bf16 %v1212, %v1212
        %v1453 = vsel %vm1085, %v1451, 0
        %1455 = vmatprep.subr.bf16.mxu0 0
        %1456 = vmatpush1.bf16.msra.mxu0 %v1453
        %1457 = vmatprep.subr.bf16.mxu0 0
        %1458 = vmatpush1.bf16.msra.mxu0 0
        %1459 = vmatprep.subr.bf16.mxu0 0
        %1460 = vmatpush1.bf16.msra.mxu0 0
        %1461 = vmatprep.subr.bf16.mxu0 0
        %1462 = vmatpush1.bf16.msra.mxu0 0
        %1463 = vmatprep.subr.bf16.mxu0 0
        %1464 = vmatpush1.bf16.msra.mxu0 0
        %1465 = vmatprep.subr.bf16.mxu0 0
        %1466 = vmatpush1.bf16.msra.mxu0 0
        %1467 = vmatprep.subr.bf16.mxu0 0
        %1468 = vmatpush1.bf16.msra.mxu0 0
        %1469 = vmatprep.subr.bf16.mxu0 0
        %1470 = vmatpush1.bf16.msra.mxu0 0
        %1471 = vmatprep.subr.bf16.mxu0 0
        %1472 = vmatpush1.bf16.msra.mxu0 0
        %1473 = vmatprep.subr.bf16.mxu0 0
        %1474 = vmatpush1.bf16.msra.mxu0 0
        %1475 = vmatprep.subr.bf16.mxu0 0
        %1476 = vmatpush1.bf16.msra.mxu0 0
        %1477 = vmatprep.subr.bf16.mxu0 0
        %1478 = vmatpush1.bf16.msra.mxu0 0
        %1479 = vmatprep.subr.bf16.mxu0 0
        %1480 = vmatpush1.bf16.msra.mxu0 0
        %1481 = vmatprep.subr.bf16.mxu0 0
        %1482 = vmatpush1.bf16.msra.mxu0 0
        %1483 = vmatprep.subr.bf16.mxu0 0
        %1484 = vmatpush1.bf16.msra.mxu0 0
        %1485 = vmatprep.subr.bf16.mxu0 0
        %1486 = vmatpush1.bf16.msra.mxu0 0
        %1487 = vmatprep.mubr.bf16.mxu0 0
        %1488 = vmatmul.mubr.bf16.gmra.mrb[0].mxu0 %v1360
        %v1489 = vpop.f32.mrb[0].mxu0
        %v1490 = vadd.f32 0.0, %v1489
        %v1491 = vpop.f32.mrb[0].mxu0
        %v1492 = vpop.f32.mrb[0].mxu0
        %v1493 = vpop.f32.mrb[0].mxu0
        %1494 = vdwg.mxu0
        %v1495 = vmul.f32 %v1357, %v1490
        %v1496 = vpack.c.bf16 %v1075, %v1075
        %v1498 = vsel %vm1081, %v1035, 0
        %v1501 = vsel %vm1085, %v1496, 0
        %1503 = vmatprep.subr.bf16.mxu0 0
        %1504 = vmatpush1.bf16.msra.mxu0 %v1501
        %1505 = vmatprep.subr.bf16.mxu0 0
        %1506 = vmatpush1.bf16.msra.mxu0 0
        %1507 = vmatprep.subr.bf16.mxu0 0
        %1508 = vmatpush1.bf16.msra.mxu0 0
        %1509 = vmatprep.subr.bf16.mxu0 0
        %1510 = vmatpush1.bf16.msra.mxu0 0
        %1511 = vmatprep.subr.bf16.mxu0 0
        %1512 = vmatpush1.bf16.msra.mxu0 0
        %1513 = vmatprep.subr.bf16.mxu0 0
        %1514 = vmatpush1.bf16.msra.mxu0 0
        %1515 = vmatprep.subr.bf16.mxu0 0
        %1516 = vmatpush1.bf16.msra.mxu0 0
        %1517 = vmatprep.subr.bf16.mxu0 0
        %1518 = vmatpush1.bf16.msra.mxu0 0
        %1519 = vmatprep.subr.bf16.mxu0 0
        %1520 = vmatpush1.bf16.msra.mxu0 0
        %1521 = vmatprep.subr.bf16.mxu0 0
        %1522 = vmatpush1.bf16.msra.mxu0 0
        %1523 = vmatprep.subr.bf16.mxu0 0
        %1524 = vmatpush1.bf16.msra.mxu0 0
        %1525 = vmatprep.subr.bf16.mxu0 0
        %1526 = vmatpush1.bf16.msra.mxu0 0
        %1527 = vmatprep.subr.bf16.mxu0 0
        %1528 = vmatpush1.bf16.msra.mxu0 0
        %1529 = vmatprep.subr.bf16.mxu0 0
        %1530 = vmatpush1.bf16.msra.mxu0 0
        %1531 = vmatprep.subr.bf16.mxu0 0
        %1532 = vmatpush1.bf16.msra.mxu0 0
        %1533 = vmatprep.subr.bf16.mxu0 0
        %1534 = vmatpush1.bf16.msra.mxu0 0
        %1535 = vmatprep.mubr.bf16.mxu0 0
        %1536 = vmatmul.mubr.bf16.gmra.mrb[0].mxu0 %v1498
        %v1537 = vpop.f32.mrb[0].mxu0
        %v1538 = vadd.f32 0.0, %v1537
        %v1539 = vpop.f32.mrb[0].mxu0
        %v1540 = vpop.f32.mrb[0].mxu0
        %v1541 = vpop.f32.mrb[0].mxu0
        %1542 = vdwg.mxu0
        %v1543 = vpack.c.bf16 %v1077, %v1077
        %v1545 = vsel %vm1085, %v1543, 0
        %1547 = vmatprep.subr.bf16.mxu0 0
        %1548 = vmatpush1.bf16.msra.mxu0 %v1545
        %1549 = vmatprep.subr.bf16.mxu0 0
        %1550 = vmatpush1.bf16.msra.mxu0 0
        %1551 = vmatprep.subr.bf16.mxu0 0
        %1552 = vmatpush1.bf16.msra.mxu0 0
        %1553 = vmatprep.subr.bf16.mxu0 0
        %1554 = vmatpush1.bf16.msra.mxu0 0
        %1555 = vmatprep.subr.bf16.mxu0 0
        %1556 = vmatpush1.bf16.msra.mxu0 0
        %1557 = vmatprep.subr.bf16.mxu0 0
        %1558 = vmatpush1.bf16.msra.mxu0 0
        %1559 = vmatprep.subr.bf16.mxu0 0
        %1560 = vmatpush1.bf16.msra.mxu0 0
        %1561 = vmatprep.subr.bf16.mxu0 0
        %1562 = vmatpush1.bf16.msra.mxu0 0
        %1563 = vmatprep.subr.bf16.mxu0 0
        %1564 = vmatpush1.bf16.msra.mxu0 0
        %1565 = vmatprep.subr.bf16.mxu0 0
        %1566 = vmatpush1.bf16.msra.mxu0 0
        %1567 = vmatprep.subr.bf16.mxu0 0
        %1568 = vmatpush1.bf16.msra.mxu0 0
        %1569 = vmatprep.subr.bf16.mxu0 0
        %1570 = vmatpush1.bf16.msra.mxu0 0
        %1571 = vmatprep.subr.bf16.mxu0 0
        %1572 = vmatpush1.bf16.msra.mxu0 0
        %1573 = vmatprep.subr.bf16.mxu0 0
        %1574 = vmatpush1.bf16.msra.mxu0 0
        %1575 = vmatprep.subr.bf16.mxu0 0
        %1576 = vmatpush1.bf16.msra.mxu0 0
        %1577 = vmatprep.subr.bf16.mxu0 0
        %1578 = vmatpush1.bf16.msra.mxu0 0
        %1579 = vmatprep.mubr.bf16.mxu0 0
        %1580 = vmatmul.mubr.bf16.gmra.mrb[0].mxu0 %v1498
        %v1581 = vpop.f32.mrb[0].mxu0
        %v1582 = vadd.f32 0.0, %v1581
        %v1583 = vpop.f32.mrb[0].mxu0
        %v1584 = vpop.f32.mrb[0].mxu0
        %v1585 = vpop.f32.mrb[0].mxu0
        %1586 = vdwg.mxu0
        %v1587 = vpack.c.bf16 %v1079, %v1079
        %v1589 = vsel %vm1085, %v1587, 0
        %1591 = vmatprep.subr.bf16.mxu0 0
        %1592 = vmatpush1.bf16.msra.mxu0 %v1589
        %1593 = vmatprep.subr.bf16.mxu0 0
        %1594 = vmatpush1.bf16.msra.mxu0 0
        %1595 = vmatprep.subr.bf16.mxu0 0
        %1596 = vmatpush1.bf16.msra.mxu0 0
        %1597 = vmatprep.subr.bf16.mxu0 0
        %1598 = vmatpush1.bf16.msra.mxu0 0
        %1599 = vmatprep.subr.bf16.mxu0 0
        %1600 = vmatpush1.bf16.msra.mxu0 0
        %1601 = vmatprep.subr.bf16.mxu0 0
        %1602 = vmatpush1.bf16.msra.mxu0 0
        %1603 = vmatprep.subr.bf16.mxu0 0
        %1604 = vmatpush1.bf16.msra.mxu0 0
        %1605 = vmatprep.subr.bf16.mxu0 0
        %1606 = vmatpush1.bf16.msra.mxu0 0
        %1607 = vmatprep.subr.bf16.mxu0 0
        %1608 = vmatpush1.bf16.msra.mxu0 0
        %1609 = vmatprep.subr.bf16.mxu0 0
        %1610 = vmatpush1.bf16.msra.mxu0 0
        %1611 = vmatprep.subr.bf16.mxu0 0
        %1612 = vmatpush1.bf16.msra.mxu0 0
        %1613 = vmatprep.subr.bf16.mxu0 0
        %1614 = vmatpush1.bf16.msra.mxu0 0
        %1615 = vmatprep.subr.bf16.mxu0 0
        %1616 = vmatpush1.bf16.msra.mxu0 0
        %1617 = vmatprep.subr.bf16.mxu0 0
        %1618 = vmatpush1.bf16.msra.mxu0 0
        %1619 = vmatprep.subr.bf16.mxu0 0
        %1620 = vmatpush1.bf16.msra.mxu0 0
        %1621 = vmatprep.subr.bf16.mxu0 0
        %1622 = vmatpush1.bf16.msra.mxu0 0
        %1623 = vmatprep.mubr.bf16.mxu0 0
        %1624 = vmatmul.mubr.bf16.gmra.mrb[0].mxu0 %v1498
        %v1625 = vpop.f32.mrb[0].mxu0
        %v1626 = vadd.f32 0.0, %v1625
        %v1627 = vpop.f32.mrb[0].mxu0
        %v1628 = vpop.f32.mrb[0].mxu0
        %v1629 = vpop.f32.mrb[0].mxu0
        %1630 = vdwg.mxu0
        %v1631 = vmul.f32 %v1538, %v1538
        %v1632 = vmul.f32 %v1582, %v1582
        %v1633 = vadd.f32 %v1631, %v1632
        %v1634 = vmul.f32 %v1626, %v1626
        %v1635 = vadd.f32 %v1633, %v1634
        %v1636 = vrsqrt.pop %v1635
        %v1637 = vmul.f32 %v1635, %v1636
        %vm1638 = vcmp.eq.f32.partialorder %v1635, inf
        %v1639 = vsel %vm1638, %v1635, %v1637
        %vm1640 = vcmp.eq.f32.partialorder %v1635, 0.0
        %v1641 = vand.u32 %v1635, 2147483648
        %v1642 = vsel %vm1640, %v1641, %v1639
        %v1643 = vpack.c.bf16 %v1073, %v1642
        %v1644 = vpack.c.bf16 %v1074, %v1074
        %v1647 = vunpack.c.l.b16 %v1036
        %v1648 = vunpack.c.l.b16 %v1037
        %v1649 = vpack.c.b16 %v1648, %v1647
        %vm1650 = vcmask 195584
        %v1652 = vsel %vm1650, %v1649, 0
        %v1655 = vsel %vm1085, %v1644, 0
        %1657 = vmatprep.subr.bf16.mxu0 0
        %1658 = vmatpush1.bf16.msra.mxu0 %v1643
        %1659 = vmatprep.subr.bf16.mxu0 0
        %1660 = vmatpush1.bf16.msra.mxu0 %v1655
        %1661 = vmatprep.subr.bf16.mxu0 0
        %1662 = vmatpush1.bf16.msra.mxu0 0
        %1663 = vmatprep.subr.bf16.mxu0 0
        %1664 = vmatpush1.bf16.msra.mxu0 0
        %1665 = vmatprep.subr.bf16.mxu0 0
        %1666 = vmatpush1.bf16.msra.mxu0 0
        %1667 = vmatprep.subr.bf16.mxu0 0
        %1668 = vmatpush1.bf16.msra.mxu0 0
        %1669 = vmatprep.subr.bf16.mxu0 0
        %1670 = vmatpush1.bf16.msra.mxu0 0
        %1671 = vmatprep.subr.bf16.mxu0 0
        %1672 = vmatpush1.bf16.msra.mxu0 0
        %1673 = vmatprep.subr.bf16.mxu0 0
        %1674 = vmatpush1.bf16.msra.mxu0 0
        %1675 = vmatprep.subr.bf16.mxu0 0
        %1676 = vmatpush1.bf16.msra.mxu0 0
        %1677 = vmatprep.subr.bf16.mxu0 0
        %1678 = vmatpush1.bf16.msra.mxu0 0
        %1679 = vmatprep.subr.bf16.mxu0 0
        %1680 = vmatpush1.bf16.msra.mxu0 0
        %1681 = vmatprep.subr.bf16.mxu0 0
        %1682 = vmatpush1.bf16.msra.mxu0 0
        %1683 = vmatprep.subr.bf16.mxu0 0
        %1684 = vmatpush1.bf16.msra.mxu0 0
        %1685 = vmatprep.subr.bf16.mxu0 0
        %1686 = vmatpush1.bf16.msra.mxu0 0
        %1687 = vmatprep.subr.bf16.mxu0 0
        %1688 = vmatpush1.bf16.msra.mxu0 0
        %1689 = vmatprep.mubr.bf16.mxu0 0
        %1690 = vmatmul.mubr.bf16.gmra.mrb[0].mxu0 %v1652
        %v1691 = vpop.f32.mrb[0].mxu0
        %v1692 = vadd.f32 0.0, %v1691
        %v1693 = vpop.f32.mrb[0].mxu0
        %v1694 = vpop.f32.mrb[0].mxu0
        %v1695 = vadd.f32 0.0, %v1694
        %v1696 = vpop.f32.mrb[0].mxu0
        %1697 = vdwg.mxu0
        %v1698 = vpack.c.bf16 %v1695, %v1692
        %1700 = vset.pattern.permute.xlu0 0
        %1701 = vperm.xlu0 %1700, %v1039
        %v1702 = vpop.permute.xlu0 %1701
        %vm1704 = vcmask 130048
        %v1706 = vsel %vm1704, %v1038, 0
        %1708 = vmatprep.subr.bf16.mxu0 0
        %1709 = vmatpush1.bf16.msra.mxu0 %v1698
        %1710 = vmatprep.subr.bf16.mxu0 0
        %1711 = vmatpush1.bf16.msra.mxu0 0
        %1712 = vmatprep.subr.bf16.mxu0 0
        %1713 = vmatpush1.bf16.msra.mxu0 0
        %1714 = vmatprep.subr.bf16.mxu0 0
        %1715 = vmatpush1.bf16.msra.mxu0 0
        %1716 = vmatprep.subr.bf16.mxu0 0
        %1717 = vmatpush1.bf16.msra.mxu0 0
        %1718 = vmatprep.subr.bf16.mxu0 0
        %1719 = vmatpush1.bf16.msra.mxu0 0
        %1720 = vmatprep.subr.bf16.mxu0 0
        %1721 = vmatpush1.bf16.msra.mxu0 0
        %1722 = vmatprep.subr.bf16.mxu0 0
        %1723 = vmatpush1.bf16.msra.mxu0 0
        %1724 = vmatprep.subr.bf16.mxu0 0
        %1725 = vmatpush1.bf16.msra.mxu0 0
        %1726 = vmatprep.subr.bf16.mxu0 0
        %1727 = vmatpush1.bf16.msra.mxu0 0
        %1728 = vmatprep.subr.bf16.mxu0 0
        %1729 = vmatpush1.bf16.msra.mxu0 0
        %1730 = vmatprep.subr.bf16.mxu0 0
        %1731 = vmatpush1.bf16.msra.mxu0 0
        %1732 = vmatprep.subr.bf16.mxu0 0
        %1733 = vmatpush1.bf16.msra.mxu0 0
        %1734 = vmatprep.subr.bf16.mxu0 0
        %1735 = vmatpush1.bf16.msra.mxu0 0
        %1736 = vmatprep.subr.bf16.mxu0 0
        %1737 = vmatpush1.bf16.msra.mxu0 0
        %1738 = vmatprep.subr.bf16.mxu0 0
        %1739 = vmatpush1.bf16.msra.mxu0 0
        %1740 = vmatprep.mubr.bf16.mxu0 0
        %1741 = vmatmul.mubr.bf16.gmra.mrb[0].mxu0 %v1706
        %v1742 = vpop.f32.mrb[0].mxu0
        %v1743 = vadd.f32 %v1702, %v1742
        %v1744 = vpop.f32.mrb[0].mxu0
        %v1745 = vpop.f32.mrb[0].mxu0
        %v1746 = vpop.f32.mrb[0].mxu0
        %1747 = vdwg.mxu0
        %v1748 = vxor.u32 %v1743, 2147483648
        %v1749 = vmul.f32 %v1748, 1.442695
        %v1750 = vpow.pop %v1749
        %v1751 = vadd.f32 %v1750, 1.0
        %v1752 = vrcp.pop %v1751
        %v1753 = vmul.f32 1.0, %v1752
        %v1754 = vpack.c.bf16 %v1538, %v1538
        %v1756 = vsel %vm1081, %v1040, 0
        %v1759 = vsel %vm1085, %v1754, 0
        %1761 = vmatprep.subr.bf16.mxu0 0
        %1762 = vmatpush1.bf16.msra.mxu0 %v1759
        %1763 = vmatprep.subr.bf16.mxu0 0
        %1764 = vmatpush1.bf16.msra.mxu0 0
        %1765 = vmatprep.subr.bf16.mxu0 0
        %1766 = vmatpush1.bf16.msra.mxu0 0
        %1767 = vmatprep.subr.bf16.mxu0 0
        %1768 = vmatpush1.bf16.msra.mxu0 0
        %1769 = vmatprep.subr.bf16.mxu0 0
        %1770 = vmatpush1.bf16.msra.mxu0 0
        %1771 = vmatprep.subr.bf16.mxu0 0
        %1772 = vmatpush1.bf16.msra.mxu0 0
        %1773 = vmatprep.subr.bf16.mxu0 0
        %1774 = vmatpush1.bf16.msra.mxu0 0
        %1775 = vmatprep.subr.bf16.mxu0 0
        %1776 = vmatpush1.bf16.msra.mxu0 0
        %1777 = vmatprep.subr.bf16.mxu0 0
        %1778 = vmatpush1.bf16.msra.mxu0 0
        %1779 = vmatprep.subr.bf16.mxu0 0
        %1780 = vmatpush1.bf16.msra.mxu0 0
        %1781 = vmatprep.subr.bf16.mxu0 0
        %1782 = vmatpush1.bf16.msra.mxu0 0
        %1783 = vmatprep.subr.bf16.mxu0 0
        %1784 = vmatpush1.bf16.msra.mxu0 0
        %1785 = vmatprep.subr.bf16.mxu0 0
        %1786 = vmatpush1.bf16.msra.mxu0 0
        %1787 = vmatprep.subr.bf16.mxu0 0
        %1788 = vmatpush1.bf16.msra.mxu0 0
        %1789 = vmatprep.subr.bf16.mxu0 0
        %1790 = vmatpush1.bf16.msra.mxu0 0
        %1791 = vmatprep.subr.bf16.mxu0 0
        %1792 = vmatpush1.bf16.msra.mxu0 0
        %1793 = vmatprep.mubr.bf16.mxu0 0
        %1794 = vmatmul.mubr.bf16.gmra.mrb[0].mxu0 %v1756
        %v1795 = vpop.f32.mrb[0].mxu0
        %v1796 = vadd.f32 0.0, %v1795
        %v1797 = vpop.f32.mrb[0].mxu0
        %v1798 = vpop.f32.mrb[0].mxu0
        %v1799 = vpop.f32.mrb[0].mxu0
        %1800 = vdwg.mxu0
        %v1801 = vmul.f32 %v1753, %v1796
        %v1802 = vpack.c.bf16 %v1582, %v1582
        %v1804 = vsel %vm1085, %v1802, 0
        %1806 = vmatprep.subr.bf16.mxu0 0
        %1807 = vmatpush1.bf16.msra.mxu0 %v1804
        %1808 = vmatprep.subr.bf16.mxu0 0
        %1809 = vmatpush1.bf16.msra.mxu0 0
        %1810 = vmatprep.subr.bf16.mxu0 0
        %1811 = vmatpush1.bf16.msra.mxu0 0
        %1812 = vmatprep.subr.bf16.mxu0 0
        %1813 = vmatpush1.bf16.msra.mxu0 0
        %1814 = vmatprep.subr.bf16.mxu0 0
        %1815 = vmatpush1.bf16.msra.mxu0 0
        %1816 = vmatprep.subr.bf16.mxu0 0
        %1817 = vmatpush1.bf16.msra.mxu0 0
        %1818 = vmatprep.subr.bf16.mxu0 0
        %1819 = vmatpush1.bf16.msra.mxu0 0
        %1820 = vmatprep.subr.bf16.mxu0 0
        %1821 = vmatpush1.bf16.msra.mxu0 0
        %1822 = vmatprep.subr.bf16.mxu0 0
        %1823 = vmatpush1.bf16.msra.mxu0 0
        %1824 = vmatprep.subr.bf16.mxu0 0
        %1825 = vmatpush1.bf16.msra.mxu0 0
        %1826 = vmatprep.subr.bf16.mxu0 0
        %1827 = vmatpush1.bf16.msra.mxu0 0
        %1828 = vmatprep.subr.bf16.mxu0 0
        %1829 = vmatpush1.bf16.msra.mxu0 0
        %1830 = vmatprep.subr.bf16.mxu0 0
        %1831 = vmatpush1.bf16.msra.mxu0 0
        %1832 = vmatprep.subr.bf16.mxu0 0
        %1833 = vmatpush1.bf16.msra.mxu0 0
        %1834 = vmatprep.subr.bf16.mxu0 0
        %1835 = vmatpush1.bf16.msra.mxu0 0
        %1836 = vmatprep.subr.bf16.mxu0 0
        %1837 = vmatpush1.bf16.msra.mxu0 0
        %1838 = vmatprep.mubr.bf16.mxu0 0
        %1839 = vmatmul.mubr.bf16.gmra.mrb[0].mxu0 %v1756
        %v1840 = vpop.f32.mrb[0].mxu0
        %v1841 = vadd.f32 0.0, %v1840
        %v1842 = vpop.f32.mrb[0].mxu0
        %v1843 = vpop.f32.mrb[0].mxu0
        %v1844 = vpop.f32.mrb[0].mxu0
        %1845 = vdwg.mxu0
        %v1846 = vmul.f32 %v1753, %v1841
        %v1847 = vpack.c.bf16 %v1626, %v1626
        %v1849 = vsel %vm1085, %v1847, 0
        %1851 = vmatprep.subr.bf16.mxu0 0
        %1852 = vmatpush1.bf16.msra.mxu0 %v1849
        %1853 = vmatprep.subr.bf16.mxu0 0
        %1854 = vmatpush1.bf16.msra.mxu0 0
        %1855 = vmatprep.subr.bf16.mxu0 0
        %1856 = vmatpush1.bf16.msra.mxu0 0
        %1857 = vmatprep.subr.bf16.mxu0 0
        %1858 = vmatpush1.bf16.msra.mxu0 0
        %1859 = vmatprep.subr.bf16.mxu0 0
        %1860 = vmatpush1.bf16.msra.mxu0 0
        %1861 = vmatprep.subr.bf16.mxu0 0
        %1862 = vmatpush1.bf16.msra.mxu0 0
        %1863 = vmatprep.subr.bf16.mxu0 0
        %1864 = vmatpush1.bf16.msra.mxu0 0
        %1865 = vmatprep.subr.bf16.mxu0 0
        %1866 = vmatpush1.bf16.msra.mxu0 0
        %1867 = vmatprep.subr.bf16.mxu0 0
        %1868 = vmatpush1.bf16.msra.mxu0 0
        %1869 = vmatprep.subr.bf16.mxu0 0
        %1870 = vmatpush1.bf16.msra.mxu0 0
        %1871 = vmatprep.subr.bf16.mxu0 0
        %1872 = vmatpush1.bf16.msra.mxu0 0
        %1873 = vmatprep.subr.bf16.mxu0 0
        %1874 = vmatpush1.bf16.msra.mxu0 0
        %1875 = vmatprep.subr.bf16.mxu0 0
        %1876 = vmatpush1.bf16.msra.mxu0 0
        %1877 = vmatprep.subr.bf16.mxu0 0
        %1878 = vmatpush1.bf16.msra.mxu0 0
        %1879 = vmatprep.subr.bf16.mxu0 0
        %1880 = vmatpush1.bf16.msra.mxu0 0
        %1881 = vmatprep.subr.bf16.mxu0 0
        %1882 = vmatpush1.bf16.msra.mxu0 0
        %1883 = vmatprep.mubr.bf16.mxu0 0
        %1884 = vmatmul.mubr.bf16.gmra.mrb[0].mxu0 %v1756
        %v1885 = vpop.f32.mrb[0].mxu0
        %v1886 = vadd.f32 0.0, %v1885
        %v1887 = vpop.f32.mrb[0].mxu0
        %v1888 = vpop.f32.mrb[0].mxu0
        %v1889 = vpop.f32.mrb[0].mxu0
        %1890 = vdwg.mxu0
        %v1891 = vmul.f32 %v1753, %v1886
        %v1892 = vpack.c.bf16 %v1801, %v1801
        %v1894 = vsel %vm1081, %v1041, 0
        %v1897 = vsel %vm1085, %v1892, 0
        %1899 = vmatprep.subr.bf16.mxu0 0
        %1900 = vmatpush1.bf16.msra.mxu0 %v1897
        %1901 = vmatprep.subr.bf16.mxu0 0
        %1902 = vmatpush1.bf16.msra.mxu0 0
        %1903 = vmatprep.subr.bf16.mxu0 0
        %1904 = vmatpush1.bf16.msra.mxu0 0
        %1905 = vmatprep.subr.bf16.mxu0 0
        %1906 = vmatpush1.bf16.msra.mxu0 0
        %1907 = vmatprep.subr.bf16.mxu0 0
        %1908 = vmatpush1.bf16.msra.mxu0 0
        %1909 = vmatprep.subr.bf16.mxu0 0
        %1910 = vmatpush1.bf16.msra.mxu0 0
        %1911 = vmatprep.subr.bf16.mxu0 0
        %1912 = vmatpush1.bf16.msra.mxu0 0
        %1913 = vmatprep.subr.bf16.mxu0 0
        %1914 = vmatpush1.bf16.msra.mxu0 0
        %1915 = vmatprep.subr.bf16.mxu0 0
        %1916 = vmatpush1.bf16.msra.mxu0 0
        %1917 = vmatprep.subr.bf16.mxu0 0
        %1918 = vmatpush1.bf16.msra.mxu0 0
        %1919 = vmatprep.subr.bf16.mxu0 0
        %1920 = vmatpush1.bf16.msra.mxu0 0
        %1921 = vmatprep.subr.bf16.mxu0 0
        %1922 = vmatpush1.bf16.msra.mxu0 0
        %1923 = vmatprep.subr.bf16.mxu0 0
        %1924 = vmatpush1.bf16.msra.mxu0 0
        %1925 = vmatprep.subr.bf16.mxu0 0
        %1926 = vmatpush1.bf16.msra.mxu0 0
        %1927 = vmatprep.subr.bf16.mxu0 0
        %1928 = vmatpush1.bf16.msra.mxu0 0
        %1929 = vmatprep.subr.bf16.mxu0 0
        %1930 = vmatpush1.bf16.msra.mxu0 0
        %1931 = vmatprep.mubr.bf16.mxu0 0
        %1932 = vmatmul.mubr.bf16.gmra.mrb[0].mxu0 %v1894
        %v1933 = vpop.f32.mrb[0].mxu0
        %v1934 = vadd.f32 0.0, %v1933
        %v1935 = vpop.f32.mrb[0].mxu0
        %v1936 = vpop.f32.mrb[0].mxu0
        %v1937 = vpop.f32.mrb[0].mxu0
        %1938 = vdwg.mxu0
        %v1939 = vpack.c.bf16 %v1846, %v1846
        %v1941 = vsel %vm1085, %v1939, 0
        %1943 = vmatprep.subr.bf16.mxu0 0
        %1944 = vmatpush1.bf16.msra.mxu0 %v1941
        %1945 = vmatprep.subr.bf16.mxu0 0
        %1946 = vmatpush1.bf16.msra.mxu0 0
        %1947 = vmatprep.subr.bf16.mxu0 0
        %1948 = vmatpush1.bf16.msra.mxu0 0
        %1949 = vmatprep.subr.bf16.mxu0 0
        %1950 = vmatpush1.bf16.msra.mxu0 0
        %1951 = vmatprep.subr.bf16.mxu0 0
        %1952 = vmatpush1.bf16.msra.mxu0 0
        %1953 = vmatprep.subr.bf16.mxu0 0
        %1954 = vmatpush1.bf16.msra.mxu0 0
        %1955 = vmatprep.subr.bf16.mxu0 0
        %1956 = vmatpush1.bf16.msra.mxu0 0
        %1957 = vmatprep.subr.bf16.mxu0 0
        %1958 = vmatpush1.bf16.msra.mxu0 0
        %1959 = vmatprep.subr.bf16.mxu0 0
        %1960 = vmatpush1.bf16.msra.mxu0 0
        %1961 = vmatprep.subr.bf16.mxu0 0
        %1962 = vmatpush1.bf16.msra.mxu0 0
        %1963 = vmatprep.subr.bf16.mxu0 0
        %1964 = vmatpush1.bf16.msra.mxu0 0
        %1965 = vmatprep.subr.bf16.mxu0 0
        %1966 = vmatpush1.bf16.msra.mxu0 0
        %1967 = vmatprep.subr.bf16.mxu0 0
        %1968 = vmatpush1.bf16.msra.mxu0 0
        %1969 = vmatprep.subr.bf16.mxu0 0
        %1970 = vmatpush1.bf16.msra.mxu0 0
        %1971 = vmatprep.subr.bf16.mxu0 0
        %1972 = vmatpush1.bf16.msra.mxu0 0
        %1973 = vmatprep.subr.bf16.mxu0 0
        %1974 = vmatpush1.bf16.msra.mxu0 0
        %1975 = vmatprep.mubr.bf16.mxu0 0
        %1976 = vmatmul.mubr.bf16.gmra.mrb[0].mxu0 %v1894
        %v1977 = vpop.f32.mrb[0].mxu0
        %v1978 = vadd.f32 0.0, %v1977
        %v1979 = vpop.f32.mrb[0].mxu0
        %v1980 = vpop.f32.mrb[0].mxu0
        %v1981 = vpop.f32.mrb[0].mxu0
        %1982 = vdwg.mxu0
        %v1983 = vpack.c.bf16 %v1891, %v1891
        %v1985 = vsel %vm1085, %v1983, 0
        %1987 = vmatprep.subr.bf16.mxu0 0
        %1988 = vmatpush1.bf16.msra.mxu0 %v1985
        %1989 = vmatprep.subr.bf16.mxu0 0
        %1990 = vmatpush1.bf16.msra.mxu0 0
        %1991 = vmatprep.subr.bf16.mxu0 0
        %1992 = vmatpush1.bf16.msra.mxu0 0
        %1993 = vmatprep.subr.bf16.mxu0 0
        %1994 = vmatpush1.bf16.msra.mxu0 0
        %1995 = vmatprep.subr.bf16.mxu0 0
        %1996 = vmatpush1.bf16.msra.mxu0 0
        %1997 = vmatprep.subr.bf16.mxu0 0
        %1998 = vmatpush1.bf16.msra.mxu0 0
        %1999 = vmatprep.subr.bf16.mxu0 0
        %2000 = vmatpush1.bf16.msra.mxu0 0
        %2001 = vmatprep.subr.bf16.mxu0 0
        %2002 = vmatpush1.bf16.msra.mxu0 0
        %2003 = vmatprep.subr.bf16.mxu0 0
        %2004 = vmatpush1.bf16.msra.mxu0 0
        %2005 = vmatprep.subr.bf16.mxu0 0
        %2006 = vmatpush1.bf16.msra.mxu0 0
        %2007 = vmatprep.subr.bf16.mxu0 0
        %2008 = vmatpush1.bf16.msra.mxu0 0
        %2009 = vmatprep.subr.bf16.mxu0 0
        %2010 = vmatpush1.bf16.msra.mxu0 0
        %2011 = vmatprep.subr.bf16.mxu0 0
        %2012 = vmatpush1.bf16.msra.mxu0 0
        %2013 = vmatprep.subr.bf16.mxu0 0
        %2014 = vmatpush1.bf16.msra.mxu0 0
        %2015 = vmatprep.subr.bf16.mxu0 0
        %2016 = vmatpush1.bf16.msra.mxu0 0
        %2017 = vmatprep.subr.bf16.mxu0 0
        %2018 = vmatpush1.bf16.msra.mxu0 0
        %2019 = vmatprep.mubr.bf16.mxu0 0
        %2020 = vmatmul.mubr.bf16.gmra.mrb[0].mxu0 %v1894
        %v2021 = vpop.f32.mrb[0].mxu0
        %v2022 = vadd.f32 0.0, %v2021
        %v2023 = vpop.f32.mrb[0].mxu0
        %v2024 = vpop.f32.mrb[0].mxu0
        %v2025 = vpop.f32.mrb[0].mxu0
        %2026 = vdwg.mxu0
        %v2027 = vmul.f32 %v1801, %v1934
        %v2028 = vmul.f32 %v1846, %v1978
        %v2029 = vadd.f32 %v2027, %v2028
        %v2030 = vmul.f32 %v1891, %v2022
        %v2031 = vadd.f32 %v2029, %v2030
        %v2032 = vmul.f32 %v1934, %v1934
        %v2033 = vmul.f32 %v1978, %v1978
        %v2034 = vadd.f32 %v2032, %v2033
        %v2035 = vmul.f32 %v2022, %v2022
        %v2036 = vadd.f32 %v2034, %v2035
        %v2037 = vmul.f32 %v2031, 0.99
        %v2038 = vadd.f32 %v2036, 1e-06
        %v2039 = vrcp.pop %v2038
        %v2040 = vmul.f32 %v2037, %v2039
        %vm2041 = vcmp.ge.f32.partialorder %v2031, 0.0
        %v2042 = vmul.f32 %v2040, %v1934
        %v2043 = vsub.f32 %v1801, %v2042
        %v2044 = vsel %vm2041, %v1801, %v2043
        %v2045 = vmul.f32 %v2040, %v1978
        %v2046 = vsub.f32 %v1846, %v2045
        %v2047 = vsel %vm2041, %v1846, %v2046
        %v2048 = vmul.f32 %v2040, %v2022
        %v2049 = vsub.f32 %v1891, %v2048
        %v2050 = vsel %vm2041, %v1891, %v2049
        %v2051 = vmul.f32 %v1692, 0.01
        %v2052 = vmul.f32 %v1695, 0.01
        %v2053 = vmax.f32 %v1692, %v2051
        %v2054 = vmax.f32 %v1695, %v2052
        %v2055 = vpack.c.bf16 %v2054, %v2053
        %2057 = vset.pattern.permute.xlu0 0
        %2058 = vperm.xlu0 %2057, %v1047
        %v2059 = vpop.permute.xlu0 %2058
        %2062 = vset.pattern.permute.xlu0 0
        %2063 = vperm.xlu0 %2062, %v1048
        %v2064 = vpop.permute.xlu0 %2063
        %2067 = vset.pattern.permute.xlu0 0
        %2068 = vperm.xlu0 %2067, %v1049
        %v2069 = vpop.permute.xlu0 %2068
        %2072 = vset.pattern.permute.xlu0 0
        %2073 = vperm.xlu0 %2072, %v1050
        %v2074 = vpop.permute.xlu0 %2073
        %2077 = vset.pattern.permute.xlu0 0
        %2078 = vperm.xlu0 %2077, %v1051
        %v2079 = vpop.permute.xlu0 %2078
        %v2086 = vunpack.c.l.b16 %v1042
        %v2087 = vunpack.c.l.b16 %v1043
        %v2088 = vunpack.c.l.b16 %v1044
        %v2089 = vunpack.c.l.b16 %v1045
        %v2090 = vunpack.c.l.b16 %v1046
        %v2091 = vpack.c.b16 %v2087, %v2086
        %v2092 = vpack.c.b16 %v2089, %v2088
        %v2093 = vpack.c.b16 %v2090, %v2090
        %v2095 = vsel %vm1704, %v2091, 0
        %v2098 = vsel %vm1704, %v2092, 0
        %v2101 = vsel %vm1704, %v2093, 0
        %2103 = vmatprep.subr.bf16.mxu0 0
        %2104 = vmatpush1.bf16.msra.mxu0 %v2055
        %2105 = vmatprep.subr.bf16.mxu0 0
        %2106 = vmatpush1.bf16.msra.mxu0 0
        %2107 = vmatprep.subr.bf16.mxu0 0
        %2108 = vmatpush1.bf16.msra.mxu0 0
        %2109 = vmatprep.subr.bf16.mxu0 0
        %2110 = vmatpush1.bf16.msra.mxu0 0
        %2111 = vmatprep.subr.bf16.mxu0 0
        %2112 = vmatpush1.bf16.msra.mxu0 0
        %2113 = vmatprep.subr.bf16.mxu0 0
        %2114 = vmatpush1.bf16.msra.mxu0 0
        %2115 = vmatprep.subr.bf16.mxu0 0
        %2116 = vmatpush1.bf16.msra.mxu0 0
        %2117 = vmatprep.subr.bf16.mxu0 0
        %2118 = vmatpush1.bf16.msra.mxu0 0
        %2119 = vmatprep.subr.bf16.mxu0 0
        %2120 = vmatpush1.bf16.msra.mxu0 0
        %2121 = vmatprep.subr.bf16.mxu0 0
        %2122 = vmatpush1.bf16.msra.mxu0 0
        %2123 = vmatprep.subr.bf16.mxu0 0
        %2124 = vmatpush1.bf16.msra.mxu0 0
        %2125 = vmatprep.subr.bf16.mxu0 0
        %2126 = vmatpush1.bf16.msra.mxu0 0
        %2127 = vmatprep.subr.bf16.mxu0 0
        %2128 = vmatpush1.bf16.msra.mxu0 0
        %2129 = vmatprep.subr.bf16.mxu0 0
        %2130 = vmatpush1.bf16.msra.mxu0 0
        %2131 = vmatprep.subr.bf16.mxu0 0
        %2132 = vmatpush1.bf16.msra.mxu0 0
        %2133 = vmatprep.subr.bf16.mxu0 0
        %2134 = vmatpush1.bf16.msra.mxu0 0
        %2135 = vmatprep.mubr.bf16.mxu0 0
        %2136 = vmatmul.mubr.bf16.gmra.mrb[0].mxu0 %v2095
        %v2137 = vpop.f32.mrb[0].mxu0
        %v2138 = vadd.f32 %v2059, %v2137
        %v2139 = vpop.f32.mrb[0].mxu0
        %v2140 = vpop.f32.mrb[0].mxu0
        %v2141 = vadd.f32 %v2064, %v2140
        %v2142 = vpop.f32.mrb[0].mxu0
        %2143 = vmatprep.mubr.bf16.mxu0 0
        %2144 = vmatmul.mubr.bf16.gmra.mrb[0].mxu0 %v2098
        %v2145 = vpop.f32.mrb[0].mxu0
        %v2146 = vadd.f32 %v2069, %v2145
        %v2147 = vpop.f32.mrb[0].mxu0
        %v2148 = vpop.f32.mrb[0].mxu0
        %v2149 = vadd.f32 %v2074, %v2148
        %v2150 = vpop.f32.mrb[0].mxu0
        %2151 = vmatprep.mubr.bf16.mxu0 0
        %2152 = vmatmul.mubr.bf16.gmra.mrb[0].mxu0 %v2101
        %v2153 = vpop.f32.mrb[0].mxu0
        %v2154 = vadd.f32 %v2079, %v2153
        %v2155 = vpop.f32.mrb[0].mxu0
        %v2156 = vpop.f32.mrb[0].mxu0
        %v2157 = vpop.f32.mrb[0].mxu0
        %2158 = vdwg.mxu0
        %v2159 = vmul.f32 %v1287, %v2138
        %v2160 = vmul.f32 %v1290, %v2141
        %v2161 = vmul.f32 %v1295, %v2146
        %v2162 = vmul.f32 %v1298, %v2149
        %2164 = vset.pattern.permute.xlu0 0
        %2165 = vperm.xlu0 %2164, %v1053
        %v2166 = vpop.permute.xlu0 %2165
        %v2169 = vsel %vm1308, %v1052, 0
        %2171 = vmatprep.subr.bf16.mxu0 0
        %2172 = vmatpush1.bf16.msra.mxu0 %v1301
        %2173 = vmatprep.subr.bf16.mxu0 0
        %2174 = vmatpush1.bf16.msra.mxu0 %v1302
        %2175 = vmatprep.subr.bf16.mxu0 0
        %2176 = vmatpush1.bf16.msra.mxu0 0
        %2177 = vmatprep.subr.bf16.mxu0 0
        %2178 = vmatpush1.bf16.msra.mxu0 0
        %2179 = vmatprep.subr.bf16.mxu0 0
        %2180 = vmatpush1.bf16.msra.mxu0 0
        %2181 = vmatprep.subr.bf16.mxu0 0
        %2182 = vmatpush1.bf16.msra.mxu0 0
        %2183 = vmatprep.subr.bf16.mxu0 0
        %2184 = vmatpush1.bf16.msra.mxu0 0
        %2185 = vmatprep.subr.bf16.mxu0 0
        %2186 = vmatpush1.bf16.msra.mxu0 0
        %2187 = vmatprep.subr.bf16.mxu0 0
        %2188 = vmatpush1.bf16.msra.mxu0 0
        %2189 = vmatprep.subr.bf16.mxu0 0
        %2190 = vmatpush1.bf16.msra.mxu0 0
        %2191 = vmatprep.subr.bf16.mxu0 0
        %2192 = vmatpush1.bf16.msra.mxu0 0
        %2193 = vmatprep.subr.bf16.mxu0 0
        %2194 = vmatpush1.bf16.msra.mxu0 0
        %2195 = vmatprep.subr.bf16.mxu0 0
        %2196 = vmatpush1.bf16.msra.mxu0 0
        %2197 = vmatprep.subr.bf16.mxu0 0
        %2198 = vmatpush1.bf16.msra.mxu0 0
        %2199 = vmatprep.subr.bf16.mxu0 0
        %2200 = vmatpush1.bf16.msra.mxu0 0
        %2201 = vmatprep.subr.bf16.mxu0 0
        %2202 = vmatpush1.bf16.msra.mxu0 0
        %2203 = vmatprep.mubr.bf16.mxu0 0
        %2204 = vmatmul.mubr.bf16.gmra.mrb[0].mxu0 %v2169
        %v2205 = vpop.f32.mrb[0].mxu0
        %v2206 = vadd.f32 %v2166, %v2205
        %v2207 = vpop.f32.mrb[0].mxu0
        %v2208 = vpop.f32.mrb[0].mxu0
        %v2209 = vpop.f32.mrb[0].mxu0
        %2210 = vdwg.mxu0
        %v2211 = vmul.f32 %v2154, %v1405
        %v2212 = vpack.c.bf16 %v2044, %v2044
        %2214 = vset.pattern.permute.xlu0 0
        %2215 = vperm.xlu0 %2214, %v1055
        %v2216 = vpop.permute.xlu0 %2215
        %v2219 = vsel %vm1081, %v1054, 0
        %v2222 = vsel %vm1085, %v2212, 0
        %2224 = vmatprep.subr.bf16.mxu0 0
        %2225 = vmatpush1.bf16.msra.mxu0 %v2222
        %2226 = vmatprep.subr.bf16.mxu0 0
        %2227 = vmatpush1.bf16.msra.mxu0 0
        %2228 = vmatprep.subr.bf16.mxu0 0
        %2229 = vmatpush1.bf16.msra.mxu0 0
        %2230 = vmatprep.subr.bf16.mxu0 0
        %2231 = vmatpush1.bf16.msra.mxu0 0
        %2232 = vmatprep.subr.bf16.mxu0 0
        %2233 = vmatpush1.bf16.msra.mxu0 0
        %2234 = vmatprep.subr.bf16.mxu0 0
        %2235 = vmatpush1.bf16.msra.mxu0 0
        %2236 = vmatprep.subr.bf16.mxu0 0
        %2237 = vmatpush1.bf16.msra.mxu0 0
        %2238 = vmatprep.subr.bf16.mxu0 0
        %2239 = vmatpush1.bf16.msra.mxu0 0
        %2240 = vmatprep.subr.bf16.mxu0 0
        %2241 = vmatpush1.bf16.msra.mxu0 0
        %2242 = vmatprep.subr.bf16.mxu0 0
        %2243 = vmatpush1.bf16.msra.mxu0 0
        %2244 = vmatprep.subr.bf16.mxu0 0
        %2245 = vmatpush1.bf16.msra.mxu0 0
        %2246 = vmatprep.subr.bf16.mxu0 0
        %2247 = vmatpush1.bf16.msra.mxu0 0
        %2248 = vmatprep.subr.bf16.mxu0 0
        %2249 = vmatpush1.bf16.msra.mxu0 0
        %2250 = vmatprep.subr.bf16.mxu0 0
        %2251 = vmatpush1.bf16.msra.mxu0 0
        %2252 = vmatprep.subr.bf16.mxu0 0
        %2253 = vmatpush1.bf16.msra.mxu0 0
        %2254 = vmatprep.subr.bf16.mxu0 0
        %2255 = vmatpush1.bf16.msra.mxu0 0
        %2256 = vmatprep.mubr.bf16.mxu0 0
        %2257 = vmatmul.mubr.bf16.gmra.mrb[0].mxu0 %v2219
        %v2258 = vpop.f32.mrb[0].mxu0
        %v2259 = vadd.f32 %v2216, %v2258
        %v2260 = vpop.f32.mrb[0].mxu0
        %v2261 = vpop.f32.mrb[0].mxu0
        %v2262 = vpop.f32.mrb[0].mxu0
        %2263 = vdwg.mxu0
        %v2264 = vmul.f32 %v2206, %v2259
        %v2265 = vadd.f32 %v2211, %v2264
        %v2266 = vmul.f32 %v2154, %v1450
        %v2267 = vpack.c.bf16 %v2047, %v2047
        %v2269 = vsel %vm1085, %v2267, 0
        %2271 = vmatprep.subr.bf16.mxu0 0
        %2272 = vmatpush1.bf16.msra.mxu0 %v2269
        %2273 = vmatprep.subr.bf16.mxu0 0
        %2274 = vmatpush1.bf16.msra.mxu0 0
        %2275 = vmatprep.subr.bf16.mxu0 0
        %2276 = vmatpush1.bf16.msra.mxu0 0
        %2277 = vmatprep.subr.bf16.mxu0 0
        %2278 = vmatpush1.bf16.msra.mxu0 0
        %2279 = vmatprep.subr.bf16.mxu0 0
        %2280 = vmatpush1.bf16.msra.mxu0 0
        %2281 = vmatprep.subr.bf16.mxu0 0
        %2282 = vmatpush1.bf16.msra.mxu0 0
        %2283 = vmatprep.subr.bf16.mxu0 0
        %2284 = vmatpush1.bf16.msra.mxu0 0
        %2285 = vmatprep.subr.bf16.mxu0 0
        %2286 = vmatpush1.bf16.msra.mxu0 0
        %2287 = vmatprep.subr.bf16.mxu0 0
        %2288 = vmatpush1.bf16.msra.mxu0 0
        %2289 = vmatprep.subr.bf16.mxu0 0
        %2290 = vmatpush1.bf16.msra.mxu0 0
        %2291 = vmatprep.subr.bf16.mxu0 0
        %2292 = vmatpush1.bf16.msra.mxu0 0
        %2293 = vmatprep.subr.bf16.mxu0 0
        %2294 = vmatpush1.bf16.msra.mxu0 0
        %2295 = vmatprep.subr.bf16.mxu0 0
        %2296 = vmatpush1.bf16.msra.mxu0 0
        %2297 = vmatprep.subr.bf16.mxu0 0
        %2298 = vmatpush1.bf16.msra.mxu0 0
        %2299 = vmatprep.subr.bf16.mxu0 0
        %2300 = vmatpush1.bf16.msra.mxu0 0
        %2301 = vmatprep.subr.bf16.mxu0 0
        %2302 = vmatpush1.bf16.msra.mxu0 0
        %2303 = vmatprep.mubr.bf16.mxu0 0
        %2304 = vmatmul.mubr.bf16.gmra.mrb[0].mxu0 %v2219
        %v2305 = vpop.f32.mrb[0].mxu0
        %v2306 = vadd.f32 %v2216, %v2305
        %v2307 = vpop.f32.mrb[0].mxu0
        %v2308 = vpop.f32.mrb[0].mxu0
        %v2309 = vpop.f32.mrb[0].mxu0
        %2310 = vdwg.mxu0
        %v2311 = vmul.f32 %v2206, %v2306
        %v2312 = vadd.f32 %v2266, %v2311
        %v2313 = vmul.f32 %v2154, %v1495
        %v2314 = vpack.c.bf16 %v2050, %v2050
        %v2316 = vsel %vm1085, %v2314, 0
        %2318 = vmatprep.subr.bf16.mxu0 0
        %2319 = vmatpush1.bf16.msra.mxu0 %v2316
        %2320 = vmatprep.subr.bf16.mxu0 0
        %2321 = vmatpush1.bf16.msra.mxu0 0
        %2322 = vmatprep.subr.bf16.mxu0 0
        %2323 = vmatpush1.bf16.msra.mxu0 0
        %2324 = vmatprep.subr.bf16.mxu0 0
        %2325 = vmatpush1.bf16.msra.mxu0 0
        %2326 = vmatprep.subr.bf16.mxu0 0
        %2327 = vmatpush1.bf16.msra.mxu0 0
        %2328 = vmatprep.subr.bf16.mxu0 0
        %2329 = vmatpush1.bf16.msra.mxu0 0
        %2330 = vmatprep.subr.bf16.mxu0 0
        %2331 = vmatpush1.bf16.msra.mxu0 0
        %2332 = vmatprep.subr.bf16.mxu0 0
        %2333 = vmatpush1.bf16.msra.mxu0 0
        %2334 = vmatprep.subr.bf16.mxu0 0
        %2335 = vmatpush1.bf16.msra.mxu0 0
        %2336 = vmatprep.subr.bf16.mxu0 0
        %2337 = vmatpush1.bf16.msra.mxu0 0
        %2338 = vmatprep.subr.bf16.mxu0 0
        %2339 = vmatpush1.bf16.msra.mxu0 0
        %2340 = vmatprep.subr.bf16.mxu0 0
        %2341 = vmatpush1.bf16.msra.mxu0 0
        %2342 = vmatprep.subr.bf16.mxu0 0
        %2343 = vmatpush1.bf16.msra.mxu0 0
        %2344 = vmatprep.subr.bf16.mxu0 0
        %2345 = vmatpush1.bf16.msra.mxu0 0
        %2346 = vmatprep.subr.bf16.mxu0 0
        %2347 = vmatpush1.bf16.msra.mxu0 0
        %2348 = vmatprep.subr.bf16.mxu0 0
        %2349 = vmatpush1.bf16.msra.mxu0 0
        %2350 = vmatprep.mubr.bf16.mxu0 0
        %2351 = vmatmul.mubr.bf16.gmra.mrb[0].mxu0 %v2219
        %v2352 = vpop.f32.mrb[0].mxu0
        %v2353 = vadd.f32 %v2216, %v2352
        %v2354 = vpop.f32.mrb[0].mxu0
        %v2355 = vpop.f32.mrb[0].mxu0
        %v2356 = vpop.f32.mrb[0].mxu0
        %2357 = vdwg.mxu0
        %v2358 = vmul.f32 %v2206, %v2353
        %v2359 = vadd.f32 %v2313, %v2358
        %v2360 = vpack.c.bf16 %v2265, %v2265
        %v2362 = vsel %vm1081, %v1056, 0
        %v2365 = vsel %vm1085, %v2360, 0
        %2367 = vmatprep.subr.bf16.mxu0 0
        %2368 = vmatpush1.bf16.msra.mxu0 %v2365
        %2369 = vmatprep.subr.bf16.mxu0 0
        %2370 = vmatpush1.bf16.msra.mxu0 0
        %2371 = vmatprep.subr.bf16.mxu0 0
        %2372 = vmatpush1.bf16.msra.mxu0 0
        %2373 = vmatprep.subr.bf16.mxu0 0
        %2374 = vmatpush1.bf16.msra.mxu0 0
        %2375 = vmatprep.subr.bf16.mxu0 0
        %2376 = vmatpush1.bf16.msra.mxu0 0
        %2377 = vmatprep.subr.bf16.mxu0 0
        %2378 = vmatpush1.bf16.msra.mxu0 0
        %2379 = vmatprep.subr.bf16.mxu0 0
        %2380 = vmatpush1.bf16.msra.mxu0 0
        %2381 = vmatprep.subr.bf16.mxu0 0
        %2382 = vmatpush1.bf16.msra.mxu0 0
        %2383 = vmatprep.subr.bf16.mxu0 0
        %2384 = vmatpush1.bf16.msra.mxu0 0
        %2385 = vmatprep.subr.bf16.mxu0 0
        %2386 = vmatpush1.bf16.msra.mxu0 0
        %2387 = vmatprep.subr.bf16.mxu0 0
        %2388 = vmatpush1.bf16.msra.mxu0 0
        %2389 = vmatprep.subr.bf16.mxu0 0
        %2390 = vmatpush1.bf16.msra.mxu0 0
        %2391 = vmatprep.subr.bf16.mxu0 0
        %2392 = vmatpush1.bf16.msra.mxu0 0
        %2393 = vmatprep.subr.bf16.mxu0 0
        %2394 = vmatpush1.bf16.msra.mxu0 0
        %2395 = vmatprep.subr.bf16.mxu0 0
        %2396 = vmatpush1.bf16.msra.mxu0 0
        %2397 = vmatprep.subr.bf16.mxu0 0
        %2398 = vmatpush1.bf16.msra.mxu0 0
        %2399 = vmatprep.mubr.bf16.mxu0 0
        %2400 = vmatmul.mubr.bf16.gmra.mrb[0].mxu0 %v2362
        %v2401 = vpop.f32.mrb[0].mxu0
        %v2402 = vadd.f32 0.0, %v2401
        %v2403 = vpop.f32.mrb[0].mxu0
        %v2404 = vpop.f32.mrb[0].mxu0
        %v2405 = vpop.f32.mrb[0].mxu0
        %2406 = vdwg.mxu0
        %v2407 = vpack.c.bf16 %v2312, %v2312
        %v2409 = vsel %vm1085, %v2407, 0
        %2411 = vmatprep.subr.bf16.mxu0 0
        %2412 = vmatpush1.bf16.msra.mxu0 %v2409
        %2413 = vmatprep.subr.bf16.mxu0 0
        %2414 = vmatpush1.bf16.msra.mxu0 0
        %2415 = vmatprep.subr.bf16.mxu0 0
        %2416 = vmatpush1.bf16.msra.mxu0 0
        %2417 = vmatprep.subr.bf16.mxu0 0
        %2418 = vmatpush1.bf16.msra.mxu0 0
        %2419 = vmatprep.subr.bf16.mxu0 0
        %2420 = vmatpush1.bf16.msra.mxu0 0
        %2421 = vmatprep.subr.bf16.mxu0 0
        %2422 = vmatpush1.bf16.msra.mxu0 0
        %2423 = vmatprep.subr.bf16.mxu0 0
        %2424 = vmatpush1.bf16.msra.mxu0 0
        %2425 = vmatprep.subr.bf16.mxu0 0
        %2426 = vmatpush1.bf16.msra.mxu0 0
        %2427 = vmatprep.subr.bf16.mxu0 0
        %2428 = vmatpush1.bf16.msra.mxu0 0
        %2429 = vmatprep.subr.bf16.mxu0 0
        %2430 = vmatpush1.bf16.msra.mxu0 0
        %2431 = vmatprep.subr.bf16.mxu0 0
        %2432 = vmatpush1.bf16.msra.mxu0 0
        %2433 = vmatprep.subr.bf16.mxu0 0
        %2434 = vmatpush1.bf16.msra.mxu0 0
        %2435 = vmatprep.subr.bf16.mxu0 0
        %2436 = vmatpush1.bf16.msra.mxu0 0
        %2437 = vmatprep.subr.bf16.mxu0 0
        %2438 = vmatpush1.bf16.msra.mxu0 0
        %2439 = vmatprep.subr.bf16.mxu0 0
        %2440 = vmatpush1.bf16.msra.mxu0 0
        %2441 = vmatprep.subr.bf16.mxu0 0
        %2442 = vmatpush1.bf16.msra.mxu0 0
        %2443 = vmatprep.mubr.bf16.mxu0 0
        %2444 = vmatmul.mubr.bf16.gmra.mrb[0].mxu0 %v2362
        %v2445 = vpop.f32.mrb[0].mxu0
        %v2446 = vadd.f32 0.0, %v2445
        %v2447 = vpop.f32.mrb[0].mxu0
        %v2448 = vpop.f32.mrb[0].mxu0
        %v2449 = vpop.f32.mrb[0].mxu0
        %2450 = vdwg.mxu0
        %v2451 = vpack.c.bf16 %v2359, %v2359
        %v2453 = vsel %vm1085, %v2451, 0
        %2455 = vmatprep.subr.bf16.mxu0 0
        %2456 = vmatpush1.bf16.msra.mxu0 %v2453
        %2457 = vmatprep.subr.bf16.mxu0 0
        %2458 = vmatpush1.bf16.msra.mxu0 0
        %2459 = vmatprep.subr.bf16.mxu0 0
        %2460 = vmatpush1.bf16.msra.mxu0 0
        %2461 = vmatprep.subr.bf16.mxu0 0
        %2462 = vmatpush1.bf16.msra.mxu0 0
        %2463 = vmatprep.subr.bf16.mxu0 0
        %2464 = vmatpush1.bf16.msra.mxu0 0
        %2465 = vmatprep.subr.bf16.mxu0 0
        %2466 = vmatpush1.bf16.msra.mxu0 0
        %2467 = vmatprep.subr.bf16.mxu0 0
        %2468 = vmatpush1.bf16.msra.mxu0 0
        %2469 = vmatprep.subr.bf16.mxu0 0
        %2470 = vmatpush1.bf16.msra.mxu0 0
        %2471 = vmatprep.subr.bf16.mxu0 0
        %2472 = vmatpush1.bf16.msra.mxu0 0
        %2473 = vmatprep.subr.bf16.mxu0 0
        %2474 = vmatpush1.bf16.msra.mxu0 0
        %2475 = vmatprep.subr.bf16.mxu0 0
        %2476 = vmatpush1.bf16.msra.mxu0 0
        %2477 = vmatprep.subr.bf16.mxu0 0
        %2478 = vmatpush1.bf16.msra.mxu0 0
        %2479 = vmatprep.subr.bf16.mxu0 0
        %2480 = vmatpush1.bf16.msra.mxu0 0
        %2481 = vmatprep.subr.bf16.mxu0 0
        %2482 = vmatpush1.bf16.msra.mxu0 0
        %2483 = vmatprep.subr.bf16.mxu0 0
        %2484 = vmatpush1.bf16.msra.mxu0 0
        %2485 = vmatprep.subr.bf16.mxu0 0
        %2486 = vmatpush1.bf16.msra.mxu0 0
        %2487 = vmatprep.mubr.bf16.mxu0 0
        %2488 = vmatmul.mubr.bf16.gmra.mrb[0].mxu0 %v2362
        %v2489 = vpop.f32.mrb[0].mxu0
        %v2490 = vadd.f32 0.0, %v2489
        %v2491 = vpop.f32.mrb[0].mxu0
        %v2492 = vpop.f32.mrb[0].mxu0
        %v2493 = vpop.f32.mrb[0].mxu0
        %2494 = vdwg.mxu0
        %v2495 = vmul.f32 %v2402, %v2402
        %v2496 = vmul.f32 %v2446, %v2446
        %v2497 = vadd.f32 %v2495, %v2496
        %v2498 = vmul.f32 %v2490, %v2490
        %v2499 = vadd.f32 %v2497, %v2498
        %v2500 = vrsqrt.pop %v2499
        %v2501 = vmul.f32 %v2499, %v2500
        %vm2502 = vcmp.eq.f32.partialorder %v2499, inf
        %v2503 = vsel %vm2502, %v2499, %v2501
        %vm2504 = vcmp.eq.f32.partialorder %v2499, 0.0
        %v2505 = vand.u32 %v2499, 2147483648
        %v2506 = vsel %vm2504, %v2505, %v2503
        %v2507 = vpack.c.bf16 %v2159, %v2506
        %v2508 = vpack.c.bf16 %v2161, %v2160
        %v2509 = vpack.c.bf16 %v2162, %v2162
        %v2514 = vunpack.c.l.b16 %v1057
        %v2515 = vunpack.c.l.b16 %v1058
        %v2516 = vunpack.c.l.b16 %v1059
        %v2517 = vunpack.c.l.b16 %v1060
        %v2518 = vpack.c.b16 %v2515, %v2514
        %v2519 = vpack.c.b16 %v2517, %v2516
        %v2521 = vsel %vm1242, %v2518, 0
        %v2524 = vsel %vm1242, %v2519, 0
        %v2527 = vsel %vm1085, %v2509, 0
        %2529 = vmatprep.subr.bf16.mxu0 0
        %2530 = vmatpush1.bf16.msra.mxu0 %v2507
        %2531 = vmatprep.subr.bf16.mxu0 0
        %2532 = vmatpush1.bf16.msra.mxu0 %v2508
        %2533 = vmatprep.subr.bf16.mxu0 0
        %2534 = vmatpush1.bf16.msra.mxu0 %v2527
        %2535 = vmatprep.subr.bf16.mxu0 0
        %2536 = vmatpush1.bf16.msra.mxu0 0
        %2537 = vmatprep.subr.bf16.mxu0 0
        %2538 = vmatpush1.bf16.msra.mxu0 0
        %2539 = vmatprep.subr.bf16.mxu0 0
        %2540 = vmatpush1.bf16.msra.mxu0 0
        %2541 = vmatprep.subr.bf16.mxu0 0
        %2542 = vmatpush1.bf16.msra.mxu0 0
        %2543 = vmatprep.subr.bf16.mxu0 0
        %2544 = vmatpush1.bf16.msra.mxu0 0
        %2545 = vmatprep.subr.bf16.mxu0 0
        %2546 = vmatpush1.bf16.msra.mxu0 0
        %2547 = vmatprep.subr.bf16.mxu0 0
        %2548 = vmatpush1.bf16.msra.mxu0 0
        %2549 = vmatprep.subr.bf16.mxu0 0
        %2550 = vmatpush1.bf16.msra.mxu0 0
        %2551 = vmatprep.subr.bf16.mxu0 0
        %2552 = vmatpush1.bf16.msra.mxu0 0
        %2553 = vmatprep.subr.bf16.mxu0 0
        %2554 = vmatpush1.bf16.msra.mxu0 0
        %2555 = vmatprep.subr.bf16.mxu0 0
        %2556 = vmatpush1.bf16.msra.mxu0 0
        %2557 = vmatprep.subr.bf16.mxu0 0
        %2558 = vmatpush1.bf16.msra.mxu0 0
        %2559 = vmatprep.subr.bf16.mxu0 0
        %2560 = vmatpush1.bf16.msra.mxu0 0
        %2561 = vmatprep.mubr.bf16.mxu0 0
        %2562 = vmatmul.mubr.bf16.gmra.mrb[0].mxu0 %v2521
        %v2563 = vpop.f32.mrb[0].mxu0
        %v2564 = vadd.f32 0.0, %v2563
        %v2565 = vpop.f32.mrb[0].mxu0
        %v2566 = vpop.f32.mrb[0].mxu0
        %v2567 = vadd.f32 0.0, %v2566
        %v2568 = vpop.f32.mrb[0].mxu0
        %2569 = vmatprep.mubr.bf16.mxu0 0
        %2570 = vmatmul.mubr.bf16.gmra.mrb[0].mxu0 %v2524
        %v2571 = vpop.f32.mrb[0].mxu0
        %v2572 = vadd.f32 0.0, %v2571
        %v2573 = vpop.f32.mrb[0].mxu0
        %v2574 = vpop.f32.mrb[0].mxu0
        %v2575 = vadd.f32 0.0, %v2574
        %v2576 = vpop.f32.mrb[0].mxu0
        %2577 = vdwg.mxu0
        %v2578 = vpack.c.bf16 %v2567, %v2564
        %v2579 = vpack.c.bf16 %v2575, %v2572
        %2581 = vset.pattern.permute.xlu0 0
        %2582 = vperm.xlu0 %2581, %v1062
        %v2583 = vpop.permute.xlu0 %2582
        %v2586 = vsel %vm1308, %v1061, 0
        %2588 = vmatprep.subr.bf16.mxu0 0
        %2589 = vmatpush1.bf16.msra.mxu0 %v2578
        %2590 = vmatprep.subr.bf16.mxu0 0
        %2591 = vmatpush1.bf16.msra.mxu0 %v2579
        %2592 = vmatprep.subr.bf16.mxu0 0
        %2593 = vmatpush1.bf16.msra.mxu0 0
        %2594 = vmatprep.subr.bf16.mxu0 0
        %2595 = vmatpush1.bf16.msra.mxu0 0
        %2596 = vmatprep.subr.bf16.mxu0 0
        %2597 = vmatpush1.bf16.msra.mxu0 0
        %2598 = vmatprep.subr.bf16.mxu0 0
        %2599 = vmatpush1.bf16.msra.mxu0 0
        %2600 = vmatprep.subr.bf16.mxu0 0
        %2601 = vmatpush1.bf16.msra.mxu0 0
        %2602 = vmatprep.subr.bf16.mxu0 0
        %2603 = vmatpush1.bf16.msra.mxu0 0
        %2604 = vmatprep.subr.bf16.mxu0 0
        %2605 = vmatpush1.bf16.msra.mxu0 0
        %2606 = vmatprep.subr.bf16.mxu0 0
        %2607 = vmatpush1.bf16.msra.mxu0 0
        %2608 = vmatprep.subr.bf16.mxu0 0
        %2609 = vmatpush1.bf16.msra.mxu0 0
        %2610 = vmatprep.subr.bf16.mxu0 0
        %2611 = vmatpush1.bf16.msra.mxu0 0
        %2612 = vmatprep.subr.bf16.mxu0 0
        %2613 = vmatpush1.bf16.msra.mxu0 0
        %2614 = vmatprep.subr.bf16.mxu0 0
        %2615 = vmatpush1.bf16.msra.mxu0 0
        %2616 = vmatprep.subr.bf16.mxu0 0
        %2617 = vmatpush1.bf16.msra.mxu0 0
        %2618 = vmatprep.subr.bf16.mxu0 0
        %2619 = vmatpush1.bf16.msra.mxu0 0
        %2620 = vmatprep.mubr.bf16.mxu0 0
        %2621 = vmatmul.mubr.bf16.gmra.mrb[0].mxu0 %v2586
        %v2622 = vpop.f32.mrb[0].mxu0
        %v2623 = vadd.f32 %v2583, %v2622
        %v2624 = vpop.f32.mrb[0].mxu0
        %v2625 = vpop.f32.mrb[0].mxu0
        %v2626 = vpop.f32.mrb[0].mxu0
        %2627 = vdwg.mxu0
        %v2628 = vxor.u32 %v2623, 2147483648
        %v2629 = vmul.f32 %v2628, 1.442695
        %v2630 = vpow.pop %v2629
        %v2631 = vadd.f32 %v2630, 1.0
        %v2632 = vrcp.pop %v2631
        %v2633 = vmul.f32 1.0, %v2632
        %v2634 = vpack.c.bf16 %v2402, %v2402
        %v2636 = vsel %vm1081, %v1063, 0
        %v2639 = vsel %vm1085, %v2634, 0
        %2641 = vmatprep.subr.bf16.mxu0 0
        %2642 = vmatpush1.bf16.msra.mxu0 %v2639
        %2643 = vmatprep.subr.bf16.mxu0 0
        %2644 = vmatpush1.bf16.msra.mxu0 0
        %2645 = vmatprep.subr.bf16.mxu0 0
        %2646 = vmatpush1.bf16.msra.mxu0 0
        %2647 = vmatprep.subr.bf16.mxu0 0
        %2648 = vmatpush1.bf16.msra.mxu0 0
        %2649 = vmatprep.subr.bf16.mxu0 0
        %2650 = vmatpush1.bf16.msra.mxu0 0
        %2651 = vmatprep.subr.bf16.mxu0 0
        %2652 = vmatpush1.bf16.msra.mxu0 0
        %2653 = vmatprep.subr.bf16.mxu0 0
        %2654 = vmatpush1.bf16.msra.mxu0 0
        %2655 = vmatprep.subr.bf16.mxu0 0
        %2656 = vmatpush1.bf16.msra.mxu0 0
        %2657 = vmatprep.subr.bf16.mxu0 0
        %2658 = vmatpush1.bf16.msra.mxu0 0
        %2659 = vmatprep.subr.bf16.mxu0 0
        %2660 = vmatpush1.bf16.msra.mxu0 0
        %2661 = vmatprep.subr.bf16.mxu0 0
        %2662 = vmatpush1.bf16.msra.mxu0 0
        %2663 = vmatprep.subr.bf16.mxu0 0
        %2664 = vmatpush1.bf16.msra.mxu0 0
        %2665 = vmatprep.subr.bf16.mxu0 0
        %2666 = vmatpush1.bf16.msra.mxu0 0
        %2667 = vmatprep.subr.bf16.mxu0 0
        %2668 = vmatpush1.bf16.msra.mxu0 0
        %2669 = vmatprep.subr.bf16.mxu0 0
        %2670 = vmatpush1.bf16.msra.mxu0 0
        %2671 = vmatprep.subr.bf16.mxu0 0
        %2672 = vmatpush1.bf16.msra.mxu0 0
        %2673 = vmatprep.mubr.bf16.mxu0 0
        %2674 = vmatmul.mubr.bf16.gmra.mrb[0].mxu0 %v2636
        %v2675 = vpop.f32.mrb[0].mxu0
        %v2676 = vadd.f32 0.0, %v2675
        %v2677 = vpop.f32.mrb[0].mxu0
        %v2678 = vpop.f32.mrb[0].mxu0
        %v2679 = vpop.f32.mrb[0].mxu0
        %2680 = vdwg.mxu0
        %v2681 = vmul.f32 %v2633, %v2676
        %v2682 = vpack.c.bf16 %v2446, %v2446
        %v2684 = vsel %vm1085, %v2682, 0
        %2686 = vmatprep.subr.bf16.mxu0 0
        %2687 = vmatpush1.bf16.msra.mxu0 %v2684
        %2688 = vmatprep.subr.bf16.mxu0 0
        %2689 = vmatpush1.bf16.msra.mxu0 0
        %2690 = vmatprep.subr.bf16.mxu0 0
        %2691 = vmatpush1.bf16.msra.mxu0 0
        %2692 = vmatprep.subr.bf16.mxu0 0
        %2693 = vmatpush1.bf16.msra.mxu0 0
        %2694 = vmatprep.subr.bf16.mxu0 0
        %2695 = vmatpush1.bf16.msra.mxu0 0
        %2696 = vmatprep.subr.bf16.mxu0 0
        %2697 = vmatpush1.bf16.msra.mxu0 0
        %2698 = vmatprep.subr.bf16.mxu0 0
        %2699 = vmatpush1.bf16.msra.mxu0 0
        %2700 = vmatprep.subr.bf16.mxu0 0
        %2701 = vmatpush1.bf16.msra.mxu0 0
        %2702 = vmatprep.subr.bf16.mxu0 0
        %2703 = vmatpush1.bf16.msra.mxu0 0
        %2704 = vmatprep.subr.bf16.mxu0 0
        %2705 = vmatpush1.bf16.msra.mxu0 0
        %2706 = vmatprep.subr.bf16.mxu0 0
        %2707 = vmatpush1.bf16.msra.mxu0 0
        %2708 = vmatprep.subr.bf16.mxu0 0
        %2709 = vmatpush1.bf16.msra.mxu0 0
        %2710 = vmatprep.subr.bf16.mxu0 0
        %2711 = vmatpush1.bf16.msra.mxu0 0
        %2712 = vmatprep.subr.bf16.mxu0 0
        %2713 = vmatpush1.bf16.msra.mxu0 0
        %2714 = vmatprep.subr.bf16.mxu0 0
        %2715 = vmatpush1.bf16.msra.mxu0 0
        %2716 = vmatprep.subr.bf16.mxu0 0
        %2717 = vmatpush1.bf16.msra.mxu0 0
        %2718 = vmatprep.mubr.bf16.mxu0 0
        %2719 = vmatmul.mubr.bf16.gmra.mrb[0].mxu0 %v2636
        %v2720 = vpop.f32.mrb[0].mxu0
        %v2721 = vadd.f32 0.0, %v2720
        %v2722 = vpop.f32.mrb[0].mxu0
        %v2723 = vpop.f32.mrb[0].mxu0
        %v2724 = vpop.f32.mrb[0].mxu0
        %2725 = vdwg.mxu0
        %v2726 = vmul.f32 %v2633, %v2721
        %v2727 = vpack.c.bf16 %v2490, %v2490
        %v2729 = vsel %vm1085, %v2727, 0
        %2731 = vmatprep.subr.bf16.mxu0 0
        %2732 = vmatpush1.bf16.msra.mxu0 %v2729
        %2733 = vmatprep.subr.bf16.mxu0 0
        %2734 = vmatpush1.bf16.msra.mxu0 0
        %2735 = vmatprep.subr.bf16.mxu0 0
        %2736 = vmatpush1.bf16.msra.mxu0 0
        %2737 = vmatprep.subr.bf16.mxu0 0
        %2738 = vmatpush1.bf16.msra.mxu0 0
        %2739 = vmatprep.subr.bf16.mxu0 0
        %2740 = vmatpush1.bf16.msra.mxu0 0
        %2741 = vmatprep.subr.bf16.mxu0 0
        %2742 = vmatpush1.bf16.msra.mxu0 0
        %2743 = vmatprep.subr.bf16.mxu0 0
        %2744 = vmatpush1.bf16.msra.mxu0 0
        %2745 = vmatprep.subr.bf16.mxu0 0
        %2746 = vmatpush1.bf16.msra.mxu0 0
        %2747 = vmatprep.subr.bf16.mxu0 0
        %2748 = vmatpush1.bf16.msra.mxu0 0
        %2749 = vmatprep.subr.bf16.mxu0 0
        %2750 = vmatpush1.bf16.msra.mxu0 0
        %2751 = vmatprep.subr.bf16.mxu0 0
        %2752 = vmatpush1.bf16.msra.mxu0 0
        %2753 = vmatprep.subr.bf16.mxu0 0
        %2754 = vmatpush1.bf16.msra.mxu0 0
        %2755 = vmatprep.subr.bf16.mxu0 0
        %2756 = vmatpush1.bf16.msra.mxu0 0
        %2757 = vmatprep.subr.bf16.mxu0 0
        %2758 = vmatpush1.bf16.msra.mxu0 0
        %2759 = vmatprep.subr.bf16.mxu0 0
        %2760 = vmatpush1.bf16.msra.mxu0 0
        %2761 = vmatprep.subr.bf16.mxu0 0
        %2762 = vmatpush1.bf16.msra.mxu0 0
        %2763 = vmatprep.mubr.bf16.mxu0 0
        %2764 = vmatmul.mubr.bf16.gmra.mrb[0].mxu0 %v2636
        %v2765 = vpop.f32.mrb[0].mxu0
        %v2766 = vadd.f32 0.0, %v2765
        %v2767 = vpop.f32.mrb[0].mxu0
        %v2768 = vpop.f32.mrb[0].mxu0
        %v2769 = vpop.f32.mrb[0].mxu0
        %2770 = vdwg.mxu0
        %v2771 = vmul.f32 %v2633, %v2766
        %2772 = vst [vmem:[%s1018] sm:$0xff] %v2564
        %2773 = vst [vmem:[%s1018 + $0x8] sm:$0xff] %v2567
        %2774 = vst [vmem:[%s1018 + $0x10] sm:$0xff] %v2572
        %2775 = vst [vmem:[%s1018 + $0x18] sm:$0xff] %v2575
        %2776 = vst [vmem:[%s1025] sm:$0xff] %v2681
        %s2777 = scalar_lea.vmem %s1025, 8 [#allocation15]
        %2778 = vst [vmem:[%s2777] sm:$0xff] %v2726
        %s2779 = scalar_lea.vmem %s1025, 16 [#allocation15]
        %2780 = vst [vmem:[%s2779] sm:$0xff] %v2771
        %s2781 = sand.u32 %s627, 1
        %s2782 = scalar_lea.sflag [#allocation5], %s2781
        %s2783 = sand.u32 %s627, 1
        %s2784 = smul.addr %s2783, 32
        %s2785 = scalar_lea.vmem [#allocation14], %s2784
        %s2786 = sand.u32 %s653, 1
        %s2787 = scalar_lea.sflag [#allocation16], %s2786
        %s2788 = sand.u32 %s653, 1
        %s2789 = smul.addr %s2788, 24
        %s2790 = scalar_lea.vmem [#allocation15], %s2789
        // Predicated region
        $region187: #{tpu_custom_call.1} parent=157 // pred_check
          %p2791 = pneg %p637
        $region188: #{tpu_custom_call.1} parent=157 // pred_check_branch
          %2793 = sbr.rel (%p2791) target = $region190
        $region189: #{tpu_custom_call.1} parent=157 // pred_region
          %s2795 = ssub.s32 512, 512
          %2796 = vsyncadd %s2782, %s2795
          %s2797 = smul.addr %s53, 128
          %s2798 = scalar_lea.hbm %s26, %s2797
          %s2799 = sshll.u32 %s2785, 4
          %s2800 = int_to_ptr.vmem [resolvable:$true] %s2799
          %2805 = dma.vmem_to_hbm [thread:$0]  %s2800, 512, %s2798, %s2782, 128, 384, 8
        $region190: #{tpu_custom_call.1} parent=157 // pred_fallthru
          _
        // Predicated region
        $region191: #{tpu_custom_call.1} parent=157 // pred_check
          %p2806 = pneg %p663
        $region192: #{tpu_custom_call.1} parent=157 // pred_check_branch
          %2808 = sbr.rel (%p2806) target = $region194
        $region193: #{tpu_custom_call.1} parent=157 // pred_region
          %s2810 = ssub.s32 384, 384
          %2811 = vsyncadd %s2787, %s2810
          %s2812 = smul.addr %s53, 128
          %s2813 = scalar_lea.hbm %s27, %s2812
          %s2814 = sshll.u32 %s2790, 4
          %s2815 = int_to_ptr.vmem [resolvable:$true] %s2814
          %2820 = dma.vmem_to_hbm [thread:$0]  %s2815, 384, %s2813, %s2787, 128, 384, 8
        $region194: #{tpu_custom_call.1} parent=157 // pred_fallthru
          _
      $region158: #{tpu_custom_call.1} parent=5 // pred_fallthru
        _
      %p2821 = scmp.le.s32.totalorder 2, %s48
      // Predicated region
      $region195: #{tpu_custom_call.1} parent=5 // pred_check
        %p2822 = pneg %p2821
      $region196: #{tpu_custom_call.1} parent=5 // pred_check_branch
        %2824 = sbr.rel (%p2822) target = $region198
      $region197: #{tpu_custom_call.1} parent=5 // pred_region
        %s2825 = ssub.s32 %s48, 2
        // Predicated region
        $region199: #{tpu_custom_call.1} parent=197 // pred_check
          %p2826 = pneg %p643
        $region200: #{tpu_custom_call.1} parent=197 // pred_check_branch
          %2828 = sbr.rel (%p2826) target = $region202
        $region201: #{tpu_custom_call.1} parent=197 // pred_region
          %s2829 = sand.u32 %s628, 1
          %s2830 = scalar_lea.sflag [#allocation5], %s2829
          %s2831 = sand.u32 %s628, 1
          %s2832 = smul.addr %s2831, 32
          %s2833 = scalar_lea.vmem [#allocation14], %s2832
          %2834 = dma.done %s2830, 512
        $region202: #{tpu_custom_call.1} parent=197 // pred_fallthru
          _
        // Predicated region
        $region203: #{tpu_custom_call.1} parent=197 // pred_check
          %p2835 = pneg %p669
        $region204: #{tpu_custom_call.1} parent=197 // pred_check_branch
          %2837 = sbr.rel (%p2835) target = $region206
        $region205: #{tpu_custom_call.1} parent=197 // pred_region
          %s2838 = sand.u32 %s654, 1
          %s2839 = scalar_lea.sflag [#allocation16], %s2838
          %s2840 = sand.u32 %s654, 1
          %s2841 = smul.addr %s2840, 24
          %s2842 = scalar_lea.vmem [#allocation15], %s2841
          %2843 = dma.done %s2839, 384
        $region206: #{tpu_custom_call.1} parent=197 // pred_fallthru
          _
      $region198: #{tpu_custom_call.1} parent=5 // pred_fallthru
        _
    $region6: #{tpu_custom_call.1} parent=1 // loop_footer
      %s52 = sadd.s32 1, %s48
    $region7: #{tpu_custom_call.1} parent=1 // loop_footer_branch
      %47 = sbr.rel target = $region3
    $region8: #{tpu_custom_call.1} parent=1 // loop_exit
      _
    %2844 = vsyncpa [#allocation4], 1
    %s2845 = scalar_lea.sflag [#allocation4], 1
    %2846 = vsyncpa %s2845, 1
    %2847 = vsyncpa [#allocation7], 1
    %s2848 = scalar_lea.sflag [#allocation7], 1
    %2849 = vsyncpa %s2848, 1
    %2850 = vsyncpa [#allocation10], 1
    %2851 = vsyncpa [#allocation13], 1
    %2852 = vsyncpa [#allocation5], 1
    %s2853 = scalar_lea.sflag [#allocation5], 1
    %2854 = vsyncpa %s2853, 1
    %2855 = vsyncpa [#allocation16], 1
    %s2856 = scalar_lea.sflag [#allocation16], 1
    %2857 = vsyncpa %s2856, 1

</llo_original>
